<compile_context>
chip_gen: v7x
topology: tpu7x:2x2x1
jax: 0.10.0
libtpu: 0.0.40
codegen_flags: <defaults>
</compile_context>

<pallas_src>
import functools

import numpy as np

import jax
import jax.numpy as jnp
from jax.experimental import pallas as pl
from jax.experimental.pallas import tpu as pltpu


# ----------------------------------------------------------------------------
# Kernel
# ----------------------------------------------------------------------------
def _row_expand_kernel(x_ref, k_ref, o_ref, *, precision):
    # x_ref: (tn, g*W)        batch of flattened input row-groups
    # k_ref: (g*W, g*s*s*W)   constant 0/1 expansion matrix (fetched once)
    # o_ref: (tn, g*s*s*W)    upsampled row-groups (lane-dense inner dim)
    o_ref[...] = jnp.dot(
        x_ref[...],
        k_ref[...],
        preferred_element_type=jnp.float32,
        precision=precision,
    ).astype(o_ref.dtype)


# ----------------------------------------------------------------------------
# Sizing / hardware helpers
# ----------------------------------------------------------------------------
def _round_up(x, m):
    return ((x + m - 1) // m) * m


def _sublane_tile(dtype):
    # rows per packed sublane tile: 8 for 4-byte, 16 for 2-byte, 32 for 1-byte
    return max(8, 32 // np.dtype(dtype).itemsize)


def _tpu_vmem_and_cores():
    """Returns (per-core VMEM bytes, TensorCores per chip) with safe fallbacks."""
    vmem = 64 * 1024 * 1024        # conservative default = v7x per-TC VMEM
    n_tc = 1
    try:
        info = pltpu.get_tpu_info()
        v = int(getattr(info, "vmem_capacity_bytes", 0) or 0)
        if v > 0:
            vmem = v
    except Exception:
        pass
    try:
        kind = (jax.devices()[0].device_kind or "").lower()
        if "v7" in kind or "7x" in kind:
            n_tc = 2
    except Exception:
        pass
    if n_tc >= 2:
        # dual-TC parts have at most 64 MiB VMEM per TensorCore
        vmem = min(vmem, 64 * 1024 * 1024)
    return vmem, n_tc


def _pick_row_group(H, W, s):
    """Smallest divisor g of H whose output width g*s*s*W is lane-dense."""
    cols_per_row = s * s * W
    divisors = [d for d in range(1, H + 1) if H % d == 0]
    for g in divisors:                      # prefer exact multiples of 128 lanes
        if (g * cols_per_row) % 128 == 0:
            return g
    for g in divisors:                      # else at least one full vreg width
        if g * cols_per_row >= 128:
            return g
    # TODO(synk): tiny planes (s*s*H*W < 128) keep masked stores; batching
    # planes into the lane dimension would remove them if it ever matters.
    return H


# ----------------------------------------------------------------------------
# Wrapper
# ----------------------------------------------------------------------------
def time_distributed_upsampling(x, scale_factor=2):
    """x: (B, T, C, H, W) -> (B, T, C, s*H, s*W), nearest-neighbor upsample."""
    assert x.ndim == 5, "expected (B, T, C, H, W)"
    assert jnp.issubdtype(x.dtype, jnp.floating), "floating dtypes only (see TODO)"
    B, T, C, H, W = x.shape
    s = int(scale_factor)
    assert s >= 1
    N = B * T * C
    itemsize = np.dtype(x.dtype).itemsize

    g = _pick_row_group(H, W, s)
    R = H // g                        # row groups per plane
    M = N * R                         # independent rows fed to the matmul
    in_cols = g * W
    out_cols = g * s * s * W

    # --- constant 0/1 expansion matrix, built host-side with numpy ---------
    col = np.arange(out_cols)
    i_grp = col // (s * s * W)                    # input row index within the group
    q = (col % (s * s * W)) % (s * W)             # output column within one row
    src = i_grp * W + q // s                      # source column in the grouped row
    kmat_np = (np.arange(in_cols)[:, None] == src[None, :]).astype(np.float32)
    kmat = jnp.asarray(kmat_np, dtype=x.dtype)

    sub = _sublane_tile(x.dtype)
    k_bytes = _round_up(in_cols, sub) * _round_up(out_cols, 128) * itemsize

    # --- generation-aware block sizing --------------------------------------
    vmem_cap, n_tc = _tpu_vmem_and_cores()
    vmem_limit = min(int(vmem_cap * 0.75), 112 * 1024 * 1024)
    assert k_bytes <= vmem_limit // 2, "expansion matrix too large (see wide-frame TODO)"
    budget = max(int(vmem_cap * 0.55) - 2 * k_bytes, 2 * 1024 * 1024)

    bytes_per_row = (_round_up(in_cols, 128) + _round_up(out_cols, 128)) * itemsize
    tn_cap = max(sub, budget // (2 * bytes_per_row))   # double-buffered in+out blocks
    tn_cap = min(tn_cap, 8192)

    steps = pl.cdiv(M, tn_cap)
    if n_tc >= 2 and M >= 2 * sub:
        # v7x only: >= 2 balanced, even-count steps so both TensorCores get
        # near-equal work.  Single-TC parts (v5e/v6e) keep one maximal block.
        steps = max(2, 2 * ((steps + 1) // 2))
    if steps <= 1:
        tn = M
    else:
        tn = _round_up(pl.cdiv(M, steps), sub)
    grid = (pl.cdiv(M, tn),)

    x_rows = x.reshape(M, in_cols)

    precision = jax.lax.Precision.HIGHEST if x.dtype == jnp.float32 else None
    kernel = functools.partial(_row_expand_kernel, precision=precision)

    out_rows = pl.pallas_call(
        kernel,
        out_shape=jax.ShapeDtypeStruct((M, out_cols), x.dtype),
        grid_spec=pltpu.PrefetchScalarGridSpec(
            num_scalar_prefetch=0,
            grid=grid,
            in_specs=[
                pl.BlockSpec((tn, in_cols), lambda n: (n, 0)),
                # constant operand: same block every step -> single-buffered
                pl.BlockSpec((in_cols, out_cols), lambda n: (0, 0),
                             pipeline_mode=pl.Buffered(1)),
            ],
            out_specs=pl.BlockSpec((tn, out_cols), lambda n: (n, 0)),
        ),
        compiler_params=pltpu.CompilerParams(
            dimension_semantics=("parallel",),
            vmem_limit_bytes=vmem_limit,
        ),
    )(x_rows, kmat)

    # (row-group, in-group row, s, s*W) -> (s*H, s*W) is a pure reshape.
    return out_rows.reshape(B, T, C, s * H, s * W)


if __name__ == "__main__":
    key = jax.random.PRNGKey(0)

    # main case: (B, T, C, H, W) = (2, 8, 4, 16, 16), scale_factor=2, float32
    B, T, C, H, W = 2, 8, 4, 16, 16
    x = jax.random.normal(key, (B, T, C, H, W), dtype=jnp.float32)
    y = jax.block_until_ready(time_distributed_upsampling(x, scale_factor=2))
    y_ref = jnp.repeat(jnp.repeat(x, 2, axis=-2), 2, axis=-1)
    assert y.shape == (B, T, C, 2 * H, 2 * W), y.shape
    assert jnp.allclose(y, y_ref), "mismatch vs nearest-upsample reference (f32, s=2)"

    # bfloat16 path (16-row sublane tile rounding)
    xb = x.astype(jnp.bfloat16)
    yb = jax.block_until_ready(time_distributed_upsampling(xb, scale_factor=2))
    yb_ref = jnp.repeat(jnp.repeat(xb, 2, axis=-2), 2, axis=-1)
    assert yb.shape == (B, T, C, 2 * H, 2 * W), yb.shape
    assert jnp.allclose(yb.astype(jnp.float32), yb_ref.astype(jnp.float32)), \
        "mismatch vs nearest-upsample reference (bf16, s=2)"

    # general scale_factor sanity check (s=3, small odd-lane plane)
    x3 = jax.random.normal(jax.random.PRNGKey(1), (1, 2, 3, 8, 8), dtype=jnp.float32)
    y3 = jax.block_until_ready(time_distributed_upsampling(x3, scale_factor=3))
    y3_ref = jnp.repeat(jnp.repeat(x3, 3, axis=-2), 3, axis=-1)
    assert y3.shape == (1, 2, 3, 24, 24), y3.shape
    assert jnp.allclose(y3, y3_ref), "mismatch vs nearest-upsample reference (s=3)"

    # larger plane (exercises g=1 row-group path)
    x4 = jax.random.normal(jax.random.PRNGKey(2), (1, 2, 1, 64, 64), dtype=jnp.float32)
    y4 = jax.block_until_ready(time_distributed_upsampling(x4, scale_factor=2))
    y4_ref = jnp.repeat(jnp.repeat(x4, 2, axis=-2), 2, axis=-1)
    assert y4.shape == (1, 2, 1, 128, 128), y4.shape
    assert jnp.allclose(y4, y4_ref), "mismatch vs nearest-upsample reference (64x64)"

    print("KERNEL_OK")
</pallas_src>

<mosaic_0001>
module attributes {stable_mosaic.version = 11 : i64} {
  func.func @_row_expand_kernel(%arg0: i32, %arg1: memref<512x32xf32, #tpu.memory_space<vmem>>, %arg2: memref<32x128xf32, #tpu.memory_space<vmem>>, %arg3: memref<512x128xf32, #tpu.memory_space<vmem>>) attributes {dimension_semantics = [#tpu.dimension_semantics<parallel>], iteration_bounds = array<i64: 1>, scalar_prefetch = 0 : i64, scratch_operands = 0 : i64, tpu.core_type = #tpu.core_type<tc>, window_params = [{transform_indices = @transform_0, window_bounds = array<i64: 512, 32>}, {pipeline_mode = #tpu.pipeline_mode<synchronous>, transform_indices = @transform_1, window_bounds = array<i64: 32, 128>}, {transform_indices = @transform_2, window_bounds = array<i64: 512, 128>}]} {
    %c0 = arith.constant 0 : index
    %c0_0 = arith.constant 0 : index
    %0 = vector.load %arg1[%c0, %c0_0] : memref<512x32xf32, #tpu.memory_space<vmem>>, vector<512x32xf32>
    %c0_1 = arith.constant 0 : index
    %c0_2 = arith.constant 0 : index
    %1 = vector.load %arg2[%c0_1, %c0_2] : memref<32x128xf32, #tpu.memory_space<vmem>>, vector<32x128xf32>
    %cst = arith.constant dense<0.000000e+00> : vector<512x128xf32>
    %2 = tpu.matmul %0, %1, %cst {dimension_numbers = #tpu.dot_dimension_numbers<[1], [0], [0], [1], [0, 0, 1, 1], [], []>, precision = #tpu.contract_precision<fp32>} : vector<512x32xf32>, vector<32x128xf32>, vector<512x128xf32> -> vector<512x128xf32>
    %c0_3 = arith.constant 0 : index
    %c0_4 = arith.constant 0 : index
    %3 = vector.load %arg3[%c0_3, %c0_4] : memref<512x128xf32, #tpu.memory_space<vmem>>, vector<512x128xf32>
    tpu.vector_store %arg3[%c0_3, %c0_4], %2 {strides = array<i32>} : memref<512x128xf32, #tpu.memory_space<vmem>>, vector<512x128xf32>,
    return
  }
  func.func @transform_0(%arg0: i32) -> (i32, i32) {
    %c0_i32 = arith.constant 0 : i32
    %c0_i32_0 = arith.constant 0 : i32
    return %arg0, %c0_i32 : i32, i32
  }
  func.func @transform_1(%arg0: i32) -> (i32, i32) {
    %c0_i32 = arith.constant 0 : i32
    %c0_i32_0 = arith.constant 0 : i32
    %c0_i32_1 = arith.constant 0 : i32
    return %c0_i32, %c0_i32_0 : i32, i32
  }
  func.func @transform_2(%arg0: i32) -> (i32, i32) {
    %c0_i32 = arith.constant 0 : i32
    %c0_i32_0 = arith.constant 0 : i32
    return %arg0, %c0_i32 : i32, i32
  }
}

</mosaic_0001>

<llo_original>
// kernel: tpu_custom_call.1
$region0: #{tpu_custom_call.1}
  #allocation0 [shape = 'u32[]', space=smem, size = 0x4, offset = 0x4, fixed_abs, tag = 'smem constant byte address 0x4 - core index']
  #allocation1 [shape = 'u32[144,128]{1,0:T(1,128)}', space=vmem, size = 0x12000, scoped, tag = 'internal scratch']
  %s0 = inlined_call_operand.vmem [shape: f32[512,32], index: 0, kind: input, shape index: {}]
  %s1 = inlined_call_operand.vmem [shape: f32[32,128], index: 1, kind: input, shape index: {}]
  %s2 = inlined_call_operand.hbm [shape: f32[512,128], index: 2, kind: output, shape index: {}]
  %s3 = sld [smem:[#allocation0]]
  $region18: #{tpu_custom_call.1} parent=0
    _
  %s5 = ssub.s32 1, %s3
  %s6 = scalar_select 0, %s5, %s3
  $region1: #{tpu_custom_call.1} parent=0
    #allocation2 [shape = 'u8[262144]{0}', space=vmem, size = 0x40000, scoped, tag = 'output window, operand 0, single buffered']
    #allocation3 [shape = 's32[1]{0}', space=sflag, size = 0x4, scoped, tag = 'scoped memory for tpu_custom_call.1']
    %7 = vsyncpa [#allocation3], 0
    // Predicated region
    $region2: #{tpu_custom_call.1} parent=1 // pred_check
      _
    $region3: #{tpu_custom_call.1} parent=1 // pred_check_branch
      %9 = sbr.rel (0) target = $region5
    $region4: #{tpu_custom_call.1} parent=1 // pred_region
      _
    $region5: #{tpu_custom_call.1} parent=1 // pred_fallthru
      _
    // Predicated region
    $region6: #{tpu_custom_call.1} parent=1 // pred_check
      _
    $region7: #{tpu_custom_call.1} parent=1 // pred_check_branch
      %11 = sbr.rel (0) target = $region9
    $region8: #{tpu_custom_call.1} parent=1 // pred_region
      _
    $region9: #{tpu_custom_call.1} parent=1 // pred_fallthru
      _
    %v12 = vld [vmem:[%s0] sm:$0xff]
    %v13 = vld [vmem:[%s0 + $0x8] sm:$0xff]
    %v14 = vld [vmem:[%s0 + $0x10] sm:$0xff]
    %v15 = vld [vmem:[%s0 + $0x18] sm:$0xff]
    %v16 = vld [vmem:[%s0 + $0x20] sm:$0xff]
    %v17 = vld [vmem:[%s0 + $0x28] sm:$0xff]
    %v18 = vld [vmem:[%s0 + $0x30] sm:$0xff]
    %v19 = vld [vmem:[%s0 + $0x38] sm:$0xff]
    %v20 = vld [vmem:[%s0 + $0x40] sm:$0xff]
    %v21 = vld [vmem:[%s0 + $0x48] sm:$0xff]
    %v22 = vld [vmem:[%s0 + $0x50] sm:$0xff]
    %v23 = vld [vmem:[%s0 + $0x58] sm:$0xff]
    %v24 = vld [vmem:[%s0 + $0x60] sm:$0xff]
    %v25 = vld [vmem:[%s0 + $0x68] sm:$0xff]
    %v26 = vld [vmem:[%s0 + $0x70] sm:$0xff]
    %v27 = vld [vmem:[%s0 + $0x78] sm:$0xff]
    %v28 = vld [vmem:[%s0 + $0x80] sm:$0xff]
    %v29 = vld [vmem:[%s0 + $0x88] sm:$0xff]
    %v30 = vld [vmem:[%s0 + $0x90] sm:$0xff]
    %v31 = vld [vmem:[%s0 + $0x98] sm:$0xff]
    %v32 = vld [vmem:[%s0 + $0xa0] sm:$0xff]
    %v33 = vld [vmem:[%s0 + $0xa8] sm:$0xff]
    %v34 = vld [vmem:[%s0 + $0xb0] sm:$0xff]
    %v35 = vld [vmem:[%s0 + $0xb8] sm:$0xff]
    %v36 = vld [vmem:[%s0 + $0xc0] sm:$0xff]
    %v37 = vld [vmem:[%s0 + $0xc8] sm:$0xff]
    %v38 = vld [vmem:[%s0 + $0xd0] sm:$0xff]
    %v39 = vld [vmem:[%s0 + $0xd8] sm:$0xff]
    %v40 = vld [vmem:[%s0 + $0xe0] sm:$0xff]
    %v41 = vld [vmem:[%s0 + $0xe8] sm:$0xff]
    %v42 = vld [vmem:[%s0 + $0xf0] sm:$0xff]
    %v43 = vld [vmem:[%s0 + $0xf8] sm:$0xff]
    %v44 = vld [vmem:[%s0 + $0x100] sm:$0xff]
    %v45 = vld [vmem:[%s0 + $0x108] sm:$0xff]
    %v46 = vld [vmem:[%s0 + $0x110] sm:$0xff]
    %v47 = vld [vmem:[%s0 + $0x118] sm:$0xff]
    %v48 = vld [vmem:[%s0 + $0x120] sm:$0xff]
    %v49 = vld [vmem:[%s0 + $0x128] sm:$0xff]
    %v50 = vld [vmem:[%s0 + $0x130] sm:$0xff]
    %v51 = vld [vmem:[%s0 + $0x138] sm:$0xff]
    %v52 = vld [vmem:[%s0 + $0x140] sm:$0xff]
    %v53 = vld [vmem:[%s0 + $0x148] sm:$0xff]
    %v54 = vld [vmem:[%s0 + $0x150] sm:$0xff]
    %v55 = vld [vmem:[%s0 + $0x158] sm:$0xff]
    %v56 = vld [vmem:[%s0 + $0x160] sm:$0xff]
    %v57 = vld [vmem:[%s0 + $0x168] sm:$0xff]
    %v58 = vld [vmem:[%s0 + $0x170] sm:$0xff]
    %v59 = vld [vmem:[%s0 + $0x178] sm:$0xff]
    %v60 = vld [vmem:[%s0 + $0x180] sm:$0xff]
    %v61 = vld [vmem:[%s0 + $0x188] sm:$0xff]
    %v62 = vld [vmem:[%s0 + $0x190] sm:$0xff]
    %v63 = vld [vmem:[%s0 + $0x198] sm:$0xff]
    %v64 = vld [vmem:[%s0 + $0x1a0] sm:$0xff]
    %v65 = vld [vmem:[%s0 + $0x1a8] sm:$0xff]
    %v66 = vld [vmem:[%s0 + $0x1b0] sm:$0xff]
    %v67 = vld [vmem:[%s0 + $0x1b8] sm:$0xff]
    %v68 = vld [vmem:[%s0 + $0x1c0] sm:$0xff]
    %v69 = vld [vmem:[%s0 + $0x1c8] sm:$0xff]
    %v70 = vld [vmem:[%s0 + $0x1d0] sm:$0xff]
    %v71 = vld [vmem:[%s0 + $0x1d8] sm:$0xff]
    %v72 = vld [vmem:[%s0 + $0x1e0] sm:$0xff]
    %v73 = vld [vmem:[%s0 + $0x1e8] sm:$0xff]
    %v74 = vld [vmem:[%s0 + $0x1f0] sm:$0xff]
    %v75 = vld [vmem:[%s0 + $0x1f8] sm:$0xff]
    %v76 = vld [vmem:[%s1] sm:$0xff]
    %v77 = vld [vmem:[%s1 + $0x8] sm:$0xff]
    %v78 = vld [vmem:[%s1 + $0x10] sm:$0xff]
    %v79 = vld [vmem:[%s1 + $0x18] sm:$0xff]
    %vm80 = vcmask 261120
    %v82 = vsel %vm80, %v12, 0
    %v85 = vsel %vm80, %v13, 0
    %v88 = vsel %vm80, %v14, 0
    %v91 = vsel %vm80, %v15, 0
    %v94 = vsel %vm80, %v16, 0
    %v97 = vsel %vm80, %v17, 0
    %v100 = vsel %vm80, %v18, 0
    %v103 = vsel %vm80, %v19, 0
    %v106 = vsel %vm80, %v20, 0
    %v109 = vsel %vm80, %v21, 0
    %v112 = vsel %vm80, %v22, 0
    %v115 = vsel %vm80, %v23, 0
    %v118 = vsel %vm80, %v24, 0
    %v121 = vsel %vm80, %v25, 0
    %v124 = vsel %vm80, %v26, 0
    %v127 = vsel %vm80, %v27, 0
    %v130 = vsel %vm80, %v28, 0
    %v133 = vsel %vm80, %v29, 0
    %v136 = vsel %vm80, %v30, 0
    %v139 = vsel %vm80, %v31, 0
    %v142 = vsel %vm80, %v32, 0
    %v145 = vsel %vm80, %v33, 0
    %v148 = vsel %vm80, %v34, 0
    %v151 = vsel %vm80, %v35, 0
    %v154 = vsel %vm80, %v36, 0
    %v157 = vsel %vm80, %v37, 0
    %v160 = vsel %vm80, %v38, 0
    %v163 = vsel %vm80, %v39, 0
    %v166 = vsel %vm80, %v40, 0
    %v169 = vsel %vm80, %v41, 0
    %v172 = vsel %vm80, %v42, 0
    %v175 = vsel %vm80, %v43, 0
    %v178 = vsel %vm80, %v44, 0
    %v181 = vsel %vm80, %v45, 0
    %v184 = vsel %vm80, %v46, 0
    %v187 = vsel %vm80, %v47, 0
    %v190 = vsel %vm80, %v48, 0
    %v193 = vsel %vm80, %v49, 0
    %v196 = vsel %vm80, %v50, 0
    %v199 = vsel %vm80, %v51, 0
    %v202 = vsel %vm80, %v52, 0
    %v205 = vsel %vm80, %v53, 0
    %v208 = vsel %vm80, %v54, 0
    %v211 = vsel %vm80, %v55, 0
    %v214 = vsel %vm80, %v56, 0
    %v217 = vsel %vm80, %v57, 0
    %v220 = vsel %vm80, %v58, 0
    %v223 = vsel %vm80, %v59, 0
    %v226 = vsel %vm80, %v60, 0
    %v229 = vsel %vm80, %v61, 0
    %v232 = vsel %vm80, %v62, 0
    %v235 = vsel %vm80, %v63, 0
    %v238 = vsel %vm80, %v64, 0
    %v241 = vsel %vm80, %v65, 0
    %v244 = vsel %vm80, %v66, 0
    %v247 = vsel %vm80, %v67, 0
    %v250 = vsel %vm80, %v68, 0
    %v253 = vsel %vm80, %v69, 0
    %v256 = vsel %vm80, %v70, 0
    %v259 = vsel %vm80, %v71, 0
    %v262 = vsel %vm80, %v72, 0
    %v265 = vsel %vm80, %v73, 0
    %v268 = vsel %vm80, %v74, 0
    %v271 = vsel %vm80, %v75, 0
    %273 = vmatprep.subr.mxu0 0.0
    %v274 = vand.u32 %v76, 4294901760
    %275 = vmatpush1.msra.mxu0 %v274
    %276 = vmatprep.subr.mxu0 0.0
    %v277 = vand.u32 %v77, 4294901760
    %278 = vmatpush1.msra.mxu0 %v277
    %279 = vmatprep.subr.mxu0 0.0
    %v280 = vand.u32 %v78, 4294901760
    %281 = vmatpush1.msra.mxu0 %v280
    %282 = vmatprep.subr.mxu0 0.0
    %v283 = vand.u32 %v79, 4294901760
    %284 = vmatpush1.msra.mxu0 %v283
    %285 = vmatprep.subr.mxu0 0.0
    %286 = vmatpush1.msra.mxu0 0.0
    %287 = vmatprep.subr.mxu0 0.0
    %288 = vmatpush1.msra.mxu0 0.0
    %289 = vmatprep.subr.mxu0 0.0
    %290 = vmatpush1.msra.mxu0 0.0
    %291 = vmatprep.subr.mxu0 0.0
    %292 = vmatpush1.msra.mxu0 0.0
    %293 = vmatprep.subr.mxu0 0.0
    %294 = vmatpush1.msra.mxu0 0.0
    %295 = vmatprep.subr.mxu0 0.0
    %296 = vmatpush1.msra.mxu0 0.0
    %297 = vmatprep.subr.mxu0 0.0
    %298 = vmatpush1.msra.mxu0 0.0
    %299 = vmatprep.subr.mxu0 0.0
    %300 = vmatpush1.msra.mxu0 0.0
    %301 = vmatprep.subr.mxu0 0.0
    %302 = vmatpush1.msra.mxu0 0.0
    %303 = vmatprep.subr.mxu0 0.0
    %304 = vmatpush1.msra.mxu0 0.0
    %305 = vmatprep.subr.mxu0 0.0
    %306 = vmatpush1.msra.mxu0 0.0
    %307 = vmatprep.subr.mxu0 0.0
    %308 = vmatpush1.msra.mxu0 0.0
    %309 = vmatprep.subr.mxu0 0.0
    %310 = vmatpush1.msra.mxu0 0.0
    %311 = vmatprep.subr.mxu0 0.0
    %312 = vmatpush1.msra.mxu0 0.0
    %313 = vmatprep.subr.mxu0 0.0
    %314 = vmatpush1.msra.mxu0 0.0
    %315 = vmatprep.subr.mxu0 0.0
    %316 = vmatpush1.msra.mxu0 0.0
    %317 = vmatprep.subr.mxu0 0.0
    %318 = vmatpush1.msra.mxu0 0.0
    %319 = vmatprep.subr.mxu0 0.0
    %320 = vmatpush1.msra.mxu0 0.0
    %321 = vmatprep.subr.mxu0 0.0
    %322 = vmatpush1.msra.mxu0 0.0
    %323 = vmatprep.subr.mxu0 0.0
    %324 = vmatpush1.msra.mxu0 0.0
    %325 = vmatprep.subr.mxu0 0.0
    %326 = vmatpush1.msra.mxu0 0.0
    %327 = vmatprep.subr.mxu0 0.0
    %328 = vmatpush1.msra.mxu0 0.0
    %329 = vmatprep.subr.mxu0 0.0
    %330 = vmatpush1.msra.mxu0 0.0
    %331 = vmatprep.subr.mxu0 0.0
    %332 = vmatpush1.msra.mxu0 0.0
    %333 = vmatprep.subr.mxu0 0.0
    %334 = vmatpush1.msra.mxu0 0.0
    %335 = vmatprep.subr.mxu0 0.0
    %336 = vmatpush1.msra.mxu0 0.0
    %337 = vmatprep.subr.mxu0 0.0
    %338 = vmatpush1.msra.mxu0 0.0
    %339 = vmatprep.subr.mxu0 0.0
    %340 = vmatpush1.msra.mxu0 0.0
    %341 = vmatprep.mubr.f32.mxu0 0.0
    %v342 = vand.u32 %v82, 4294901760
    %v343 = vsub.f32 %v82, %v342
    %v344 = vand.u32 %v343, 4294901760
    %v345 = vsub.f32 %v343, %v344
    %v346 = vand.u32 %v345, 4294901760
    %347 = vmatmul.mubr.f32.gmra.mrb[0].mxu0 %v346
    %v348 = vpop.f32.mrb[0].mxu0
    %v349 = vadd.f32 0.0, %v348
    %v350 = vpop.f32.mrb[0].mxu0
    %351 = vmatprep.mubr.f32.mxu0 0.0
    %v352 = vand.u32 %v85, 4294901760
    %v353 = vsub.f32 %v85, %v352
    %v354 = vand.u32 %v353, 4294901760
    %v355 = vsub.f32 %v353, %v354
    %v356 = vand.u32 %v355, 4294901760
    %357 = vmatmul.mubr.f32.gmra.mrb[0].mxu0 %v356
    %v358 = vpop.f32.mrb[0].mxu0
    %v359 = vadd.f32 0.0, %v358
    %v360 = vpop.f32.mrb[0].mxu0
    %361 = vmatprep.mubr.f32.mxu0 0.0
    %v362 = vand.u32 %v88, 4294901760
    %v363 = vsub.f32 %v88, %v362
    %v364 = vand.u32 %v363, 4294901760
    %v365 = vsub.f32 %v363, %v364
    %v366 = vand.u32 %v365, 4294901760
    %367 = vmatmul.mubr.f32.gmra.mrb[0].mxu0 %v366
    %v368 = vpop.f32.mrb[0].mxu0
    %v369 = vadd.f32 0.0, %v368
    %v370 = vpop.f32.mrb[0].mxu0
    %371 = vmatprep.mubr.f32.mxu0 0.0
    %v372 = vand.u32 %v91, 4294901760
    %v373 = vsub.f32 %v91, %v372
    %v374 = vand.u32 %v373, 4294901760
    %v375 = vsub.f32 %v373, %v374
    %v376 = vand.u32 %v375, 4294901760
    %377 = vmatmul.mubr.f32.gmra.mrb[0].mxu0 %v376
    %v378 = vpop.f32.mrb[0].mxu0
    %v379 = vadd.f32 0.0, %v378
    %v380 = vpop.f32.mrb[0].mxu0
    %381 = vmatprep.mubr.f32.mxu0 0.0
    %v382 = vand.u32 %v94, 4294901760
    %v383 = vsub.f32 %v94, %v382
    %v384 = vand.u32 %v383, 4294901760
    %v385 = vsub.f32 %v383, %v384
    %v386 = vand.u32 %v385, 4294901760
    %387 = vmatmul.mubr.f32.gmra.mrb[0].mxu0 %v386
    %v388 = vpop.f32.mrb[0].mxu0
    %v389 = vadd.f32 0.0, %v388
    %v390 = vpop.f32.mrb[0].mxu0
    %391 = vmatprep.mubr.f32.mxu0 0.0
    %v392 = vand.u32 %v97, 4294901760
    %v393 = vsub.f32 %v97, %v392
    %v394 = vand.u32 %v393, 4294901760
    %v395 = vsub.f32 %v393, %v394
    %v396 = vand.u32 %v395, 4294901760
    %397 = vmatmul.mubr.f32.gmra.mrb[0].mxu0 %v396
    %v398 = vpop.f32.mrb[0].mxu0
    %v399 = vadd.f32 0.0, %v398
    %v400 = vpop.f32.mrb[0].mxu0
    %401 = vmatprep.mubr.f32.mxu0 0.0
    %v402 = vand.u32 %v100, 4294901760
    %v403 = vsub.f32 %v100, %v402
    %v404 = vand.u32 %v403, 4294901760
    %v405 = vsub.f32 %v403, %v404
    %v406 = vand.u32 %v405, 4294901760
    %407 = vmatmul.mubr.f32.gmra.mrb[0].mxu0 %v406
    %v408 = vpop.f32.mrb[0].mxu0
    %v409 = vadd.f32 0.0, %v408
    %v410 = vpop.f32.mrb[0].mxu0
    %411 = vmatprep.mubr.f32.mxu0 0.0
    %v412 = vand.u32 %v103, 4294901760
    %v413 = vsub.f32 %v103, %v412
    %v414 = vand.u32 %v413, 4294901760
    %v415 = vsub.f32 %v413, %v414
    %v416 = vand.u32 %v415, 4294901760
    %417 = vmatmul.mubr.f32.gmra.mrb[0].mxu0 %v416
    %v418 = vpop.f32.mrb[0].mxu0
    %v419 = vadd.f32 0.0, %v418
    %v420 = vpop.f32.mrb[0].mxu0
    %421 = vmatprep.mubr.f32.mxu0 0.0
    %v422 = vand.u32 %v106, 4294901760
    %v423 = vsub.f32 %v106, %v422
    %v424 = vand.u32 %v423, 4294901760
    %v425 = vsub.f32 %v423, %v424
    %v426 = vand.u32 %v425, 4294901760
    %427 = vmatmul.mubr.f32.gmra.mrb[0].mxu0 %v426
    %v428 = vpop.f32.mrb[0].mxu0
    %v429 = vadd.f32 0.0, %v428
    %v430 = vpop.f32.mrb[0].mxu0
    %431 = vmatprep.mubr.f32.mxu0 0.0
    %v432 = vand.u32 %v109, 4294901760
    %v433 = vsub.f32 %v109, %v432
    %v434 = vand.u32 %v433, 4294901760
    %v435 = vsub.f32 %v433, %v434
    %v436 = vand.u32 %v435, 4294901760
    %437 = vmatmul.mubr.f32.gmra.mrb[0].mxu0 %v436
    %v438 = vpop.f32.mrb[0].mxu0
    %v439 = vadd.f32 0.0, %v438
    %v440 = vpop.f32.mrb[0].mxu0
    %441 = vmatprep.mubr.f32.mxu0 0.0
    %v442 = vand.u32 %v112, 4294901760
    %v443 = vsub.f32 %v112, %v442
    %v444 = vand.u32 %v443, 4294901760
    %v445 = vsub.f32 %v443, %v444
    %v446 = vand.u32 %v445, 4294901760
    %447 = vmatmul.mubr.f32.gmra.mrb[0].mxu0 %v446
    %v448 = vpop.f32.mrb[0].mxu0
    %v449 = vadd.f32 0.0, %v448
    %v450 = vpop.f32.mrb[0].mxu0
    %451 = vmatprep.mubr.f32.mxu0 0.0
    %v452 = vand.u32 %v115, 4294901760
    %v453 = vsub.f32 %v115, %v452
    %v454 = vand.u32 %v453, 4294901760
    %v455 = vsub.f32 %v453, %v454
    %v456 = vand.u32 %v455, 4294901760
    %457 = vmatmul.mubr.f32.gmra.mrb[0].mxu0 %v456
    %v458 = vpop.f32.mrb[0].mxu0
    %v459 = vadd.f32 0.0, %v458
    %v460 = vpop.f32.mrb[0].mxu0
    %461 = vmatprep.mubr.f32.mxu0 0.0
    %v462 = vand.u32 %v118, 4294901760
    %v463 = vsub.f32 %v118, %v462
    %v464 = vand.u32 %v463, 4294901760
    %v465 = vsub.f32 %v463, %v464
    %v466 = vand.u32 %v465, 4294901760
    %467 = vmatmul.mubr.f32.gmra.mrb[0].mxu0 %v466
    %v468 = vpop.f32.mrb[0].mxu0
    %v469 = vadd.f32 0.0, %v468
    %v470 = vpop.f32.mrb[0].mxu0
    %471 = vmatprep.mubr.f32.mxu0 0.0
    %v472 = vand.u32 %v121, 4294901760
    %v473 = vsub.f32 %v121, %v472
    %v474 = vand.u32 %v473, 4294901760
    %v475 = vsub.f32 %v473, %v474
    %v476 = vand.u32 %v475, 4294901760
    %477 = vmatmul.mubr.f32.gmra.mrb[0].mxu0 %v476
    %v478 = vpop.f32.mrb[0].mxu0
    %v479 = vadd.f32 0.0, %v478
    %v480 = vpop.f32.mrb[0].mxu0
    %481 = vmatprep.mubr.f32.mxu0 0.0
    %v482 = vand.u32 %v124, 4294901760
    %v483 = vsub.f32 %v124, %v482
    %v484 = vand.u32 %v483, 4294901760
    %v485 = vsub.f32 %v483, %v484
    %v486 = vand.u32 %v485, 4294901760
    %487 = vmatmul.mubr.f32.gmra.mrb[0].mxu0 %v486
    %v488 = vpop.f32.mrb[0].mxu0
    %v489 = vadd.f32 0.0, %v488
    %v490 = vpop.f32.mrb[0].mxu0
    %491 = vmatprep.mubr.f32.mxu0 0.0
    %v492 = vand.u32 %v127, 4294901760
    %v493 = vsub.f32 %v127, %v492
    %v494 = vand.u32 %v493, 4294901760
    %v495 = vsub.f32 %v493, %v494
    %v496 = vand.u32 %v495, 4294901760
    %497 = vmatmul.mubr.f32.gmra.mrb[0].mxu0 %v496
    %v498 = vpop.f32.mrb[0].mxu0
    %v499 = vadd.f32 0.0, %v498
    %v500 = vpop.f32.mrb[0].mxu0
    %501 = vmatprep.mubr.f32.mxu0 0.0
    %v502 = vand.u32 %v130, 4294901760
    %v503 = vsub.f32 %v130, %v502
    %v504 = vand.u32 %v503, 4294901760
    %v505 = vsub.f32 %v503, %v504
    %v506 = vand.u32 %v505, 4294901760
    %507 = vmatmul.mubr.f32.gmra.mrb[0].mxu0 %v506
    %v508 = vpop.f32.mrb[0].mxu0
    %v509 = vadd.f32 0.0, %v508
    %v510 = vpop.f32.mrb[0].mxu0
    %511 = vmatprep.mubr.f32.mxu0 0.0
    %v512 = vand.u32 %v133, 4294901760
    %v513 = vsub.f32 %v133, %v512
    %v514 = vand.u32 %v513, 4294901760
    %v515 = vsub.f32 %v513, %v514
    %v516 = vand.u32 %v515, 4294901760
    %517 = vmatmul.mubr.f32.gmra.mrb[0].mxu0 %v516
    %v518 = vpop.f32.mrb[0].mxu0
    %v519 = vadd.f32 0.0, %v518
    %v520 = vpop.f32.mrb[0].mxu0
    %521 = vmatprep.mubr.f32.mxu0 0.0
    %v522 = vand.u32 %v136, 4294901760
    %v523 = vsub.f32 %v136, %v522
    %v524 = vand.u32 %v523, 4294901760
    %v525 = vsub.f32 %v523, %v524
    %v526 = vand.u32 %v525, 4294901760
    %527 = vmatmul.mubr.f32.gmra.mrb[0].mxu0 %v526
    %v528 = vpop.f32.mrb[0].mxu0
    %v529 = vadd.f32 0.0, %v528
    %v530 = vpop.f32.mrb[0].mxu0
    %531 = vmatprep.mubr.f32.mxu0 0.0
    %v532 = vand.u32 %v139, 4294901760
    %v533 = vsub.f32 %v139, %v532
    %v534 = vand.u32 %v533, 4294901760
    %v535 = vsub.f32 %v533, %v534
    %v536 = vand.u32 %v535, 4294901760
    %537 = vmatmul.mubr.f32.gmra.mrb[0].mxu0 %v536
    %v538 = vpop.f32.mrb[0].mxu0
    %v539 = vadd.f32 0.0, %v538
    %v540 = vpop.f32.mrb[0].mxu0
    %541 = vmatprep.mubr.f32.mxu0 0.0
    %v542 = vand.u32 %v142, 4294901760
    %v543 = vsub.f32 %v142, %v542
    %v544 = vand.u32 %v543, 4294901760
    %v545 = vsub.f32 %v543, %v544
    %v546 = vand.u32 %v545, 4294901760
    %547 = vmatmul.mubr.f32.gmra.mrb[0].mxu0 %v546
    %v548 = vpop.f32.mrb[0].mxu0
    %v549 = vadd.f32 0.0, %v548
    %v550 = vpop.f32.mrb[0].mxu0
    %551 = vmatprep.mubr.f32.mxu0 0.0
    %v552 = vand.u32 %v145, 4294901760
    %v553 = vsub.f32 %v145, %v552
    %v554 = vand.u32 %v553, 4294901760
    %v555 = vsub.f32 %v553, %v554
    %v556 = vand.u32 %v555, 4294901760
    %557 = vmatmul.mubr.f32.gmra.mrb[0].mxu0 %v556
    %v558 = vpop.f32.mrb[0].mxu0
    %v559 = vadd.f32 0.0, %v558
    %v560 = vpop.f32.mrb[0].mxu0
    %561 = vmatprep.mubr.f32.mxu0 0.0
    %v562 = vand.u32 %v148, 4294901760
    %v563 = vsub.f32 %v148, %v562
    %v564 = vand.u32 %v563, 4294901760
    %v565 = vsub.f32 %v563, %v564
    %v566 = vand.u32 %v565, 4294901760
    %567 = vmatmul.mubr.f32.gmra.mrb[0].mxu0 %v566
    %v568 = vpop.f32.mrb[0].mxu0
    %v569 = vadd.f32 0.0, %v568
    %v570 = vpop.f32.mrb[0].mxu0
    %571 = vmatprep.mubr.f32.mxu0 0.0
    %v572 = vand.u32 %v151, 4294901760
    %v573 = vsub.f32 %v151, %v572
    %v574 = vand.u32 %v573, 4294901760
    %v575 = vsub.f32 %v573, %v574
    %v576 = vand.u32 %v575, 4294901760
    %577 = vmatmul.mubr.f32.gmra.mrb[0].mxu0 %v576
    %v578 = vpop.f32.mrb[0].mxu0
    %v579 = vadd.f32 0.0, %v578
    %v580 = vpop.f32.mrb[0].mxu0
    %581 = vmatprep.mubr.f32.mxu0 0.0
    %v582 = vand.u32 %v154, 4294901760
    %v583 = vsub.f32 %v154, %v582
    %v584 = vand.u32 %v583, 4294901760
    %v585 = vsub.f32 %v583, %v584
    %v586 = vand.u32 %v585, 4294901760
    %587 = vmatmul.mubr.f32.gmra.mrb[0].mxu0 %v586
    %v588 = vpop.f32.mrb[0].mxu0
    %v589 = vadd.f32 0.0, %v588
    %v590 = vpop.f32.mrb[0].mxu0
    %591 = vmatprep.mubr.f32.mxu0 0.0
    %v592 = vand.u32 %v157, 4294901760
    %v593 = vsub.f32 %v157, %v592
    %v594 = vand.u32 %v593, 4294901760
    %v595 = vsub.f32 %v593, %v594
    %v596 = vand.u32 %v595, 4294901760
    %597 = vmatmul.mubr.f32.gmra.mrb[0].mxu0 %v596
    %v598 = vpop.f32.mrb[0].mxu0
    %v599 = vadd.f32 0.0, %v598
    %v600 = vpop.f32.mrb[0].mxu0
    %601 = vmatprep.mubr.f32.mxu0 0.0
    %v602 = vand.u32 %v160, 4294901760
    %v603 = vsub.f32 %v160, %v602
    %v604 = vand.u32 %v603, 4294901760
    %v605 = vsub.f32 %v603, %v604
    %v606 = vand.u32 %v605, 4294901760
    %607 = vmatmul.mubr.f32.gmra.mrb[0].mxu0 %v606
    %v608 = vpop.f32.mrb[0].mxu0
    %v609 = vadd.f32 0.0, %v608
    %v610 = vpop.f32.mrb[0].mxu0
    %611 = vmatprep.mubr.f32.mxu0 0.0
    %v612 = vand.u32 %v163, 4294901760
    %v613 = vsub.f32 %v163, %v612
    %v614 = vand.u32 %v613, 4294901760
    %v615 = vsub.f32 %v613, %v614
    %v616 = vand.u32 %v615, 4294901760
    %617 = vmatmul.mubr.f32.gmra.mrb[0].mxu0 %v616
    %v618 = vpop.f32.mrb[0].mxu0
    %v619 = vadd.f32 0.0, %v618
    %v620 = vpop.f32.mrb[0].mxu0
    %621 = vmatprep.mubr.f32.mxu0 0.0
    %v622 = vand.u32 %v166, 4294901760
    %v623 = vsub.f32 %v166, %v622
    %v624 = vand.u32 %v623, 4294901760
    %v625 = vsub.f32 %v623, %v624
    %v626 = vand.u32 %v625, 4294901760
    %627 = vmatmul.mubr.f32.gmra.mrb[0].mxu0 %v626
    %v628 = vpop.f32.mrb[0].mxu0
    %v629 = vadd.f32 0.0, %v628
    %v630 = vpop.f32.mrb[0].mxu0
    %631 = vmatprep.mubr.f32.mxu0 0.0
    %v632 = vand.u32 %v169, 4294901760
    %v633 = vsub.f32 %v169, %v632
    %v634 = vand.u32 %v633, 4294901760
    %v635 = vsub.f32 %v633, %v634
    %v636 = vand.u32 %v635, 4294901760
    %637 = vmatmul.mubr.f32.gmra.mrb[0].mxu0 %v636
    %v638 = vpop.f32.mrb[0].mxu0
    %v639 = vadd.f32 0.0, %v638
    %v640 = vpop.f32.mrb[0].mxu0
    %641 = vmatprep.mubr.f32.mxu0 0.0
    %v642 = vand.u32 %v172, 4294901760
    %v643 = vsub.f32 %v172, %v642
    %v644 = vand.u32 %v643, 4294901760
    %v645 = vsub.f32 %v643, %v644
    %v646 = vand.u32 %v645, 4294901760
    %647 = vmatmul.mubr.f32.gmra.mrb[0].mxu0 %v646
    %v648 = vpop.f32.mrb[0].mxu0
    %v649 = vadd.f32 0.0, %v648
    %v650 = vpop.f32.mrb[0].mxu0
    %651 = vmatprep.mubr.f32.mxu0 0.0
    %v652 = vand.u32 %v175, 4294901760
    %v653 = vsub.f32 %v175, %v652
    %v654 = vand.u32 %v653, 4294901760
    %v655 = vsub.f32 %v653, %v654
    %v656 = vand.u32 %v655, 4294901760
    %657 = vmatmul.mubr.f32.gmra.mrb[0].mxu0 %v656
    %v658 = vpop.f32.mrb[0].mxu0
    %v659 = vadd.f32 0.0, %v658
    %v660 = vpop.f32.mrb[0].mxu0
    %661 = vmatprep.mubr.f32.mxu0 0.0
    %v662 = vand.u32 %v178, 4294901760
    %v663 = vsub.f32 %v178, %v662
    %v664 = vand.u32 %v663, 4294901760
    %v665 = vsub.f32 %v663, %v664
    %v666 = vand.u32 %v665, 4294901760
    %667 = vmatmul.mubr.f32.gmra.mrb[0].mxu0 %v666
    %v668 = vpop.f32.mrb[0].mxu0
    %v669 = vadd.f32 0.0, %v668
    %v670 = vpop.f32.mrb[0].mxu0
    %671 = vmatprep.mubr.f32.mxu0 0.0
    %v672 = vand.u32 %v181, 4294901760
    %v673 = vsub.f32 %v181, %v672
    %v674 = vand.u32 %v673, 4294901760
    %v675 = vsub.f32 %v673, %v674
    %v676 = vand.u32 %v675, 4294901760
    %677 = vmatmul.mubr.f32.gmra.mrb[0].mxu0 %v676
    %v678 = vpop.f32.mrb[0].mxu0
    %v679 = vadd.f32 0.0, %v678
    %v680 = vpop.f32.mrb[0].mxu0
    %681 = vmatprep.mubr.f32.mxu0 0.0
    %v682 = vand.u32 %v184, 4294901760
    %v683 = vsub.f32 %v184, %v682
    %v684 = vand.u32 %v683, 4294901760
    %v685 = vsub.f32 %v683, %v684
    %v686 = vand.u32 %v685, 4294901760
    %687 = vmatmul.mubr.f32.gmra.mrb[0].mxu0 %v686
    %v688 = vpop.f32.mrb[0].mxu0
    %v689 = vadd.f32 0.0, %v688
    %v690 = vpop.f32.mrb[0].mxu0
    %691 = vmatprep.mubr.f32.mxu0 0.0
    %v692 = vand.u32 %v187, 4294901760
    %v693 = vsub.f32 %v187, %v692
    %v694 = vand.u32 %v693, 4294901760
    %v695 = vsub.f32 %v693, %v694
    %v696 = vand.u32 %v695, 4294901760
    %697 = vmatmul.mubr.f32.gmra.mrb[0].mxu0 %v696
    %v698 = vpop.f32.mrb[0].mxu0
    %v699 = vadd.f32 0.0, %v698
    %v700 = vpop.f32.mrb[0].mxu0
    %701 = vmatprep.mubr.f32.mxu0 0.0
    %v702 = vand.u32 %v190, 4294901760
    %v703 = vsub.f32 %v190, %v702
    %v704 = vand.u32 %v703, 4294901760
    %v705 = vsub.f32 %v703, %v704
    %v706 = vand.u32 %v705, 4294901760
    %707 = vmatmul.mubr.f32.gmra.mrb[0].mxu0 %v706
    %v708 = vpop.f32.mrb[0].mxu0
    %v709 = vadd.f32 0.0, %v708
    %v710 = vpop.f32.mrb[0].mxu0
    %711 = vmatprep.mubr.f32.mxu0 0.0
    %v712 = vand.u32 %v193, 4294901760
    %v713 = vsub.f32 %v193, %v712
    %v714 = vand.u32 %v713, 4294901760
    %v715 = vsub.f32 %v713, %v714
    %v716 = vand.u32 %v715, 4294901760
    %717 = vmatmul.mubr.f32.gmra.mrb[0].mxu0 %v716
    %v718 = vpop.f32.mrb[0].mxu0
    %v719 = vadd.f32 0.0, %v718
    %v720 = vpop.f32.mrb[0].mxu0
    %721 = vmatprep.mubr.f32.mxu0 0.0
    %v722 = vand.u32 %v196, 4294901760
    %v723 = vsub.f32 %v196, %v722
    %v724 = vand.u32 %v723, 4294901760
    %v725 = vsub.f32 %v723, %v724
    %v726 = vand.u32 %v725, 4294901760
    %727 = vmatmul.mubr.f32.gmra.mrb[0].mxu0 %v726
    %v728 = vpop.f32.mrb[0].mxu0
    %v729 = vadd.f32 0.0, %v728
    %v730 = vpop.f32.mrb[0].mxu0
    %731 = vmatprep.mubr.f32.mxu0 0.0
    %v732 = vand.u32 %v199, 4294901760
    %v733 = vsub.f32 %v199, %v732
    %v734 = vand.u32 %v733, 4294901760
    %v735 = vsub.f32 %v733, %v734
    %v736 = vand.u32 %v735, 4294901760
    %737 = vmatmul.mubr.f32.gmra.mrb[0].mxu0 %v736
    %v738 = vpop.f32.mrb[0].mxu0
    %v739 = vadd.f32 0.0, %v738
    %v740 = vpop.f32.mrb[0].mxu0
    %741 = vmatprep.mubr.f32.mxu0 0.0
    %v742 = vand.u32 %v202, 4294901760
    %v743 = vsub.f32 %v202, %v742
    %v744 = vand.u32 %v743, 4294901760
    %v745 = vsub.f32 %v743, %v744
    %v746 = vand.u32 %v745, 4294901760
    %747 = vmatmul.mubr.f32.gmra.mrb[0].mxu0 %v746
    %v748 = vpop.f32.mrb[0].mxu0
    %v749 = vadd.f32 0.0, %v748
    %v750 = vpop.f32.mrb[0].mxu0
    %751 = vmatprep.mubr.f32.mxu0 0.0
    %v752 = vand.u32 %v205, 4294901760
    %v753 = vsub.f32 %v205, %v752
    %v754 = vand.u32 %v753, 4294901760
    %v755 = vsub.f32 %v753, %v754
    %v756 = vand.u32 %v755, 4294901760
    %757 = vmatmul.mubr.f32.gmra.mrb[0].mxu0 %v756
    %v758 = vpop.f32.mrb[0].mxu0
    %v759 = vadd.f32 0.0, %v758
    %v760 = vpop.f32.mrb[0].mxu0
    %761 = vmatprep.mubr.f32.mxu0 0.0
    %v762 = vand.u32 %v208, 4294901760
    %v763 = vsub.f32 %v208, %v762
    %v764 = vand.u32 %v763, 4294901760
    %v765 = vsub.f32 %v763, %v764
    %v766 = vand.u32 %v765, 4294901760
    %767 = vmatmul.mubr.f32.gmra.mrb[0].mxu0 %v766
    %v768 = vpop.f32.mrb[0].mxu0
    %v769 = vadd.f32 0.0, %v768
    %v770 = vpop.f32.mrb[0].mxu0
    %771 = vmatprep.mubr.f32.mxu0 0.0
    %v772 = vand.u32 %v211, 4294901760
    %v773 = vsub.f32 %v211, %v772
    %v774 = vand.u32 %v773, 4294901760
    %v775 = vsub.f32 %v773, %v774
    %v776 = vand.u32 %v775, 4294901760
    %777 = vmatmul.mubr.f32.gmra.mrb[0].mxu0 %v776
    %v778 = vpop.f32.mrb[0].mxu0
    %v779 = vadd.f32 0.0, %v778
    %v780 = vpop.f32.mrb[0].mxu0
    %781 = vmatprep.mubr.f32.mxu0 0.0
    %v782 = vand.u32 %v214, 4294901760
    %v783 = vsub.f32 %v214, %v782
    %v784 = vand.u32 %v783, 4294901760
    %v785 = vsub.f32 %v783, %v784
    %v786 = vand.u32 %v785, 4294901760
    %787 = vmatmul.mubr.f32.gmra.mrb[0].mxu0 %v786
    %v788 = vpop.f32.mrb[0].mxu0
    %v789 = vadd.f32 0.0, %v788
    %v790 = vpop.f32.mrb[0].mxu0
    %791 = vmatprep.mubr.f32.mxu0 0.0
    %v792 = vand.u32 %v217, 4294901760
    %v793 = vsub.f32 %v217, %v792
    %v794 = vand.u32 %v793, 4294901760
    %v795 = vsub.f32 %v793, %v794
    %v796 = vand.u32 %v795, 4294901760
    %797 = vmatmul.mubr.f32.gmra.mrb[0].mxu0 %v796
    %v798 = vpop.f32.mrb[0].mxu0
    %v799 = vadd.f32 0.0, %v798
    %v800 = vpop.f32.mrb[0].mxu0
    %801 = vmatprep.mubr.f32.mxu0 0.0
    %v802 = vand.u32 %v220, 4294901760
    %v803 = vsub.f32 %v220, %v802
    %v804 = vand.u32 %v803, 4294901760
    %v805 = vsub.f32 %v803, %v804
    %v806 = vand.u32 %v805, 4294901760
    %807 = vmatmul.mubr.f32.gmra.mrb[0].mxu0 %v806
    %v808 = vpop.f32.mrb[0].mxu0
    %v809 = vadd.f32 0.0, %v808
    %v810 = vpop.f32.mrb[0].mxu0
    %811 = vmatprep.mubr.f32.mxu0 0.0
    %v812 = vand.u32 %v223, 4294901760
    %v813 = vsub.f32 %v223, %v812
    %v814 = vand.u32 %v813, 4294901760
    %v815 = vsub.f32 %v813, %v814
    %v816 = vand.u32 %v815, 4294901760
    %817 = vmatmul.mubr.f32.gmra.mrb[0].mxu0 %v816
    %v818 = vpop.f32.mrb[0].mxu0
    %v819 = vadd.f32 0.0, %v818
    %v820 = vpop.f32.mrb[0].mxu0
    %821 = vmatprep.mubr.f32.mxu0 0.0
    %v822 = vand.u32 %v226, 4294901760
    %v823 = vsub.f32 %v226, %v822
    %v824 = vand.u32 %v823, 4294901760
    %v825 = vsub.f32 %v823, %v824
    %v826 = vand.u32 %v825, 4294901760
    %827 = vmatmul.mubr.f32.gmra.mrb[0].mxu0 %v826
    %v828 = vpop.f32.mrb[0].mxu0
    %v829 = vadd.f32 0.0, %v828
    %v830 = vpop.f32.mrb[0].mxu0
    %831 = vmatprep.mubr.f32.mxu0 0.0
    %v832 = vand.u32 %v229, 4294901760
    %v833 = vsub.f32 %v229, %v832
    %v834 = vand.u32 %v833, 4294901760
    %v835 = vsub.f32 %v833, %v834
    %v836 = vand.u32 %v835, 4294901760
    %837 = vmatmul.mubr.f32.gmra.mrb[0].mxu0 %v836
    %v838 = vpop.f32.mrb[0].mxu0
    %v839 = vadd.f32 0.0, %v838
    %v840 = vpop.f32.mrb[0].mxu0
    %841 = vmatprep.mubr.f32.mxu0 0.0
    %v842 = vand.u32 %v232, 4294901760
    %v843 = vsub.f32 %v232, %v842
    %v844 = vand.u32 %v843, 4294901760
    %v845 = vsub.f32 %v843, %v844
    %v846 = vand.u32 %v845, 4294901760
    %847 = vmatmul.mubr.f32.gmra.mrb[0].mxu0 %v846
    %v848 = vpop.f32.mrb[0].mxu0
    %v849 = vadd.f32 0.0, %v848
    %v850 = vpop.f32.mrb[0].mxu0
    %851 = vmatprep.mubr.f32.mxu0 0.0
    %v852 = vand.u32 %v235, 4294901760
    %v853 = vsub.f32 %v235, %v852
    %v854 = vand.u32 %v853, 4294901760
    %v855 = vsub.f32 %v853, %v854
    %v856 = vand.u32 %v855, 4294901760
    %857 = vmatmul.mubr.f32.gmra.mrb[0].mxu0 %v856
    %v858 = vpop.f32.mrb[0].mxu0
    %v859 = vadd.f32 0.0, %v858
    %v860 = vpop.f32.mrb[0].mxu0
    %861 = vmatprep.mubr.f32.mxu0 0.0
    %v862 = vand.u32 %v238, 4294901760
    %v863 = vsub.f32 %v238, %v862
    %v864 = vand.u32 %v863, 4294901760
    %v865 = vsub.f32 %v863, %v864
    %v866 = vand.u32 %v865, 4294901760
    %867 = vmatmul.mubr.f32.gmra.mrb[0].mxu0 %v866
    %v868 = vpop.f32.mrb[0].mxu0
    %v869 = vadd.f32 0.0, %v868
    %v870 = vpop.f32.mrb[0].mxu0
    %871 = vmatprep.mubr.f32.mxu0 0.0
    %v872 = vand.u32 %v241, 4294901760
    %v873 = vsub.f32 %v241, %v872
    %v874 = vand.u32 %v873, 4294901760
    %v875 = vsub.f32 %v873, %v874
    %v876 = vand.u32 %v875, 4294901760
    %877 = vmatmul.mubr.f32.gmra.mrb[0].mxu0 %v876
    %v878 = vpop.f32.mrb[0].mxu0
    %v879 = vadd.f32 0.0, %v878
    %v880 = vpop.f32.mrb[0].mxu0
    %881 = vmatprep.mubr.f32.mxu0 0.0
    %v882 = vand.u32 %v244, 4294901760
    %v883 = vsub.f32 %v244, %v882
    %v884 = vand.u32 %v883, 4294901760
    %v885 = vsub.f32 %v883, %v884
    %v886 = vand.u32 %v885, 4294901760
    %887 = vmatmul.mubr.f32.gmra.mrb[0].mxu0 %v886
    %v888 = vpop.f32.mrb[0].mxu0
    %v889 = vadd.f32 0.0, %v888
    %v890 = vpop.f32.mrb[0].mxu0
    %891 = vmatprep.mubr.f32.mxu0 0.0
    %v892 = vand.u32 %v247, 4294901760
    %v893 = vsub.f32 %v247, %v892
    %v894 = vand.u32 %v893, 4294901760
    %v895 = vsub.f32 %v893, %v894
    %v896 = vand.u32 %v895, 4294901760
    %897 = vmatmul.mubr.f32.gmra.mrb[0].mxu0 %v896
    %v898 = vpop.f32.mrb[0].mxu0
    %v899 = vadd.f32 0.0, %v898
    %v900 = vpop.f32.mrb[0].mxu0
    %901 = vmatprep.mubr.f32.mxu0 0.0
    %v902 = vand.u32 %v250, 4294901760
    %v903 = vsub.f32 %v250, %v902
    %v904 = vand.u32 %v903, 4294901760
    %v905 = vsub.f32 %v903, %v904
    %v906 = vand.u32 %v905, 4294901760
    %907 = vmatmul.mubr.f32.gmra.mrb[0].mxu0 %v906
    %v908 = vpop.f32.mrb[0].mxu0
    %v909 = vadd.f32 0.0, %v908
    %v910 = vpop.f32.mrb[0].mxu0
    %911 = vmatprep.mubr.f32.mxu0 0.0
    %v912 = vand.u32 %v253, 4294901760
    %v913 = vsub.f32 %v253, %v912
    %v914 = vand.u32 %v913, 4294901760
    %v915 = vsub.f32 %v913, %v914
    %v916 = vand.u32 %v915, 4294901760
    %917 = vmatmul.mubr.f32.gmra.mrb[0].mxu0 %v916
    %v918 = vpop.f32.mrb[0].mxu0
    %v919 = vadd.f32 0.0, %v918
    %v920 = vpop.f32.mrb[0].mxu0
    %921 = vmatprep.mubr.f32.mxu0 0.0
    %v922 = vand.u32 %v256, 4294901760
    %v923 = vsub.f32 %v256, %v922
    %v924 = vand.u32 %v923, 4294901760
    %v925 = vsub.f32 %v923, %v924
    %v926 = vand.u32 %v925, 4294901760
    %927 = vmatmul.mubr.f32.gmra.mrb[0].mxu0 %v926
    %v928 = vpop.f32.mrb[0].mxu0
    %v929 = vadd.f32 0.0, %v928
    %v930 = vpop.f32.mrb[0].mxu0
    %931 = vmatprep.mubr.f32.mxu0 0.0
    %v932 = vand.u32 %v259, 4294901760
    %v933 = vsub.f32 %v259, %v932
    %v934 = vand.u32 %v933, 4294901760
    %v935 = vsub.f32 %v933, %v934
    %v936 = vand.u32 %v935, 4294901760
    %937 = vmatmul.mubr.f32.gmra.mrb[0].mxu0 %v936
    %v938 = vpop.f32.mrb[0].mxu0
    %v939 = vadd.f32 0.0, %v938
    %v940 = vpop.f32.mrb[0].mxu0
    %941 = vmatprep.mubr.f32.mxu0 0.0
    %v942 = vand.u32 %v262, 4294901760
    %v943 = vsub.f32 %v262, %v942
    %v944 = vand.u32 %v943, 4294901760
    %v945 = vsub.f32 %v943, %v944
    %v946 = vand.u32 %v945, 4294901760
    %947 = vmatmul.mubr.f32.gmra.mrb[0].mxu0 %v946
    %v948 = vpop.f32.mrb[0].mxu0
    %v949 = vadd.f32 0.0, %v948
    %v950 = vpop.f32.mrb[0].mxu0
    %951 = vmatprep.mubr.f32.mxu0 0.0
    %v952 = vand.u32 %v265, 4294901760
    %v953 = vsub.f32 %v265, %v952
    %v954 = vand.u32 %v953, 4294901760
    %v955 = vsub.f32 %v953, %v954
    %v956 = vand.u32 %v955, 4294901760
    %957 = vmatmul.mubr.f32.gmra.mrb[0].mxu0 %v956
    %v958 = vpop.f32.mrb[0].mxu0
    %v959 = vadd.f32 0.0, %v958
    %v960 = vpop.f32.mrb[0].mxu0
    %961 = vmatprep.mubr.f32.mxu0 0.0
    %v962 = vand.u32 %v268, 4294901760
    %v963 = vsub.f32 %v268, %v962
    %v964 = vand.u32 %v963, 4294901760
    %v965 = vsub.f32 %v963, %v964
    %v966 = vand.u32 %v965, 4294901760
    %967 = vmatmul.mubr.f32.gmra.mrb[0].mxu0 %v966
    %v968 = vpop.f32.mrb[0].mxu0
    %v969 = vadd.f32 0.0, %v968
    %v970 = vpop.f32.mrb[0].mxu0
    %971 = vmatprep.mubr.f32.mxu0 0.0
    %v972 = vand.u32 %v271, 4294901760
    %v973 = vsub.f32 %v271, %v972
    %v974 = vand.u32 %v973, 4294901760
    %v975 = vsub.f32 %v973, %v974
    %v976 = vand.u32 %v975, 4294901760
    %977 = vmatmul.mubr.f32.gmra.mrb[0].mxu0 %v976
    %v978 = vpop.f32.mrb[0].mxu0
    %v979 = vadd.f32 0.0, %v978
    %v980 = vpop.f32.mrb[0].mxu0
    %981 = vdwg.mxu0
    %982 = vmatprep.subr.mxu0 0.0
    %v983 = vand.u32 %v76, 4294901760
    %v984 = vsub.f32 %v76, %v983
    %v985 = vand.u32 %v984, 4294901760
    %v986 = vsub.f32 %v984, %v985
    %v987 = vand.u32 %v986, 4294901760
    %988 = vmatpush1.msra.mxu0 %v987
    %989 = vmatprep.subr.mxu0 0.0
    %v990 = vand.u32 %v77, 4294901760
    %v991 = vsub.f32 %v77, %v990
    %v992 = vand.u32 %v991, 4294901760
    %v993 = vsub.f32 %v991, %v992
    %v994 = vand.u32 %v993, 4294901760
    %995 = vmatpush1.msra.mxu0 %v994
    %996 = vmatprep.subr.mxu0 0.0
    %v997 = vand.u32 %v78, 4294901760
    %v998 = vsub.f32 %v78, %v997
    %v999 = vand.u32 %v998, 4294901760
    %v1000 = vsub.f32 %v998, %v999
    %v1001 = vand.u32 %v1000, 4294901760
    %1002 = vmatpush1.msra.mxu0 %v1001
    %1003 = vmatprep.subr.mxu0 0.0
    %v1004 = vand.u32 %v79, 4294901760
    %v1005 = vsub.f32 %v79, %v1004
    %v1006 = vand.u32 %v1005, 4294901760
    %v1007 = vsub.f32 %v1005, %v1006
    %v1008 = vand.u32 %v1007, 4294901760
    %1009 = vmatpush1.msra.mxu0 %v1008
    %1010 = vmatprep.subr.mxu0 0.0
    %1011 = vmatpush1.msra.mxu0 0.0
    %1012 = vmatprep.subr.mxu0 0.0
    %1013 = vmatpush1.msra.mxu0 0.0
    %1014 = vmatprep.subr.mxu0 0.0
    %1015 = vmatpush1.msra.mxu0 0.0
    %1016 = vmatprep.subr.mxu0 0.0
    %1017 = vmatpush1.msra.mxu0 0.0
    %1018 = vmatprep.subr.mxu0 0.0
    %1019 = vmatpush1.msra.mxu0 0.0
    %1020 = vmatprep.subr.mxu0 0.0
    %1021 = vmatpush1.msra.mxu0 0.0
    %1022 = vmatprep.subr.mxu0 0.0
    %1023 = vmatpush1.msra.mxu0 0.0
    %1024 = vmatprep.subr.mxu0 0.0
    %1025 = vmatpush1.msra.mxu0 0.0
    %1026 = vmatprep.subr.mxu0 0.0
    %1027 = vmatpush1.msra.mxu0 0.0
    %1028 = vmatprep.subr.mxu0 0.0
    %1029 = vmatpush1.msra.mxu0 0.0
    %1030 = vmatprep.subr.mxu0 0.0
    %1031 = vmatpush1.msra.mxu0 0.0
    %1032 = vmatprep.subr.mxu0 0.0
    %1033 = vmatpush1.msra.mxu0 0.0
    %1034 = vmatprep.subr.mxu0 0.0
    %1035 = vmatpush1.msra.mxu0 0.0
    %1036 = vmatprep.subr.mxu0 0.0
    %1037 = vmatpush1.msra.mxu0 0.0
    %1038 = vmatprep.subr.mxu0 0.0
    %1039 = vmatpush1.msra.mxu0 0.0
    %1040 = vmatprep.subr.mxu0 0.0
    %1041 = vmatpush1.msra.mxu0 0.0
    %1042 = vmatprep.subr.mxu0 0.0
    %1043 = vmatpush1.msra.mxu0 0.0
    %1044 = vmatprep.subr.mxu0 0.0
    %1045 = vmatpush1.msra.mxu0 0.0
    %1046 = vmatprep.subr.mxu0 0.0
    %1047 = vmatpush1.msra.mxu0 0.0
    %1048 = vmatprep.subr.mxu0 0.0
    %1049 = vmatpush1.msra.mxu0 0.0
    %1050 = vmatprep.subr.mxu0 0.0
    %1051 = vmatpush1.msra.mxu0 0.0
    %1052 = vmatprep.subr.mxu0 0.0
    %1053 = vmatpush1.msra.mxu0 0.0
    %1054 = vmatprep.subr.mxu0 0.0
    %1055 = vmatpush1.msra.mxu0 0.0
    %1056 = vmatprep.subr.mxu0 0.0
    %1057 = vmatpush1.msra.mxu0 0.0
    %1058 = vmatprep.subr.mxu0 0.0
    %1059 = vmatpush1.msra.mxu0 0.0
    %1060 = vmatprep.subr.mxu0 0.0
    %1061 = vmatpush1.msra.mxu0 0.0
    %1062 = vmatprep.subr.mxu0 0.0
    %1063 = vmatpush1.msra.mxu0 0.0
    %1064 = vmatprep.subr.mxu0 0.0
    %1065 = vmatpush1.msra.mxu0 0.0
    %1066 = vmatprep.mubr.f32.mxu0 0.0
    %v1067 = vand.u32 %v82, 4294901760
    %1068 = vmatmul.mubr.f32.gmra.mrb[0].mxu0 %v1067
    %v1069 = vpop.f32.mrb[0].mxu0
    %v1070 = vadd.f32 %v349, %v1069
    %v1071 = vpop.f32.mrb[0].mxu0
    %1072 = vmatprep.mubr.f32.mxu0 0.0
    %v1073 = vand.u32 %v85, 4294901760
    %1074 = vmatmul.mubr.f32.gmra.mrb[0].mxu0 %v1073
    %v1075 = vpop.f32.mrb[0].mxu0
    %v1076 = vadd.f32 %v359, %v1075
    %v1077 = vpop.f32.mrb[0].mxu0
    %1078 = vmatprep.mubr.f32.mxu0 0.0
    %v1079 = vand.u32 %v88, 4294901760
    %1080 = vmatmul.mubr.f32.gmra.mrb[0].mxu0 %v1079
    %v1081 = vpop.f32.mrb[0].mxu0
    %v1082 = vadd.f32 %v369, %v1081
    %v1083 = vpop.f32.mrb[0].mxu0
    %1084 = vmatprep.mubr.f32.mxu0 0.0
    %v1085 = vand.u32 %v91, 4294901760
    %1086 = vmatmul.mubr.f32.gmra.mrb[0].mxu0 %v1085
    %v1087 = vpop.f32.mrb[0].mxu0
    %v1088 = vadd.f32 %v379, %v1087
    %v1089 = vpop.f32.mrb[0].mxu0
    %1090 = vmatprep.mubr.f32.mxu0 0.0
    %v1091 = vand.u32 %v94, 4294901760
    %1092 = vmatmul.mubr.f32.gmra.mrb[0].mxu0 %v1091
    %v1093 = vpop.f32.mrb[0].mxu0
    %v1094 = vadd.f32 %v389, %v1093
    %v1095 = vpop.f32.mrb[0].mxu0
    %1096 = vmatprep.mubr.f32.mxu0 0.0
    %v1097 = vand.u32 %v97, 4294901760
    %1098 = vmatmul.mubr.f32.gmra.mrb[0].mxu0 %v1097
    %v1099 = vpop.f32.mrb[0].mxu0
    %v1100 = vadd.f32 %v399, %v1099
    %v1101 = vpop.f32.mrb[0].mxu0
    %1102 = vmatprep.mubr.f32.mxu0 0.0
    %v1103 = vand.u32 %v100, 4294901760
    %1104 = vmatmul.mubr.f32.gmra.mrb[0].mxu0 %v1103
    %v1105 = vpop.f32.mrb[0].mxu0
    %v1106 = vadd.f32 %v409, %v1105
    %v1107 = vpop.f32.mrb[0].mxu0
    %1108 = vmatprep.mubr.f32.mxu0 0.0
    %v1109 = vand.u32 %v103, 4294901760
    %1110 = vmatmul.mubr.f32.gmra.mrb[0].mxu0 %v1109
    %v1111 = vpop.f32.mrb[0].mxu0
    %v1112 = vadd.f32 %v419, %v1111
    %v1113 = vpop.f32.mrb[0].mxu0
    %1114 = vmatprep.mubr.f32.mxu0 0.0
    %v1115 = vand.u32 %v106, 4294901760
    %1116 = vmatmul.mubr.f32.gmra.mrb[0].mxu0 %v1115
    %v1117 = vpop.f32.mrb[0].mxu0
    %v1118 = vadd.f32 %v429, %v1117
    %v1119 = vpop.f32.mrb[0].mxu0
    %1120 = vmatprep.mubr.f32.mxu0 0.0
    %v1121 = vand.u32 %v109, 4294901760
    %1122 = vmatmul.mubr.f32.gmra.mrb[0].mxu0 %v1121
    %v1123 = vpop.f32.mrb[0].mxu0
    %v1124 = vadd.f32 %v439, %v1123
    %v1125 = vpop.f32.mrb[0].mxu0
    %1126 = vmatprep.mubr.f32.mxu0 0.0
    %v1127 = vand.u32 %v112, 4294901760
    %1128 = vmatmul.mubr.f32.gmra.mrb[0].mxu0 %v1127
    %v1129 = vpop.f32.mrb[0].mxu0
    %v1130 = vadd.f32 %v449, %v1129
    %v1131 = vpop.f32.mrb[0].mxu0
    %1132 = vmatprep.mubr.f32.mxu0 0.0
    %v1133 = vand.u32 %v115, 4294901760
    %1134 = vmatmul.mubr.f32.gmra.mrb[0].mxu0 %v1133
    %v1135 = vpop.f32.mrb[0].mxu0
    %v1136 = vadd.f32 %v459, %v1135
    %v1137 = vpop.f32.mrb[0].mxu0
    %1138 = vmatprep.mubr.f32.mxu0 0.0
    %v1139 = vand.u32 %v118, 4294901760
    %1140 = vmatmul.mubr.f32.gmra.mrb[0].mxu0 %v1139
    %v1141 = vpop.f32.mrb[0].mxu0
    %v1142 = vadd.f32 %v469, %v1141
    %v1143 = vpop.f32.mrb[0].mxu0
    %1144 = vmatprep.mubr.f32.mxu0 0.0
    %v1145 = vand.u32 %v121, 4294901760
    %1146 = vmatmul.mubr.f32.gmra.mrb[0].mxu0 %v1145
    %v1147 = vpop.f32.mrb[0].mxu0
    %v1148 = vadd.f32 %v479, %v1147
    %v1149 = vpop.f32.mrb[0].mxu0
    %1150 = vmatprep.mubr.f32.mxu0 0.0
    %v1151 = vand.u32 %v124, 4294901760
    %1152 = vmatmul.mubr.f32.gmra.mrb[0].mxu0 %v1151
    %v1153 = vpop.f32.mrb[0].mxu0
    %v1154 = vadd.f32 %v489, %v1153
    %v1155 = vpop.f32.mrb[0].mxu0
    %1156 = vmatprep.mubr.f32.mxu0 0.0
    %v1157 = vand.u32 %v127, 4294901760
    %1158 = vmatmul.mubr.f32.gmra.mrb[0].mxu0 %v1157
    %v1159 = vpop.f32.mrb[0].mxu0
    %v1160 = vadd.f32 %v499, %v1159
    %v1161 = vpop.f32.mrb[0].mxu0
    %1162 = vmatprep.mubr.f32.mxu0 0.0
    %v1163 = vand.u32 %v130, 4294901760
    %1164 = vmatmul.mubr.f32.gmra.mrb[0].mxu0 %v1163
    %v1165 = vpop.f32.mrb[0].mxu0
    %v1166 = vadd.f32 %v509, %v1165
    %v1167 = vpop.f32.mrb[0].mxu0
    %1168 = vmatprep.mubr.f32.mxu0 0.0
    %v1169 = vand.u32 %v133, 4294901760
    %1170 = vmatmul.mubr.f32.gmra.mrb[0].mxu0 %v1169
    %v1171 = vpop.f32.mrb[0].mxu0
    %v1172 = vadd.f32 %v519, %v1171
    %v1173 = vpop.f32.mrb[0].mxu0
    %1174 = vmatprep.mubr.f32.mxu0 0.0
    %v1175 = vand.u32 %v136, 4294901760
    %1176 = vmatmul.mubr.f32.gmra.mrb[0].mxu0 %v1175
    %v1177 = vpop.f32.mrb[0].mxu0
    %v1178 = vadd.f32 %v529, %v1177
    %v1179 = vpop.f32.mrb[0].mxu0
    %1180 = vmatprep.mubr.f32.mxu0 0.0
    %v1181 = vand.u32 %v139, 4294901760
    %1182 = vmatmul.mubr.f32.gmra.mrb[0].mxu0 %v1181
    %v1183 = vpop.f32.mrb[0].mxu0
    %v1184 = vadd.f32 %v539, %v1183
    %v1185 = vpop.f32.mrb[0].mxu0
    %1186 = vmatprep.mubr.f32.mxu0 0.0
    %v1187 = vand.u32 %v142, 4294901760
    %1188 = vmatmul.mubr.f32.gmra.mrb[0].mxu0 %v1187
    %v1189 = vpop.f32.mrb[0].mxu0
    %v1190 = vadd.f32 %v549, %v1189
    %v1191 = vpop.f32.mrb[0].mxu0
    %1192 = vmatprep.mubr.f32.mxu0 0.0
    %v1193 = vand.u32 %v145, 4294901760
    %1194 = vmatmul.mubr.f32.gmra.mrb[0].mxu0 %v1193
    %v1195 = vpop.f32.mrb[0].mxu0
    %v1196 = vadd.f32 %v559, %v1195
    %v1197 = vpop.f32.mrb[0].mxu0
    %1198 = vmatprep.mubr.f32.mxu0 0.0
    %v1199 = vand.u32 %v148, 4294901760
    %1200 = vmatmul.mubr.f32.gmra.mrb[0].mxu0 %v1199
    %v1201 = vpop.f32.mrb[0].mxu0
    %v1202 = vadd.f32 %v569, %v1201
    %v1203 = vpop.f32.mrb[0].mxu0
    %1204 = vmatprep.mubr.f32.mxu0 0.0
    %v1205 = vand.u32 %v151, 4294901760
    %1206 = vmatmul.mubr.f32.gmra.mrb[0].mxu0 %v1205
    %v1207 = vpop.f32.mrb[0].mxu0
    %v1208 = vadd.f32 %v579, %v1207
    %v1209 = vpop.f32.mrb[0].mxu0
    %1210 = vmatprep.mubr.f32.mxu0 0.0
    %v1211 = vand.u32 %v154, 4294901760
    %1212 = vmatmul.mubr.f32.gmra.mrb[0].mxu0 %v1211
    %v1213 = vpop.f32.mrb[0].mxu0
    %v1214 = vadd.f32 %v589, %v1213
    %v1215 = vpop.f32.mrb[0].mxu0
    %1216 = vmatprep.mubr.f32.mxu0 0.0
    %v1217 = vand.u32 %v157, 4294901760
    %1218 = vmatmul.mubr.f32.gmra.mrb[0].mxu0 %v1217
    %v1219 = vpop.f32.mrb[0].mxu0
    %v1220 = vadd.f32 %v599, %v1219
    %v1221 = vpop.f32.mrb[0].mxu0
    %1222 = vmatprep.mubr.f32.mxu0 0.0
    %v1223 = vand.u32 %v160, 4294901760
    %1224 = vmatmul.mubr.f32.gmra.mrb[0].mxu0 %v1223
    %v1225 = vpop.f32.mrb[0].mxu0
    %v1226 = vadd.f32 %v609, %v1225
    %v1227 = vpop.f32.mrb[0].mxu0
    %1228 = vmatprep.mubr.f32.mxu0 0.0
    %v1229 = vand.u32 %v163, 4294901760
    %1230 = vmatmul.mubr.f32.gmra.mrb[0].mxu0 %v1229
    %v1231 = vpop.f32.mrb[0].mxu0
    %v1232 = vadd.f32 %v619, %v1231
    %v1233 = vpop.f32.mrb[0].mxu0
    %1234 = vmatprep.mubr.f32.mxu0 0.0
    %v1235 = vand.u32 %v166, 4294901760
    %1236 = vmatmul.mubr.f32.gmra.mrb[0].mxu0 %v1235
    %v1237 = vpop.f32.mrb[0].mxu0
    %v1238 = vadd.f32 %v629, %v1237
    %v1239 = vpop.f32.mrb[0].mxu0
    %1240 = vmatprep.mubr.f32.mxu0 0.0
    %v1241 = vand.u32 %v169, 4294901760
    %1242 = vmatmul.mubr.f32.gmra.mrb[0].mxu0 %v1241
    %v1243 = vpop.f32.mrb[0].mxu0
    %v1244 = vadd.f32 %v639, %v1243
    %v1245 = vpop.f32.mrb[0].mxu0
    %1246 = vmatprep.mubr.f32.mxu0 0.0
    %v1247 = vand.u32 %v172, 4294901760
    %1248 = vmatmul.mubr.f32.gmra.mrb[0].mxu0 %v1247
    %v1249 = vpop.f32.mrb[0].mxu0
    %v1250 = vadd.f32 %v649, %v1249
    %v1251 = vpop.f32.mrb[0].mxu0
    %1252 = vmatprep.mubr.f32.mxu0 0.0
    %v1253 = vand.u32 %v175, 4294901760
    %1254 = vmatmul.mubr.f32.gmra.mrb[0].mxu0 %v1253
    %v1255 = vpop.f32.mrb[0].mxu0
    %v1256 = vadd.f32 %v659, %v1255
    %v1257 = vpop.f32.mrb[0].mxu0
    %1258 = vmatprep.mubr.f32.mxu0 0.0
    %v1259 = vand.u32 %v178, 4294901760
    %1260 = vmatmul.mubr.f32.gmra.mrb[0].mxu0 %v1259
    %v1261 = vpop.f32.mrb[0].mxu0
    %v1262 = vadd.f32 %v669, %v1261
    %v1263 = vpop.f32.mrb[0].mxu0
    %1264 = vmatprep.mubr.f32.mxu0 0.0
    %v1265 = vand.u32 %v181, 4294901760
    %1266 = vmatmul.mubr.f32.gmra.mrb[0].mxu0 %v1265
    %v1267 = vpop.f32.mrb[0].mxu0
    %v1268 = vadd.f32 %v679, %v1267
    %v1269 = vpop.f32.mrb[0].mxu0
    %1270 = vmatprep.mubr.f32.mxu0 0.0
    %v1271 = vand.u32 %v184, 4294901760
    %1272 = vmatmul.mubr.f32.gmra.mrb[0].mxu0 %v1271
    %v1273 = vpop.f32.mrb[0].mxu0
    %v1274 = vadd.f32 %v689, %v1273
    %v1275 = vpop.f32.mrb[0].mxu0
    %1276 = vmatprep.mubr.f32.mxu0 0.0
    %v1277 = vand.u32 %v187, 4294901760
    %1278 = vmatmul.mubr.f32.gmra.mrb[0].mxu0 %v1277
    %v1279 = vpop.f32.mrb[0].mxu0
    %v1280 = vadd.f32 %v699, %v1279
    %v1281 = vpop.f32.mrb[0].mxu0
    %1282 = vmatprep.mubr.f32.mxu0 0.0
    %v1283 = vand.u32 %v190, 4294901760
    %1284 = vmatmul.mubr.f32.gmra.mrb[0].mxu0 %v1283
    %v1285 = vpop.f32.mrb[0].mxu0
    %v1286 = vadd.f32 %v709, %v1285
    %v1287 = vpop.f32.mrb[0].mxu0
    %1288 = vmatprep.mubr.f32.mxu0 0.0
    %v1289 = vand.u32 %v193, 4294901760
    %1290 = vmatmul.mubr.f32.gmra.mrb[0].mxu0 %v1289
    %v1291 = vpop.f32.mrb[0].mxu0
    %v1292 = vadd.f32 %v719, %v1291
    %v1293 = vpop.f32.mrb[0].mxu0
    %1294 = vmatprep.mubr.f32.mxu0 0.0
    %v1295 = vand.u32 %v196, 4294901760
    %1296 = vmatmul.mubr.f32.gmra.mrb[0].mxu0 %v1295
    %v1297 = vpop.f32.mrb[0].mxu0
    %v1298 = vadd.f32 %v729, %v1297
    %v1299 = vpop.f32.mrb[0].mxu0
    %1300 = vmatprep.mubr.f32.mxu0 0.0
    %v1301 = vand.u32 %v199, 4294901760
    %1302 = vmatmul.mubr.f32.gmra.mrb[0].mxu0 %v1301
    %v1303 = vpop.f32.mrb[0].mxu0
    %v1304 = vadd.f32 %v739, %v1303
    %v1305 = vpop.f32.mrb[0].mxu0
    %1306 = vmatprep.mubr.f32.mxu0 0.0
    %v1307 = vand.u32 %v202, 4294901760
    %1308 = vmatmul.mubr.f32.gmra.mrb[0].mxu0 %v1307
    %v1309 = vpop.f32.mrb[0].mxu0
    %v1310 = vadd.f32 %v749, %v1309
    %v1311 = vpop.f32.mrb[0].mxu0
    %1312 = vmatprep.mubr.f32.mxu0 0.0
    %v1313 = vand.u32 %v205, 4294901760
    %1314 = vmatmul.mubr.f32.gmra.mrb[0].mxu0 %v1313
    %v1315 = vpop.f32.mrb[0].mxu0
    %v1316 = vadd.f32 %v759, %v1315
    %v1317 = vpop.f32.mrb[0].mxu0
    %1318 = vmatprep.mubr.f32.mxu0 0.0
    %v1319 = vand.u32 %v208, 4294901760
    %1320 = vmatmul.mubr.f32.gmra.mrb[0].mxu0 %v1319
    %v1321 = vpop.f32.mrb[0].mxu0
    %v1322 = vadd.f32 %v769, %v1321
    %v1323 = vpop.f32.mrb[0].mxu0
    %1324 = vmatprep.mubr.f32.mxu0 0.0
    %v1325 = vand.u32 %v211, 4294901760
    %1326 = vmatmul.mubr.f32.gmra.mrb[0].mxu0 %v1325
    %v1327 = vpop.f32.mrb[0].mxu0
    %v1328 = vadd.f32 %v779, %v1327
    %v1329 = vpop.f32.mrb[0].mxu0
    %1330 = vmatprep.mubr.f32.mxu0 0.0
    %v1331 = vand.u32 %v214, 4294901760
    %1332 = vmatmul.mubr.f32.gmra.mrb[0].mxu0 %v1331
    %v1333 = vpop.f32.mrb[0].mxu0
    %v1334 = vadd.f32 %v789, %v1333
    %v1335 = vpop.f32.mrb[0].mxu0
    %1336 = vmatprep.mubr.f32.mxu0 0.0
    %v1337 = vand.u32 %v217, 4294901760
    %1338 = vmatmul.mubr.f32.gmra.mrb[0].mxu0 %v1337
    %v1339 = vpop.f32.mrb[0].mxu0
    %v1340 = vadd.f32 %v799, %v1339
    %v1341 = vpop.f32.mrb[0].mxu0
    %1342 = vmatprep.mubr.f32.mxu0 0.0
    %v1343 = vand.u32 %v220, 4294901760
    %1344 = vmatmul.mubr.f32.gmra.mrb[0].mxu0 %v1343
    %v1345 = vpop.f32.mrb[0].mxu0
    %v1346 = vadd.f32 %v809, %v1345
    %v1347 = vpop.f32.mrb[0].mxu0
    %1348 = vmatprep.mubr.f32.mxu0 0.0
    %v1349 = vand.u32 %v223, 4294901760
    %1350 = vmatmul.mubr.f32.gmra.mrb[0].mxu0 %v1349
    %v1351 = vpop.f32.mrb[0].mxu0
    %v1352 = vadd.f32 %v819, %v1351
    %v1353 = vpop.f32.mrb[0].mxu0
    %1354 = vmatprep.mubr.f32.mxu0 0.0
    %v1355 = vand.u32 %v226, 4294901760
    %1356 = vmatmul.mubr.f32.gmra.mrb[0].mxu0 %v1355
    %v1357 = vpop.f32.mrb[0].mxu0
    %v1358 = vadd.f32 %v829, %v1357
    %v1359 = vpop.f32.mrb[0].mxu0
    %1360 = vmatprep.mubr.f32.mxu0 0.0
    %v1361 = vand.u32 %v229, 4294901760
    %1362 = vmatmul.mubr.f32.gmra.mrb[0].mxu0 %v1361
    %v1363 = vpop.f32.mrb[0].mxu0
    %v1364 = vadd.f32 %v839, %v1363
    %v1365 = vpop.f32.mrb[0].mxu0
    %1366 = vmatprep.mubr.f32.mxu0 0.0
    %v1367 = vand.u32 %v232, 4294901760
    %1368 = vmatmul.mubr.f32.gmra.mrb[0].mxu0 %v1367
    %v1369 = vpop.f32.mrb[0].mxu0
    %v1370 = vadd.f32 %v849, %v1369
    %v1371 = vpop.f32.mrb[0].mxu0
    %1372 = vmatprep.mubr.f32.mxu0 0.0
    %v1373 = vand.u32 %v235, 4294901760
    %1374 = vmatmul.mubr.f32.gmra.mrb[0].mxu0 %v1373
    %v1375 = vpop.f32.mrb[0].mxu0
    %v1376 = vadd.f32 %v859, %v1375
    %v1377 = vpop.f32.mrb[0].mxu0
    %1378 = vmatprep.mubr.f32.mxu0 0.0
    %v1379 = vand.u32 %v238, 4294901760
    %1380 = vmatmul.mubr.f32.gmra.mrb[0].mxu0 %v1379
    %v1381 = vpop.f32.mrb[0].mxu0
    %v1382 = vadd.f32 %v869, %v1381
    %v1383 = vpop.f32.mrb[0].mxu0
    %1384 = vmatprep.mubr.f32.mxu0 0.0
    %v1385 = vand.u32 %v241, 4294901760
    %1386 = vmatmul.mubr.f32.gmra.mrb[0].mxu0 %v1385
    %v1387 = vpop.f32.mrb[0].mxu0
    %v1388 = vadd.f32 %v879, %v1387
    %v1389 = vpop.f32.mrb[0].mxu0
    %1390 = vmatprep.mubr.f32.mxu0 0.0
    %v1391 = vand.u32 %v244, 4294901760
    %1392 = vmatmul.mubr.f32.gmra.mrb[0].mxu0 %v1391
    %v1393 = vpop.f32.mrb[0].mxu0
    %v1394 = vadd.f32 %v889, %v1393
    %v1395 = vpop.f32.mrb[0].mxu0
    %1396 = vmatprep.mubr.f32.mxu0 0.0
    %v1397 = vand.u32 %v247, 4294901760
    %1398 = vmatmul.mubr.f32.gmra.mrb[0].mxu0 %v1397
    %v1399 = vpop.f32.mrb[0].mxu0
    %v1400 = vadd.f32 %v899, %v1399
    %v1401 = vpop.f32.mrb[0].mxu0
    %1402 = vmatprep.mubr.f32.mxu0 0.0
    %v1403 = vand.u32 %v250, 4294901760
    %1404 = vmatmul.mubr.f32.gmra.mrb[0].mxu0 %v1403
    %v1405 = vpop.f32.mrb[0].mxu0
    %v1406 = vadd.f32 %v909, %v1405
    %v1407 = vpop.f32.mrb[0].mxu0
    %1408 = vmatprep.mubr.f32.mxu0 0.0
    %v1409 = vand.u32 %v253, 4294901760
    %1410 = vmatmul.mubr.f32.gmra.mrb[0].mxu0 %v1409
    %v1411 = vpop.f32.mrb[0].mxu0
    %v1412 = vadd.f32 %v919, %v1411
    %v1413 = vpop.f32.mrb[0].mxu0
    %1414 = vmatprep.mubr.f32.mxu0 0.0
    %v1415 = vand.u32 %v256, 4294901760
    %1416 = vmatmul.mubr.f32.gmra.mrb[0].mxu0 %v1415
    %v1417 = vpop.f32.mrb[0].mxu0
    %v1418 = vadd.f32 %v929, %v1417
    %v1419 = vpop.f32.mrb[0].mxu0
    %1420 = vmatprep.mubr.f32.mxu0 0.0
    %v1421 = vand.u32 %v259, 4294901760
    %1422 = vmatmul.mubr.f32.gmra.mrb[0].mxu0 %v1421
    %v1423 = vpop.f32.mrb[0].mxu0
    %v1424 = vadd.f32 %v939, %v1423
    %v1425 = vpop.f32.mrb[0].mxu0
    %1426 = vmatprep.mubr.f32.mxu0 0.0
    %v1427 = vand.u32 %v262, 4294901760
    %1428 = vmatmul.mubr.f32.gmra.mrb[0].mxu0 %v1427
    %v1429 = vpop.f32.mrb[0].mxu0
    %v1430 = vadd.f32 %v949, %v1429
    %v1431 = vpop.f32.mrb[0].mxu0
    %1432 = vmatprep.mubr.f32.mxu0 0.0
    %v1433 = vand.u32 %v265, 4294901760
    %1434 = vmatmul.mubr.f32.gmra.mrb[0].mxu0 %v1433
    %v1435 = vpop.f32.mrb[0].mxu0
    %v1436 = vadd.f32 %v959, %v1435
    %v1437 = vpop.f32.mrb[0].mxu0
    %1438 = vmatprep.mubr.f32.mxu0 0.0
    %v1439 = vand.u32 %v268, 4294901760
    %1440 = vmatmul.mubr.f32.gmra.mrb[0].mxu0 %v1439
    %v1441 = vpop.f32.mrb[0].mxu0
    %v1442 = vadd.f32 %v969, %v1441
    %v1443 = vpop.f32.mrb[0].mxu0
    %1444 = vmatprep.mubr.f32.mxu0 0.0
    %v1445 = vand.u32 %v271, 4294901760
    %1446 = vmatmul.mubr.f32.gmra.mrb[0].mxu0 %v1445
    %v1447 = vpop.f32.mrb[0].mxu0
    %v1448 = vadd.f32 %v979, %v1447
    %v1449 = vpop.f32.mrb[0].mxu0
    %1450 = vdwg.mxu0
    %1451 = vmatprep.subr.mxu0 0.0
    %v1452 = vand.u32 %v76, 4294901760
    %v1453 = vsub.f32 %v76, %v1452
    %1454 = vmatpush1.msra.mxu0 %v1453
    %1455 = vmatprep.subr.mxu0 0.0
    %v1456 = vand.u32 %v77, 4294901760
    %v1457 = vsub.f32 %v77, %v1456
    %1458 = vmatpush1.msra.mxu0 %v1457
    %1459 = vmatprep.subr.mxu0 0.0
    %v1460 = vand.u32 %v78, 4294901760
    %v1461 = vsub.f32 %v78, %v1460
    %1462 = vmatpush1.msra.mxu0 %v1461
    %1463 = vmatprep.subr.mxu0 0.0
    %v1464 = vand.u32 %v79, 4294901760
    %v1465 = vsub.f32 %v79, %v1464
    %1466 = vmatpush1.msra.mxu0 %v1465
    %1467 = vmatprep.subr.mxu0 0.0
    %1468 = vmatpush1.msra.mxu0 0.0
    %1469 = vmatprep.subr.mxu0 0.0
    %1470 = vmatpush1.msra.mxu0 0.0
    %1471 = vmatprep.subr.mxu0 0.0
    %1472 = vmatpush1.msra.mxu0 0.0
    %1473 = vmatprep.subr.mxu0 0.0
    %1474 = vmatpush1.msra.mxu0 0.0
    %1475 = vmatprep.subr.mxu0 0.0
    %1476 = vmatpush1.msra.mxu0 0.0
    %1477 = vmatprep.subr.mxu0 0.0
    %1478 = vmatpush1.msra.mxu0 0.0
    %1479 = vmatprep.subr.mxu0 0.0
    %1480 = vmatpush1.msra.mxu0 0.0
    %1481 = vmatprep.subr.mxu0 0.0
    %1482 = vmatpush1.msra.mxu0 0.0
    %1483 = vmatprep.subr.mxu0 0.0
    %1484 = vmatpush1.msra.mxu0 0.0
    %1485 = vmatprep.subr.mxu0 0.0
    %1486 = vmatpush1.msra.mxu0 0.0
    %1487 = vmatprep.subr.mxu0 0.0
    %1488 = vmatpush1.msra.mxu0 0.0
    %1489 = vmatprep.subr.mxu0 0.0
    %1490 = vmatpush1.msra.mxu0 0.0
    %1491 = vmatprep.subr.mxu0 0.0
    %1492 = vmatpush1.msra.mxu0 0.0
    %1493 = vmatprep.subr.mxu0 0.0
    %1494 = vmatpush1.msra.mxu0 0.0
    %1495 = vmatprep.subr.mxu0 0.0
    %1496 = vmatpush1.msra.mxu0 0.0
    %1497 = vmatprep.subr.mxu0 0.0
    %1498 = vmatpush1.msra.mxu0 0.0
    %1499 = vmatprep.subr.mxu0 0.0
    %1500 = vmatpush1.msra.mxu0 0.0
    %1501 = vmatprep.subr.mxu0 0.0
    %1502 = vmatpush1.msra.mxu0 0.0
    %1503 = vmatprep.subr.mxu0 0.0
    %1504 = vmatpush1.msra.mxu0 0.0
    %1505 = vmatprep.subr.mxu0 0.0
    %1506 = vmatpush1.msra.mxu0 0.0
    %1507 = vmatprep.subr.mxu0 0.0
    %1508 = vmatpush1.msra.mxu0 0.0
    %1509 = vmatprep.subr.mxu0 0.0
    %1510 = vmatpush1.msra.mxu0 0.0
    %1511 = vmatprep.subr.mxu0 0.0
    %1512 = vmatpush1.msra.mxu0 0.0
    %1513 = vmatprep.subr.mxu0 0.0
    %1514 = vmatpush1.msra.mxu0 0.0
    %1515 = vmatprep.subr.mxu0 0.0
    %1516 = vmatpush1.msra.mxu0 0.0
    %1517 = vmatprep.subr.mxu0 0.0
    %1518 = vmatpush1.msra.mxu0 0.0
    %1519 = vmatprep.subr.mxu0 0.0
    %1520 = vmatpush1.msra.mxu0 0.0
    %1521 = vmatprep.subr.mxu0 0.0
    %1522 = vmatpush1.msra.mxu0 0.0
    %1523 = vmatprep.mubr.f32.mxu0 0.0
    %v1524 = vand.u32 %v82, 4294901760
    %v1525 = vsub.f32 %v82, %v1524
    %1526 = vmatmul.mubr.f32.gmra.mrb[0].mxu0 %v1525
    %v1527 = vpop.f32.mrb[0].mxu0
    %v1528 = vadd.f32 %v1070, %v1527
    %v1529 = vpop.f32.mrb[0].mxu0
    %1530 = vmatprep.mubr.f32.mxu0 0.0
    %v1531 = vand.u32 %v85, 4294901760
    %v1532 = vsub.f32 %v85, %v1531
    %1533 = vmatmul.mubr.f32.gmra.mrb[0].mxu0 %v1532
    %v1534 = vpop.f32.mrb[0].mxu0
    %v1535 = vadd.f32 %v1076, %v1534
    %v1536 = vpop.f32.mrb[0].mxu0
    %1537 = vmatprep.mubr.f32.mxu0 0.0
    %v1538 = vand.u32 %v88, 4294901760
    %v1539 = vsub.f32 %v88, %v1538
    %1540 = vmatmul.mubr.f32.gmra.mrb[0].mxu0 %v1539
    %v1541 = vpop.f32.mrb[0].mxu0
    %v1542 = vadd.f32 %v1082, %v1541
    %v1543 = vpop.f32.mrb[0].mxu0
    %1544 = vmatprep.mubr.f32.mxu0 0.0
    %v1545 = vand.u32 %v91, 4294901760
    %v1546 = vsub.f32 %v91, %v1545
    %1547 = vmatmul.mubr.f32.gmra.mrb[0].mxu0 %v1546
    %v1548 = vpop.f32.mrb[0].mxu0
    %v1549 = vadd.f32 %v1088, %v1548
    %v1550 = vpop.f32.mrb[0].mxu0
    %1551 = vmatprep.mubr.f32.mxu0 0.0
    %v1552 = vand.u32 %v94, 4294901760
    %v1553 = vsub.f32 %v94, %v1552
    %1554 = vmatmul.mubr.f32.gmra.mrb[0].mxu0 %v1553
    %v1555 = vpop.f32.mrb[0].mxu0
    %v1556 = vadd.f32 %v1094, %v1555
    %v1557 = vpop.f32.mrb[0].mxu0
    %1558 = vmatprep.mubr.f32.mxu0 0.0
    %v1559 = vand.u32 %v97, 4294901760
    %v1560 = vsub.f32 %v97, %v1559
    %1561 = vmatmul.mubr.f32.gmra.mrb[0].mxu0 %v1560
    %v1562 = vpop.f32.mrb[0].mxu0
    %v1563 = vadd.f32 %v1100, %v1562
    %v1564 = vpop.f32.mrb[0].mxu0
    %1565 = vmatprep.mubr.f32.mxu0 0.0
    %v1566 = vand.u32 %v100, 4294901760
    %v1567 = vsub.f32 %v100, %v1566
    %1568 = vmatmul.mubr.f32.gmra.mrb[0].mxu0 %v1567
    %v1569 = vpop.f32.mrb[0].mxu0
    %v1570 = vadd.f32 %v1106, %v1569
    %v1571 = vpop.f32.mrb[0].mxu0
    %1572 = vmatprep.mubr.f32.mxu0 0.0
    %v1573 = vand.u32 %v103, 4294901760
    %v1574 = vsub.f32 %v103, %v1573
    %1575 = vmatmul.mubr.f32.gmra.mrb[0].mxu0 %v1574
    %v1576 = vpop.f32.mrb[0].mxu0
    %v1577 = vadd.f32 %v1112, %v1576
    %v1578 = vpop.f32.mrb[0].mxu0
    %1579 = vmatprep.mubr.f32.mxu0 0.0
    %v1580 = vand.u32 %v106, 4294901760
    %v1581 = vsub.f32 %v106, %v1580
    %1582 = vmatmul.mubr.f32.gmra.mrb[0].mxu0 %v1581
    %v1583 = vpop.f32.mrb[0].mxu0
    %v1584 = vadd.f32 %v1118, %v1583
    %v1585 = vpop.f32.mrb[0].mxu0
    %1586 = vmatprep.mubr.f32.mxu0 0.0
    %v1587 = vand.u32 %v109, 4294901760
    %v1588 = vsub.f32 %v109, %v1587
    %1589 = vmatmul.mubr.f32.gmra.mrb[0].mxu0 %v1588
    %v1590 = vpop.f32.mrb[0].mxu0
    %v1591 = vadd.f32 %v1124, %v1590
    %v1592 = vpop.f32.mrb[0].mxu0
    %1593 = vmatprep.mubr.f32.mxu0 0.0
    %v1594 = vand.u32 %v112, 4294901760
    %v1595 = vsub.f32 %v112, %v1594
    %1596 = vmatmul.mubr.f32.gmra.mrb[0].mxu0 %v1595
    %v1597 = vpop.f32.mrb[0].mxu0
    %v1598 = vadd.f32 %v1130, %v1597
    %v1599 = vpop.f32.mrb[0].mxu0
    %1600 = vmatprep.mubr.f32.mxu0 0.0
    %v1601 = vand.u32 %v115, 4294901760
    %v1602 = vsub.f32 %v115, %v1601
    %1603 = vmatmul.mubr.f32.gmra.mrb[0].mxu0 %v1602
    %v1604 = vpop.f32.mrb[0].mxu0
    %v1605 = vadd.f32 %v1136, %v1604
    %v1606 = vpop.f32.mrb[0].mxu0
    %1607 = vmatprep.mubr.f32.mxu0 0.0
    %v1608 = vand.u32 %v118, 4294901760
    %v1609 = vsub.f32 %v118, %v1608
    %1610 = vmatmul.mubr.f32.gmra.mrb[0].mxu0 %v1609
    %v1611 = vpop.f32.mrb[0].mxu0
    %v1612 = vadd.f32 %v1142, %v1611
    %v1613 = vpop.f32.mrb[0].mxu0
    %1614 = vmatprep.mubr.f32.mxu0 0.0
    %v1615 = vand.u32 %v121, 4294901760
    %v1616 = vsub.f32 %v121, %v1615
    %1617 = vmatmul.mubr.f32.gmra.mrb[0].mxu0 %v1616
    %v1618 = vpop.f32.mrb[0].mxu0
    %v1619 = vadd.f32 %v1148, %v1618
    %v1620 = vpop.f32.mrb[0].mxu0
    %1621 = vmatprep.mubr.f32.mxu0 0.0
    %v1622 = vand.u32 %v124, 4294901760
    %v1623 = vsub.f32 %v124, %v1622
    %1624 = vmatmul.mubr.f32.gmra.mrb[0].mxu0 %v1623
    %v1625 = vpop.f32.mrb[0].mxu0
    %v1626 = vadd.f32 %v1154, %v1625
    %v1627 = vpop.f32.mrb[0].mxu0
    %1628 = vmatprep.mubr.f32.mxu0 0.0
    %v1629 = vand.u32 %v127, 4294901760
    %v1630 = vsub.f32 %v127, %v1629
    %1631 = vmatmul.mubr.f32.gmra.mrb[0].mxu0 %v1630
    %v1632 = vpop.f32.mrb[0].mxu0
    %v1633 = vadd.f32 %v1160, %v1632
    %v1634 = vpop.f32.mrb[0].mxu0
    %1635 = vmatprep.mubr.f32.mxu0 0.0
    %v1636 = vand.u32 %v130, 4294901760
    %v1637 = vsub.f32 %v130, %v1636
    %1638 = vmatmul.mubr.f32.gmra.mrb[0].mxu0 %v1637
    %v1639 = vpop.f32.mrb[0].mxu0
    %v1640 = vadd.f32 %v1166, %v1639
    %v1641 = vpop.f32.mrb[0].mxu0
    %1642 = vmatprep.mubr.f32.mxu0 0.0
    %v1643 = vand.u32 %v133, 4294901760
    %v1644 = vsub.f32 %v133, %v1643
    %1645 = vmatmul.mubr.f32.gmra.mrb[0].mxu0 %v1644
    %v1646 = vpop.f32.mrb[0].mxu0
    %v1647 = vadd.f32 %v1172, %v1646
    %v1648 = vpop.f32.mrb[0].mxu0
    %1649 = vmatprep.mubr.f32.mxu0 0.0
    %v1650 = vand.u32 %v136, 4294901760
    %v1651 = vsub.f32 %v136, %v1650
    %1652 = vmatmul.mubr.f32.gmra.mrb[0].mxu0 %v1651
    %v1653 = vpop.f32.mrb[0].mxu0
    %v1654 = vadd.f32 %v1178, %v1653
    %v1655 = vpop.f32.mrb[0].mxu0
    %1656 = vmatprep.mubr.f32.mxu0 0.0
    %v1657 = vand.u32 %v139, 4294901760
    %v1658 = vsub.f32 %v139, %v1657
    %1659 = vmatmul.mubr.f32.gmra.mrb[0].mxu0 %v1658
    %v1660 = vpop.f32.mrb[0].mxu0
    %v1661 = vadd.f32 %v1184, %v1660
    %v1662 = vpop.f32.mrb[0].mxu0
    %1663 = vmatprep.mubr.f32.mxu0 0.0
    %v1664 = vand.u32 %v142, 4294901760
    %v1665 = vsub.f32 %v142, %v1664
    %1666 = vmatmul.mubr.f32.gmra.mrb[0].mxu0 %v1665
    %v1667 = vpop.f32.mrb[0].mxu0
    %v1668 = vadd.f32 %v1190, %v1667
    %v1669 = vpop.f32.mrb[0].mxu0
    %1670 = vmatprep.mubr.f32.mxu0 0.0
    %v1671 = vand.u32 %v145, 4294901760
    %v1672 = vsub.f32 %v145, %v1671
    %1673 = vmatmul.mubr.f32.gmra.mrb[0].mxu0 %v1672
    %v1674 = vpop.f32.mrb[0].mxu0
    %v1675 = vadd.f32 %v1196, %v1674
    %v1676 = vpop.f32.mrb[0].mxu0
    %1677 = vmatprep.mubr.f32.mxu0 0.0
    %v1678 = vand.u32 %v148, 4294901760
    %v1679 = vsub.f32 %v148, %v1678
    %1680 = vmatmul.mubr.f32.gmra.mrb[0].mxu0 %v1679
    %v1681 = vpop.f32.mrb[0].mxu0
    %v1682 = vadd.f32 %v1202, %v1681
    %v1683 = vpop.f32.mrb[0].mxu0
    %1684 = vmatprep.mubr.f32.mxu0 0.0
    %v1685 = vand.u32 %v151, 4294901760
    %v1686 = vsub.f32 %v151, %v1685
    %1687 = vmatmul.mubr.f32.gmra.mrb[0].mxu0 %v1686
    %v1688 = vpop.f32.mrb[0].mxu0
    %v1689 = vadd.f32 %v1208, %v1688
    %v1690 = vpop.f32.mrb[0].mxu0
    %1691 = vmatprep.mubr.f32.mxu0 0.0
    %v1692 = vand.u32 %v154, 4294901760
    %v1693 = vsub.f32 %v154, %v1692
    %1694 = vmatmul.mubr.f32.gmra.mrb[0].mxu0 %v1693
    %v1695 = vpop.f32.mrb[0].mxu0
    %v1696 = vadd.f32 %v1214, %v1695
    %v1697 = vpop.f32.mrb[0].mxu0
    %1698 = vmatprep.mubr.f32.mxu0 0.0
    %v1699 = vand.u32 %v157, 4294901760
    %v1700 = vsub.f32 %v157, %v1699
    %1701 = vmatmul.mubr.f32.gmra.mrb[0].mxu0 %v1700
    %v1702 = vpop.f32.mrb[0].mxu0
    %v1703 = vadd.f32 %v1220, %v1702
    %v1704 = vpop.f32.mrb[0].mxu0
    %1705 = vmatprep.mubr.f32.mxu0 0.0
    %v1706 = vand.u32 %v160, 4294901760
    %v1707 = vsub.f32 %v160, %v1706
    %1708 = vmatmul.mubr.f32.gmra.mrb[0].mxu0 %v1707
    %v1709 = vpop.f32.mrb[0].mxu0
    %v1710 = vadd.f32 %v1226, %v1709
    %v1711 = vpop.f32.mrb[0].mxu0
    %1712 = vmatprep.mubr.f32.mxu0 0.0
    %v1713 = vand.u32 %v163, 4294901760
    %v1714 = vsub.f32 %v163, %v1713
    %1715 = vmatmul.mubr.f32.gmra.mrb[0].mxu0 %v1714
    %v1716 = vpop.f32.mrb[0].mxu0
    %v1717 = vadd.f32 %v1232, %v1716
    %v1718 = vpop.f32.mrb[0].mxu0
    %1719 = vmatprep.mubr.f32.mxu0 0.0
    %v1720 = vand.u32 %v166, 4294901760
    %v1721 = vsub.f32 %v166, %v1720
    %1722 = vmatmul.mubr.f32.gmra.mrb[0].mxu0 %v1721
    %v1723 = vpop.f32.mrb[0].mxu0
    %v1724 = vadd.f32 %v1238, %v1723
    %v1725 = vpop.f32.mrb[0].mxu0
    %1726 = vmatprep.mubr.f32.mxu0 0.0
    %v1727 = vand.u32 %v169, 4294901760
    %v1728 = vsub.f32 %v169, %v1727
    %1729 = vmatmul.mubr.f32.gmra.mrb[0].mxu0 %v1728
    %v1730 = vpop.f32.mrb[0].mxu0
    %v1731 = vadd.f32 %v1244, %v1730
    %v1732 = vpop.f32.mrb[0].mxu0
    %1733 = vmatprep.mubr.f32.mxu0 0.0
    %v1734 = vand.u32 %v172, 4294901760
    %v1735 = vsub.f32 %v172, %v1734
    %1736 = vmatmul.mubr.f32.gmra.mrb[0].mxu0 %v1735
    %v1737 = vpop.f32.mrb[0].mxu0
    %v1738 = vadd.f32 %v1250, %v1737
    %v1739 = vpop.f32.mrb[0].mxu0
    %1740 = vmatprep.mubr.f32.mxu0 0.0
    %v1741 = vand.u32 %v175, 4294901760
    %v1742 = vsub.f32 %v175, %v1741
    %1743 = vmatmul.mubr.f32.gmra.mrb[0].mxu0 %v1742
    %v1744 = vpop.f32.mrb[0].mxu0
    %v1745 = vadd.f32 %v1256, %v1744
    %v1746 = vpop.f32.mrb[0].mxu0
    %1747 = vmatprep.mubr.f32.mxu0 0.0
    %v1748 = vand.u32 %v178, 4294901760
    %v1749 = vsub.f32 %v178, %v1748
    %1750 = vmatmul.mubr.f32.gmra.mrb[0].mxu0 %v1749
    %v1751 = vpop.f32.mrb[0].mxu0
    %v1752 = vadd.f32 %v1262, %v1751
    %v1753 = vpop.f32.mrb[0].mxu0
    %1754 = vmatprep.mubr.f32.mxu0 0.0
    %v1755 = vand.u32 %v181, 4294901760
    %v1756 = vsub.f32 %v181, %v1755
    %1757 = vmatmul.mubr.f32.gmra.mrb[0].mxu0 %v1756
    %v1758 = vpop.f32.mrb[0].mxu0
    %v1759 = vadd.f32 %v1268, %v1758
    %v1760 = vpop.f32.mrb[0].mxu0
    %1761 = vmatprep.mubr.f32.mxu0 0.0
    %v1762 = vand.u32 %v184, 4294901760
    %v1763 = vsub.f32 %v184, %v1762
    %1764 = vmatmul.mubr.f32.gmra.mrb[0].mxu0 %v1763
    %v1765 = vpop.f32.mrb[0].mxu0
    %v1766 = vadd.f32 %v1274, %v1765
    %v1767 = vpop.f32.mrb[0].mxu0
    %1768 = vmatprep.mubr.f32.mxu0 0.0
    %v1769 = vand.u32 %v187, 4294901760
    %v1770 = vsub.f32 %v187, %v1769
    %1771 = vmatmul.mubr.f32.gmra.mrb[0].mxu0 %v1770
    %v1772 = vpop.f32.mrb[0].mxu0
    %v1773 = vadd.f32 %v1280, %v1772
    %v1774 = vpop.f32.mrb[0].mxu0
    %1775 = vmatprep.mubr.f32.mxu0 0.0
    %v1776 = vand.u32 %v190, 4294901760
    %v1777 = vsub.f32 %v190, %v1776
    %1778 = vmatmul.mubr.f32.gmra.mrb[0].mxu0 %v1777
    %v1779 = vpop.f32.mrb[0].mxu0
    %v1780 = vadd.f32 %v1286, %v1779
    %v1781 = vpop.f32.mrb[0].mxu0
    %1782 = vmatprep.mubr.f32.mxu0 0.0
    %v1783 = vand.u32 %v193, 4294901760
    %v1784 = vsub.f32 %v193, %v1783
    %1785 = vmatmul.mubr.f32.gmra.mrb[0].mxu0 %v1784
    %v1786 = vpop.f32.mrb[0].mxu0
    %v1787 = vadd.f32 %v1292, %v1786
    %v1788 = vpop.f32.mrb[0].mxu0
    %1789 = vmatprep.mubr.f32.mxu0 0.0
    %v1790 = vand.u32 %v196, 4294901760
    %v1791 = vsub.f32 %v196, %v1790
    %1792 = vmatmul.mubr.f32.gmra.mrb[0].mxu0 %v1791
    %v1793 = vpop.f32.mrb[0].mxu0
    %v1794 = vadd.f32 %v1298, %v1793
    %v1795 = vpop.f32.mrb[0].mxu0
    %1796 = vmatprep.mubr.f32.mxu0 0.0
    %v1797 = vand.u32 %v199, 4294901760
    %v1798 = vsub.f32 %v199, %v1797
    %1799 = vmatmul.mubr.f32.gmra.mrb[0].mxu0 %v1798
    %v1800 = vpop.f32.mrb[0].mxu0
    %v1801 = vadd.f32 %v1304, %v1800
    %v1802 = vpop.f32.mrb[0].mxu0
    %1803 = vmatprep.mubr.f32.mxu0 0.0
    %v1804 = vand.u32 %v202, 4294901760
    %v1805 = vsub.f32 %v202, %v1804
    %1806 = vmatmul.mubr.f32.gmra.mrb[0].mxu0 %v1805
    %v1807 = vpop.f32.mrb[0].mxu0
    %v1808 = vadd.f32 %v1310, %v1807
    %v1809 = vpop.f32.mrb[0].mxu0
    %1810 = vmatprep.mubr.f32.mxu0 0.0
    %v1811 = vand.u32 %v205, 4294901760
    %v1812 = vsub.f32 %v205, %v1811
    %1813 = vmatmul.mubr.f32.gmra.mrb[0].mxu0 %v1812
    %v1814 = vpop.f32.mrb[0].mxu0
    %v1815 = vadd.f32 %v1316, %v1814
    %v1816 = vpop.f32.mrb[0].mxu0
    %1817 = vmatprep.mubr.f32.mxu0 0.0
    %v1818 = vand.u32 %v208, 4294901760
    %v1819 = vsub.f32 %v208, %v1818
    %1820 = vmatmul.mubr.f32.gmra.mrb[0].mxu0 %v1819
    %v1821 = vpop.f32.mrb[0].mxu0
    %v1822 = vadd.f32 %v1322, %v1821
    %v1823 = vpop.f32.mrb[0].mxu0
    %1824 = vmatprep.mubr.f32.mxu0 0.0
    %v1825 = vand.u32 %v211, 4294901760
    %v1826 = vsub.f32 %v211, %v1825
    %1827 = vmatmul.mubr.f32.gmra.mrb[0].mxu0 %v1826
    %v1828 = vpop.f32.mrb[0].mxu0
    %v1829 = vadd.f32 %v1328, %v1828
    %v1830 = vpop.f32.mrb[0].mxu0
    %1831 = vmatprep.mubr.f32.mxu0 0.0
    %v1832 = vand.u32 %v214, 4294901760
    %v1833 = vsub.f32 %v214, %v1832
    %1834 = vmatmul.mubr.f32.gmra.mrb[0].mxu0 %v1833
    %v1835 = vpop.f32.mrb[0].mxu0
    %v1836 = vadd.f32 %v1334, %v1835
    %v1837 = vpop.f32.mrb[0].mxu0
    %1838 = vmatprep.mubr.f32.mxu0 0.0
    %v1839 = vand.u32 %v217, 4294901760
    %v1840 = vsub.f32 %v217, %v1839
    %1841 = vmatmul.mubr.f32.gmra.mrb[0].mxu0 %v1840
    %v1842 = vpop.f32.mrb[0].mxu0
    %v1843 = vadd.f32 %v1340, %v1842
    %v1844 = vpop.f32.mrb[0].mxu0
    %1845 = vmatprep.mubr.f32.mxu0 0.0
    %v1846 = vand.u32 %v220, 4294901760
    %v1847 = vsub.f32 %v220, %v1846
    %1848 = vmatmul.mubr.f32.gmra.mrb[0].mxu0 %v1847
    %v1849 = vpop.f32.mrb[0].mxu0
    %v1850 = vadd.f32 %v1346, %v1849
    %v1851 = vpop.f32.mrb[0].mxu0
    %1852 = vmatprep.mubr.f32.mxu0 0.0
    %v1853 = vand.u32 %v223, 4294901760
    %v1854 = vsub.f32 %v223, %v1853
    %1855 = vmatmul.mubr.f32.gmra.mrb[0].mxu0 %v1854
    %v1856 = vpop.f32.mrb[0].mxu0
    %v1857 = vadd.f32 %v1352, %v1856
    %v1858 = vpop.f32.mrb[0].mxu0
    %1859 = vmatprep.mubr.f32.mxu0 0.0
    %v1860 = vand.u32 %v226, 4294901760
    %v1861 = vsub.f32 %v226, %v1860
    %1862 = vmatmul.mubr.f32.gmra.mrb[0].mxu0 %v1861
    %v1863 = vpop.f32.mrb[0].mxu0
    %v1864 = vadd.f32 %v1358, %v1863
    %v1865 = vpop.f32.mrb[0].mxu0
    %1866 = vmatprep.mubr.f32.mxu0 0.0
    %v1867 = vand.u32 %v229, 4294901760
    %v1868 = vsub.f32 %v229, %v1867
    %1869 = vmatmul.mubr.f32.gmra.mrb[0].mxu0 %v1868
    %v1870 = vpop.f32.mrb[0].mxu0
    %v1871 = vadd.f32 %v1364, %v1870
    %v1872 = vpop.f32.mrb[0].mxu0
    %1873 = vmatprep.mubr.f32.mxu0 0.0
    %v1874 = vand.u32 %v232, 4294901760
    %v1875 = vsub.f32 %v232, %v1874
    %1876 = vmatmul.mubr.f32.gmra.mrb[0].mxu0 %v1875
    %v1877 = vpop.f32.mrb[0].mxu0
    %v1878 = vadd.f32 %v1370, %v1877
    %v1879 = vpop.f32.mrb[0].mxu0
    %1880 = vmatprep.mubr.f32.mxu0 0.0
    %v1881 = vand.u32 %v235, 4294901760
    %v1882 = vsub.f32 %v235, %v1881
    %1883 = vmatmul.mubr.f32.gmra.mrb[0].mxu0 %v1882
    %v1884 = vpop.f32.mrb[0].mxu0
    %v1885 = vadd.f32 %v1376, %v1884
    %v1886 = vpop.f32.mrb[0].mxu0
    %1887 = vmatprep.mubr.f32.mxu0 0.0
    %v1888 = vand.u32 %v238, 4294901760
    %v1889 = vsub.f32 %v238, %v1888
    %1890 = vmatmul.mubr.f32.gmra.mrb[0].mxu0 %v1889
    %v1891 = vpop.f32.mrb[0].mxu0
    %v1892 = vadd.f32 %v1382, %v1891
    %v1893 = vpop.f32.mrb[0].mxu0
    %1894 = vmatprep.mubr.f32.mxu0 0.0
    %v1895 = vand.u32 %v241, 4294901760
    %v1896 = vsub.f32 %v241, %v1895
    %1897 = vmatmul.mubr.f32.gmra.mrb[0].mxu0 %v1896
    %v1898 = vpop.f32.mrb[0].mxu0
    %v1899 = vadd.f32 %v1388, %v1898
    %v1900 = vpop.f32.mrb[0].mxu0
    %1901 = vmatprep.mubr.f32.mxu0 0.0
    %v1902 = vand.u32 %v244, 4294901760
    %v1903 = vsub.f32 %v244, %v1902
    %1904 = vmatmul.mubr.f32.gmra.mrb[0].mxu0 %v1903
    %v1905 = vpop.f32.mrb[0].mxu0
    %v1906 = vadd.f32 %v1394, %v1905
    %v1907 = vpop.f32.mrb[0].mxu0
    %1908 = vmatprep.mubr.f32.mxu0 0.0
    %v1909 = vand.u32 %v247, 4294901760
    %v1910 = vsub.f32 %v247, %v1909
    %1911 = vmatmul.mubr.f32.gmra.mrb[0].mxu0 %v1910
    %v1912 = vpop.f32.mrb[0].mxu0
    %v1913 = vadd.f32 %v1400, %v1912
    %v1914 = vpop.f32.mrb[0].mxu0
    %1915 = vmatprep.mubr.f32.mxu0 0.0
    %v1916 = vand.u32 %v250, 4294901760
    %v1917 = vsub.f32 %v250, %v1916
    %1918 = vmatmul.mubr.f32.gmra.mrb[0].mxu0 %v1917
    %v1919 = vpop.f32.mrb[0].mxu0
    %v1920 = vadd.f32 %v1406, %v1919
    %v1921 = vpop.f32.mrb[0].mxu0
    %1922 = vmatprep.mubr.f32.mxu0 0.0
    %v1923 = vand.u32 %v253, 4294901760
    %v1924 = vsub.f32 %v253, %v1923
    %1925 = vmatmul.mubr.f32.gmra.mrb[0].mxu0 %v1924
    %v1926 = vpop.f32.mrb[0].mxu0
    %v1927 = vadd.f32 %v1412, %v1926
    %v1928 = vpop.f32.mrb[0].mxu0
    %1929 = vmatprep.mubr.f32.mxu0 0.0
    %v1930 = vand.u32 %v256, 4294901760
    %v1931 = vsub.f32 %v256, %v1930
    %1932 = vmatmul.mubr.f32.gmra.mrb[0].mxu0 %v1931
    %v1933 = vpop.f32.mrb[0].mxu0
    %v1934 = vadd.f32 %v1418, %v1933
    %v1935 = vpop.f32.mrb[0].mxu0
    %1936 = vmatprep.mubr.f32.mxu0 0.0
    %v1937 = vand.u32 %v259, 4294901760
    %v1938 = vsub.f32 %v259, %v1937
    %1939 = vmatmul.mubr.f32.gmra.mrb[0].mxu0 %v1938
    %v1940 = vpop.f32.mrb[0].mxu0
    %v1941 = vadd.f32 %v1424, %v1940
    %v1942 = vpop.f32.mrb[0].mxu0
    %1943 = vmatprep.mubr.f32.mxu0 0.0
    %v1944 = vand.u32 %v262, 4294901760
    %v1945 = vsub.f32 %v262, %v1944
    %1946 = vmatmul.mubr.f32.gmra.mrb[0].mxu0 %v1945
    %v1947 = vpop.f32.mrb[0].mxu0
    %v1948 = vadd.f32 %v1430, %v1947
    %v1949 = vpop.f32.mrb[0].mxu0
    %1950 = vmatprep.mubr.f32.mxu0 0.0
    %v1951 = vand.u32 %v265, 4294901760
    %v1952 = vsub.f32 %v265, %v1951
    %1953 = vmatmul.mubr.f32.gmra.mrb[0].mxu0 %v1952
    %v1954 = vpop.f32.mrb[0].mxu0
    %v1955 = vadd.f32 %v1436, %v1954
    %v1956 = vpop.f32.mrb[0].mxu0
    %1957 = vmatprep.mubr.f32.mxu0 0.0
    %v1958 = vand.u32 %v268, 4294901760
    %v1959 = vsub.f32 %v268, %v1958
    %1960 = vmatmul.mubr.f32.gmra.mrb[0].mxu0 %v1959
    %v1961 = vpop.f32.mrb[0].mxu0
    %v1962 = vadd.f32 %v1442, %v1961
    %v1963 = vpop.f32.mrb[0].mxu0
    %1964 = vmatprep.mubr.f32.mxu0 0.0
    %v1965 = vand.u32 %v271, 4294901760
    %v1966 = vsub.f32 %v271, %v1965
    %1967 = vmatmul.mubr.f32.gmra.mrb[0].mxu0 %v1966
    %v1968 = vpop.f32.mrb[0].mxu0
    %v1969 = vadd.f32 %v1448, %v1968
    %v1970 = vpop.f32.mrb[0].mxu0
    %1971 = vdwg.mxu0
    %1972 = vmatprep.subr.mxu0 0.0
    %v1973 = vand.u32 %v76, 4294901760
    %1974 = vmatpush1.msra.mxu0 %v1973
    %1975 = vmatprep.subr.mxu0 0.0
    %v1976 = vand.u32 %v77, 4294901760
    %1977 = vmatpush1.msra.mxu0 %v1976
    %1978 = vmatprep.subr.mxu0 0.0
    %v1979 = vand.u32 %v78, 4294901760
    %1980 = vmatpush1.msra.mxu0 %v1979
    %1981 = vmatprep.subr.mxu0 0.0
    %v1982 = vand.u32 %v79, 4294901760
    %1983 = vmatpush1.msra.mxu0 %v1982
    %1984 = vmatprep.subr.mxu0 0.0
    %1985 = vmatpush1.msra.mxu0 0.0
    %1986 = vmatprep.subr.mxu0 0.0
    %1987 = vmatpush1.msra.mxu0 0.0
    %1988 = vmatprep.subr.mxu0 0.0
    %1989 = vmatpush1.msra.mxu0 0.0
    %1990 = vmatprep.subr.mxu0 0.0
    %1991 = vmatpush1.msra.mxu0 0.0
    %1992 = vmatprep.subr.mxu0 0.0
    %1993 = vmatpush1.msra.mxu0 0.0
    %1994 = vmatprep.subr.mxu0 0.0
    %1995 = vmatpush1.msra.mxu0 0.0
    %1996 = vmatprep.subr.mxu0 0.0
    %1997 = vmatpush1.msra.mxu0 0.0
    %1998 = vmatprep.subr.mxu0 0.0
    %1999 = vmatpush1.msra.mxu0 0.0
    %2000 = vmatprep.subr.mxu0 0.0
    %2001 = vmatpush1.msra.mxu0 0.0
    %2002 = vmatprep.subr.mxu0 0.0
    %2003 = vmatpush1.msra.mxu0 0.0
    %2004 = vmatprep.subr.mxu0 0.0
    %2005 = vmatpush1.msra.mxu0 0.0
    %2006 = vmatprep.subr.mxu0 0.0
    %2007 = vmatpush1.msra.mxu0 0.0
    %2008 = vmatprep.subr.mxu0 0.0
    %2009 = vmatpush1.msra.mxu0 0.0
    %2010 = vmatprep.subr.mxu0 0.0
    %2011 = vmatpush1.msra.mxu0 0.0
    %2012 = vmatprep.subr.mxu0 0.0
    %2013 = vmatpush1.msra.mxu0 0.0
    %2014 = vmatprep.subr.mxu0 0.0
    %2015 = vmatpush1.msra.mxu0 0.0
    %2016 = vmatprep.subr.mxu0 0.0
    %2017 = vmatpush1.msra.mxu0 0.0
    %2018 = vmatprep.subr.mxu0 0.0
    %2019 = vmatpush1.msra.mxu0 0.0
    %2020 = vmatprep.subr.mxu0 0.0
    %2021 = vmatpush1.msra.mxu0 0.0
    %2022 = vmatprep.subr.mxu0 0.0
    %2023 = vmatpush1.msra.mxu0 0.0
    %2024 = vmatprep.subr.mxu0 0.0
    %2025 = vmatpush1.msra.mxu0 0.0
    %2026 = vmatprep.subr.mxu0 0.0
    %2027 = vmatpush1.msra.mxu0 0.0
    %2028 = vmatprep.subr.mxu0 0.0
    %2029 = vmatpush1.msra.mxu0 0.0
    %2030 = vmatprep.subr.mxu0 0.0
    %2031 = vmatpush1.msra.mxu0 0.0
    %2032 = vmatprep.subr.mxu0 0.0
    %2033 = vmatpush1.msra.mxu0 0.0
    %2034 = vmatprep.subr.mxu0 0.0
    %2035 = vmatpush1.msra.mxu0 0.0
    %2036 = vmatprep.subr.mxu0 0.0
    %2037 = vmatpush1.msra.mxu0 0.0
    %2038 = vmatprep.subr.mxu0 0.0
    %2039 = vmatpush1.msra.mxu0 0.0
    %2040 = vmatprep.mubr.f32.mxu0 0.0
    %v2041 = vand.u32 %v82, 4294901760
    %v2042 = vsub.f32 %v82, %v2041
    %v2043 = vand.u32 %v2042, 4294901760
    %2044 = vmatmul.mubr.f32.gmra.mrb[0].mxu0 %v2043
    %v2045 = vpop.f32.mrb[0].mxu0
    %v2046 = vadd.f32 %v1528, %v2045
    %v2047 = vpop.f32.mrb[0].mxu0
    %2048 = vmatprep.mubr.f32.mxu0 0.0
    %v2049 = vand.u32 %v85, 4294901760
    %v2050 = vsub.f32 %v85, %v2049
    %v2051 = vand.u32 %v2050, 4294901760
    %2052 = vmatmul.mubr.f32.gmra.mrb[0].mxu0 %v2051
    %v2053 = vpop.f32.mrb[0].mxu0
    %v2054 = vadd.f32 %v1535, %v2053
    %v2055 = vpop.f32.mrb[0].mxu0
    %2056 = vmatprep.mubr.f32.mxu0 0.0
    %v2057 = vand.u32 %v88, 4294901760
    %v2058 = vsub.f32 %v88, %v2057
    %v2059 = vand.u32 %v2058, 4294901760
    %2060 = vmatmul.mubr.f32.gmra.mrb[0].mxu0 %v2059
    %v2061 = vpop.f32.mrb[0].mxu0
    %v2062 = vadd.f32 %v1542, %v2061
    %v2063 = vpop.f32.mrb[0].mxu0
    %2064 = vmatprep.mubr.f32.mxu0 0.0
    %v2065 = vand.u32 %v91, 4294901760
    %v2066 = vsub.f32 %v91, %v2065
    %v2067 = vand.u32 %v2066, 4294901760
    %2068 = vmatmul.mubr.f32.gmra.mrb[0].mxu0 %v2067
    %v2069 = vpop.f32.mrb[0].mxu0
    %v2070 = vadd.f32 %v1549, %v2069
    %v2071 = vpop.f32.mrb[0].mxu0
    %2072 = vmatprep.mubr.f32.mxu0 0.0
    %v2073 = vand.u32 %v94, 4294901760
    %v2074 = vsub.f32 %v94, %v2073
    %v2075 = vand.u32 %v2074, 4294901760
    %2076 = vmatmul.mubr.f32.gmra.mrb[0].mxu0 %v2075
    %v2077 = vpop.f32.mrb[0].mxu0
    %v2078 = vadd.f32 %v1556, %v2077
    %v2079 = vpop.f32.mrb[0].mxu0
    %2080 = vmatprep.mubr.f32.mxu0 0.0
    %v2081 = vand.u32 %v97, 4294901760
    %v2082 = vsub.f32 %v97, %v2081
    %v2083 = vand.u32 %v2082, 4294901760
    %2084 = vmatmul.mubr.f32.gmra.mrb[0].mxu0 %v2083
    %v2085 = vpop.f32.mrb[0].mxu0
    %v2086 = vadd.f32 %v1563, %v2085
    %v2087 = vpop.f32.mrb[0].mxu0
    %2088 = vmatprep.mubr.f32.mxu0 0.0
    %v2089 = vand.u32 %v100, 4294901760
    %v2090 = vsub.f32 %v100, %v2089
    %v2091 = vand.u32 %v2090, 4294901760
    %2092 = vmatmul.mubr.f32.gmra.mrb[0].mxu0 %v2091
    %v2093 = vpop.f32.mrb[0].mxu0
    %v2094 = vadd.f32 %v1570, %v2093
    %v2095 = vpop.f32.mrb[0].mxu0
    %2096 = vmatprep.mubr.f32.mxu0 0.0
    %v2097 = vand.u32 %v103, 4294901760
    %v2098 = vsub.f32 %v103, %v2097
    %v2099 = vand.u32 %v2098, 4294901760
    %2100 = vmatmul.mubr.f32.gmra.mrb[0].mxu0 %v2099
    %v2101 = vpop.f32.mrb[0].mxu0
    %v2102 = vadd.f32 %v1577, %v2101
    %v2103 = vpop.f32.mrb[0].mxu0
    %2104 = vmatprep.mubr.f32.mxu0 0.0
    %v2105 = vand.u32 %v106, 4294901760
    %v2106 = vsub.f32 %v106, %v2105
    %v2107 = vand.u32 %v2106, 4294901760
    %2108 = vmatmul.mubr.f32.gmra.mrb[0].mxu0 %v2107
    %v2109 = vpop.f32.mrb[0].mxu0
    %v2110 = vadd.f32 %v1584, %v2109
    %v2111 = vpop.f32.mrb[0].mxu0
    %2112 = vmatprep.mubr.f32.mxu0 0.0
    %v2113 = vand.u32 %v109, 4294901760
    %v2114 = vsub.f32 %v109, %v2113
    %v2115 = vand.u32 %v2114, 4294901760
    %2116 = vmatmul.mubr.f32.gmra.mrb[0].mxu0 %v2115
    %v2117 = vpop.f32.mrb[0].mxu0
    %v2118 = vadd.f32 %v1591, %v2117
    %v2119 = vpop.f32.mrb[0].mxu0
    %2120 = vmatprep.mubr.f32.mxu0 0.0
    %v2121 = vand.u32 %v112, 4294901760
    %v2122 = vsub.f32 %v112, %v2121
    %v2123 = vand.u32 %v2122, 4294901760
    %2124 = vmatmul.mubr.f32.gmra.mrb[0].mxu0 %v2123
    %v2125 = vpop.f32.mrb[0].mxu0
    %v2126 = vadd.f32 %v1598, %v2125
    %v2127 = vpop.f32.mrb[0].mxu0
    %2128 = vmatprep.mubr.f32.mxu0 0.0
    %v2129 = vand.u32 %v115, 4294901760
    %v2130 = vsub.f32 %v115, %v2129
    %v2131 = vand.u32 %v2130, 4294901760
    %2132 = vmatmul.mubr.f32.gmra.mrb[0].mxu0 %v2131
    %v2133 = vpop.f32.mrb[0].mxu0
    %v2134 = vadd.f32 %v1605, %v2133
    %v2135 = vpop.f32.mrb[0].mxu0
    %2136 = vmatprep.mubr.f32.mxu0 0.0
    %v2137 = vand.u32 %v118, 4294901760
    %v2138 = vsub.f32 %v118, %v2137
    %v2139 = vand.u32 %v2138, 4294901760
    %2140 = vmatmul.mubr.f32.gmra.mrb[0].mxu0 %v2139
    %v2141 = vpop.f32.mrb[0].mxu0
    %v2142 = vadd.f32 %v1612, %v2141
    %v2143 = vpop.f32.mrb[0].mxu0
    %2144 = vmatprep.mubr.f32.mxu0 0.0
    %v2145 = vand.u32 %v121, 4294901760
    %v2146 = vsub.f32 %v121, %v2145
    %v2147 = vand.u32 %v2146, 4294901760
    %2148 = vmatmul.mubr.f32.gmra.mrb[0].mxu0 %v2147
    %v2149 = vpop.f32.mrb[0].mxu0
    %v2150 = vadd.f32 %v1619, %v2149
    %v2151 = vpop.f32.mrb[0].mxu0
    %2152 = vmatprep.mubr.f32.mxu0 0.0
    %v2153 = vand.u32 %v124, 4294901760
    %v2154 = vsub.f32 %v124, %v2153
    %v2155 = vand.u32 %v2154, 4294901760
    %2156 = vmatmul.mubr.f32.gmra.mrb[0].mxu0 %v2155
    %v2157 = vpop.f32.mrb[0].mxu0
    %v2158 = vadd.f32 %v1626, %v2157
    %v2159 = vpop.f32.mrb[0].mxu0
    %2160 = vmatprep.mubr.f32.mxu0 0.0
    %v2161 = vand.u32 %v127, 4294901760
    %v2162 = vsub.f32 %v127, %v2161
    %v2163 = vand.u32 %v2162, 4294901760
    %2164 = vmatmul.mubr.f32.gmra.mrb[0].mxu0 %v2163
    %v2165 = vpop.f32.mrb[0].mxu0
    %v2166 = vadd.f32 %v1633, %v2165
    %v2167 = vpop.f32.mrb[0].mxu0
    %2168 = vmatprep.mubr.f32.mxu0 0.0
    %v2169 = vand.u32 %v130, 4294901760
    %v2170 = vsub.f32 %v130, %v2169
    %v2171 = vand.u32 %v2170, 4294901760
    %2172 = vmatmul.mubr.f32.gmra.mrb[0].mxu0 %v2171
    %v2173 = vpop.f32.mrb[0].mxu0
    %v2174 = vadd.f32 %v1640, %v2173
    %v2175 = vpop.f32.mrb[0].mxu0
    %2176 = vmatprep.mubr.f32.mxu0 0.0
    %v2177 = vand.u32 %v133, 4294901760
    %v2178 = vsub.f32 %v133, %v2177
    %v2179 = vand.u32 %v2178, 4294901760
    %2180 = vmatmul.mubr.f32.gmra.mrb[0].mxu0 %v2179
    %v2181 = vpop.f32.mrb[0].mxu0
    %v2182 = vadd.f32 %v1647, %v2181
    %v2183 = vpop.f32.mrb[0].mxu0
    %2184 = vmatprep.mubr.f32.mxu0 0.0
    %v2185 = vand.u32 %v136, 4294901760
    %v2186 = vsub.f32 %v136, %v2185
    %v2187 = vand.u32 %v2186, 4294901760
    %2188 = vmatmul.mubr.f32.gmra.mrb[0].mxu0 %v2187
    %v2189 = vpop.f32.mrb[0].mxu0
    %v2190 = vadd.f32 %v1654, %v2189
    %v2191 = vpop.f32.mrb[0].mxu0
    %2192 = vmatprep.mubr.f32.mxu0 0.0
    %v2193 = vand.u32 %v139, 4294901760
    %v2194 = vsub.f32 %v139, %v2193
    %v2195 = vand.u32 %v2194, 4294901760
    %2196 = vmatmul.mubr.f32.gmra.mrb[0].mxu0 %v2195
    %v2197 = vpop.f32.mrb[0].mxu0
    %v2198 = vadd.f32 %v1661, %v2197
    %v2199 = vpop.f32.mrb[0].mxu0
    %2200 = vmatprep.mubr.f32.mxu0 0.0
    %v2201 = vand.u32 %v142, 4294901760
    %v2202 = vsub.f32 %v142, %v2201
    %v2203 = vand.u32 %v2202, 4294901760
    %2204 = vmatmul.mubr.f32.gmra.mrb[0].mxu0 %v2203
    %v2205 = vpop.f32.mrb[0].mxu0
    %v2206 = vadd.f32 %v1668, %v2205
    %v2207 = vpop.f32.mrb[0].mxu0
    %2208 = vmatprep.mubr.f32.mxu0 0.0
    %v2209 = vand.u32 %v145, 4294901760
    %v2210 = vsub.f32 %v145, %v2209
    %v2211 = vand.u32 %v2210, 4294901760
    %2212 = vmatmul.mubr.f32.gmra.mrb[0].mxu0 %v2211
    %v2213 = vpop.f32.mrb[0].mxu0
    %v2214 = vadd.f32 %v1675, %v2213
    %v2215 = vpop.f32.mrb[0].mxu0
    %2216 = vmatprep.mubr.f32.mxu0 0.0
    %v2217 = vand.u32 %v148, 4294901760
    %v2218 = vsub.f32 %v148, %v2217
    %v2219 = vand.u32 %v2218, 4294901760
    %2220 = vmatmul.mubr.f32.gmra.mrb[0].mxu0 %v2219
    %v2221 = vpop.f32.mrb[0].mxu0
    %v2222 = vadd.f32 %v1682, %v2221
    %v2223 = vpop.f32.mrb[0].mxu0
    %2224 = vmatprep.mubr.f32.mxu0 0.0
    %v2225 = vand.u32 %v151, 4294901760
    %v2226 = vsub.f32 %v151, %v2225
    %v2227 = vand.u32 %v2226, 4294901760
    %2228 = vmatmul.mubr.f32.gmra.mrb[0].mxu0 %v2227
    %v2229 = vpop.f32.mrb[0].mxu0
    %v2230 = vadd.f32 %v1689, %v2229
    %v2231 = vpop.f32.mrb[0].mxu0
    %2232 = vmatprep.mubr.f32.mxu0 0.0
    %v2233 = vand.u32 %v154, 4294901760
    %v2234 = vsub.f32 %v154, %v2233
    %v2235 = vand.u32 %v2234, 4294901760
    %2236 = vmatmul.mubr.f32.gmra.mrb[0].mxu0 %v2235
    %v2237 = vpop.f32.mrb[0].mxu0
    %v2238 = vadd.f32 %v1696, %v2237
    %v2239 = vpop.f32.mrb[0].mxu0
    %2240 = vmatprep.mubr.f32.mxu0 0.0
    %v2241 = vand.u32 %v157, 4294901760
    %v2242 = vsub.f32 %v157, %v2241
    %v2243 = vand.u32 %v2242, 4294901760
    %2244 = vmatmul.mubr.f32.gmra.mrb[0].mxu0 %v2243
    %v2245 = vpop.f32.mrb[0].mxu0
    %v2246 = vadd.f32 %v1703, %v2245
    %v2247 = vpop.f32.mrb[0].mxu0
    %2248 = vmatprep.mubr.f32.mxu0 0.0
    %v2249 = vand.u32 %v160, 4294901760
    %v2250 = vsub.f32 %v160, %v2249
    %v2251 = vand.u32 %v2250, 4294901760
    %2252 = vmatmul.mubr.f32.gmra.mrb[0].mxu0 %v2251
    %v2253 = vpop.f32.mrb[0].mxu0
    %v2254 = vadd.f32 %v1710, %v2253
    %v2255 = vpop.f32.mrb[0].mxu0
    %2256 = vmatprep.mubr.f32.mxu0 0.0
    %v2257 = vand.u32 %v163, 4294901760
    %v2258 = vsub.f32 %v163, %v2257
    %v2259 = vand.u32 %v2258, 4294901760
    %2260 = vmatmul.mubr.f32.gmra.mrb[0].mxu0 %v2259
    %v2261 = vpop.f32.mrb[0].mxu0
    %v2262 = vadd.f32 %v1717, %v2261
    %v2263 = vpop.f32.mrb[0].mxu0
    %2264 = vmatprep.mubr.f32.mxu0 0.0
    %v2265 = vand.u32 %v166, 4294901760
    %v2266 = vsub.f32 %v166, %v2265
    %v2267 = vand.u32 %v2266, 4294901760
    %2268 = vmatmul.mubr.f32.gmra.mrb[0].mxu0 %v2267
    %v2269 = vpop.f32.mrb[0].mxu0
    %v2270 = vadd.f32 %v1724, %v2269
    %v2271 = vpop.f32.mrb[0].mxu0
    %2272 = vmatprep.mubr.f32.mxu0 0.0
    %v2273 = vand.u32 %v169, 4294901760
    %v2274 = vsub.f32 %v169, %v2273
    %v2275 = vand.u32 %v2274, 4294901760
    %2276 = vmatmul.mubr.f32.gmra.mrb[0].mxu0 %v2275
    %v2277 = vpop.f32.mrb[0].mxu0
    %v2278 = vadd.f32 %v1731, %v2277
    %v2279 = vpop.f32.mrb[0].mxu0
    %2280 = vmatprep.mubr.f32.mxu0 0.0
    %v2281 = vand.u32 %v172, 4294901760
    %v2282 = vsub.f32 %v172, %v2281
    %v2283 = vand.u32 %v2282, 4294901760
    %2284 = vmatmul.mubr.f32.gmra.mrb[0].mxu0 %v2283
    %v2285 = vpop.f32.mrb[0].mxu0
    %v2286 = vadd.f32 %v1738, %v2285
    %v2287 = vpop.f32.mrb[0].mxu0
    %2288 = vmatprep.mubr.f32.mxu0 0.0
    %v2289 = vand.u32 %v175, 4294901760
    %v2290 = vsub.f32 %v175, %v2289
    %v2291 = vand.u32 %v2290, 4294901760
    %2292 = vmatmul.mubr.f32.gmra.mrb[0].mxu0 %v2291
    %v2293 = vpop.f32.mrb[0].mxu0
    %v2294 = vadd.f32 %v1745, %v2293
    %v2295 = vpop.f32.mrb[0].mxu0
    %2296 = vmatprep.mubr.f32.mxu0 0.0
    %v2297 = vand.u32 %v178, 4294901760
    %v2298 = vsub.f32 %v178, %v2297
    %v2299 = vand.u32 %v2298, 4294901760
    %2300 = vmatmul.mubr.f32.gmra.mrb[0].mxu0 %v2299
    %v2301 = vpop.f32.mrb[0].mxu0
    %v2302 = vadd.f32 %v1752, %v2301
    %v2303 = vpop.f32.mrb[0].mxu0
    %2304 = vmatprep.mubr.f32.mxu0 0.0
    %v2305 = vand.u32 %v181, 4294901760
    %v2306 = vsub.f32 %v181, %v2305
    %v2307 = vand.u32 %v2306, 4294901760
    %2308 = vmatmul.mubr.f32.gmra.mrb[0].mxu0 %v2307
    %v2309 = vpop.f32.mrb[0].mxu0
    %v2310 = vadd.f32 %v1759, %v2309
    %v2311 = vpop.f32.mrb[0].mxu0
    %2312 = vmatprep.mubr.f32.mxu0 0.0
    %v2313 = vand.u32 %v184, 4294901760
    %v2314 = vsub.f32 %v184, %v2313
    %v2315 = vand.u32 %v2314, 4294901760
    %2316 = vmatmul.mubr.f32.gmra.mrb[0].mxu0 %v2315
    %v2317 = vpop.f32.mrb[0].mxu0
    %v2318 = vadd.f32 %v1766, %v2317
    %v2319 = vpop.f32.mrb[0].mxu0
    %2320 = vmatprep.mubr.f32.mxu0 0.0
    %v2321 = vand.u32 %v187, 4294901760
    %v2322 = vsub.f32 %v187, %v2321
    %v2323 = vand.u32 %v2322, 4294901760
    %2324 = vmatmul.mubr.f32.gmra.mrb[0].mxu0 %v2323
    %v2325 = vpop.f32.mrb[0].mxu0
    %v2326 = vadd.f32 %v1773, %v2325
    %v2327 = vpop.f32.mrb[0].mxu0
    %2328 = vmatprep.mubr.f32.mxu0 0.0
    %v2329 = vand.u32 %v190, 4294901760
    %v2330 = vsub.f32 %v190, %v2329
    %v2331 = vand.u32 %v2330, 4294901760
    %2332 = vmatmul.mubr.f32.gmra.mrb[0].mxu0 %v2331
    %v2333 = vpop.f32.mrb[0].mxu0
    %v2334 = vadd.f32 %v1780, %v2333
    %v2335 = vpop.f32.mrb[0].mxu0
    %2336 = vmatprep.mubr.f32.mxu0 0.0
    %v2337 = vand.u32 %v193, 4294901760
    %v2338 = vsub.f32 %v193, %v2337
    %v2339 = vand.u32 %v2338, 4294901760
    %2340 = vmatmul.mubr.f32.gmra.mrb[0].mxu0 %v2339
    %v2341 = vpop.f32.mrb[0].mxu0
    %v2342 = vadd.f32 %v1787, %v2341
    %v2343 = vpop.f32.mrb[0].mxu0
    %2344 = vmatprep.mubr.f32.mxu0 0.0
    %v2345 = vand.u32 %v196, 4294901760
    %v2346 = vsub.f32 %v196, %v2345
    %v2347 = vand.u32 %v2346, 4294901760
    %2348 = vmatmul.mubr.f32.gmra.mrb[0].mxu0 %v2347
    %v2349 = vpop.f32.mrb[0].mxu0
    %v2350 = vadd.f32 %v1794, %v2349
    %v2351 = vpop.f32.mrb[0].mxu0
    %2352 = vmatprep.mubr.f32.mxu0 0.0
    %v2353 = vand.u32 %v199, 4294901760
    %v2354 = vsub.f32 %v199, %v2353
    %v2355 = vand.u32 %v2354, 4294901760
    %2356 = vmatmul.mubr.f32.gmra.mrb[0].mxu0 %v2355
    %v2357 = vpop.f32.mrb[0].mxu0
    %v2358 = vadd.f32 %v1801, %v2357
    %v2359 = vpop.f32.mrb[0].mxu0
    %2360 = vmatprep.mubr.f32.mxu0 0.0
    %v2361 = vand.u32 %v202, 4294901760
    %v2362 = vsub.f32 %v202, %v2361
    %v2363 = vand.u32 %v2362, 4294901760
    %2364 = vmatmul.mubr.f32.gmra.mrb[0].mxu0 %v2363
    %v2365 = vpop.f32.mrb[0].mxu0
    %v2366 = vadd.f32 %v1808, %v2365
    %v2367 = vpop.f32.mrb[0].mxu0
    %2368 = vmatprep.mubr.f32.mxu0 0.0
    %v2369 = vand.u32 %v205, 4294901760
    %v2370 = vsub.f32 %v205, %v2369
    %v2371 = vand.u32 %v2370, 4294901760
    %2372 = vmatmul.mubr.f32.gmra.mrb[0].mxu0 %v2371
    %v2373 = vpop.f32.mrb[0].mxu0
    %v2374 = vadd.f32 %v1815, %v2373
    %v2375 = vpop.f32.mrb[0].mxu0
    %2376 = vmatprep.mubr.f32.mxu0 0.0
    %v2377 = vand.u32 %v208, 4294901760
    %v2378 = vsub.f32 %v208, %v2377
    %v2379 = vand.u32 %v2378, 4294901760
    %2380 = vmatmul.mubr.f32.gmra.mrb[0].mxu0 %v2379
    %v2381 = vpop.f32.mrb[0].mxu0
    %v2382 = vadd.f32 %v1822, %v2381
    %v2383 = vpop.f32.mrb[0].mxu0
    %2384 = vmatprep.mubr.f32.mxu0 0.0
    %v2385 = vand.u32 %v211, 4294901760
    %v2386 = vsub.f32 %v211, %v2385
    %v2387 = vand.u32 %v2386, 4294901760
    %2388 = vmatmul.mubr.f32.gmra.mrb[0].mxu0 %v2387
    %v2389 = vpop.f32.mrb[0].mxu0
    %v2390 = vadd.f32 %v1829, %v2389
    %v2391 = vpop.f32.mrb[0].mxu0
    %2392 = vmatprep.mubr.f32.mxu0 0.0
    %v2393 = vand.u32 %v214, 4294901760
    %v2394 = vsub.f32 %v214, %v2393
    %v2395 = vand.u32 %v2394, 4294901760
    %2396 = vmatmul.mubr.f32.gmra.mrb[0].mxu0 %v2395
    %v2397 = vpop.f32.mrb[0].mxu0
    %v2398 = vadd.f32 %v1836, %v2397
    %v2399 = vpop.f32.mrb[0].mxu0
    %2400 = vmatprep.mubr.f32.mxu0 0.0
    %v2401 = vand.u32 %v217, 4294901760
    %v2402 = vsub.f32 %v217, %v2401
    %v2403 = vand.u32 %v2402, 4294901760
    %2404 = vmatmul.mubr.f32.gmra.mrb[0].mxu0 %v2403
    %v2405 = vpop.f32.mrb[0].mxu0
    %v2406 = vadd.f32 %v1843, %v2405
    %v2407 = vpop.f32.mrb[0].mxu0
    %2408 = vmatprep.mubr.f32.mxu0 0.0
    %v2409 = vand.u32 %v220, 4294901760
    %v2410 = vsub.f32 %v220, %v2409
    %v2411 = vand.u32 %v2410, 4294901760
    %2412 = vmatmul.mubr.f32.gmra.mrb[0].mxu0 %v2411
    %v2413 = vpop.f32.mrb[0].mxu0
    %v2414 = vadd.f32 %v1850, %v2413
    %v2415 = vpop.f32.mrb[0].mxu0
    %2416 = vmatprep.mubr.f32.mxu0 0.0
    %v2417 = vand.u32 %v223, 4294901760
    %v2418 = vsub.f32 %v223, %v2417
    %v2419 = vand.u32 %v2418, 4294901760
    %2420 = vmatmul.mubr.f32.gmra.mrb[0].mxu0 %v2419
    %v2421 = vpop.f32.mrb[0].mxu0
    %v2422 = vadd.f32 %v1857, %v2421
    %v2423 = vpop.f32.mrb[0].mxu0
    %2424 = vmatprep.mubr.f32.mxu0 0.0
    %v2425 = vand.u32 %v226, 4294901760
    %v2426 = vsub.f32 %v226, %v2425
    %v2427 = vand.u32 %v2426, 4294901760
    %2428 = vmatmul.mubr.f32.gmra.mrb[0].mxu0 %v2427
    %v2429 = vpop.f32.mrb[0].mxu0
    %v2430 = vadd.f32 %v1864, %v2429
    %v2431 = vpop.f32.mrb[0].mxu0
    %2432 = vmatprep.mubr.f32.mxu0 0.0
    %v2433 = vand.u32 %v229, 4294901760
    %v2434 = vsub.f32 %v229, %v2433
    %v2435 = vand.u32 %v2434, 4294901760
    %2436 = vmatmul.mubr.f32.gmra.mrb[0].mxu0 %v2435
    %v2437 = vpop.f32.mrb[0].mxu0
    %v2438 = vadd.f32 %v1871, %v2437
    %v2439 = vpop.f32.mrb[0].mxu0
    %2440 = vmatprep.mubr.f32.mxu0 0.0
    %v2441 = vand.u32 %v232, 4294901760
    %v2442 = vsub.f32 %v232, %v2441
    %v2443 = vand.u32 %v2442, 4294901760
    %2444 = vmatmul.mubr.f32.gmra.mrb[0].mxu0 %v2443
    %v2445 = vpop.f32.mrb[0].mxu0
    %v2446 = vadd.f32 %v1878, %v2445
    %v2447 = vpop.f32.mrb[0].mxu0
    %2448 = vmatprep.mubr.f32.mxu0 0.0
    %v2449 = vand.u32 %v235, 4294901760
    %v2450 = vsub.f32 %v235, %v2449
    %v2451 = vand.u32 %v2450, 4294901760
    %2452 = vmatmul.mubr.f32.gmra.mrb[0].mxu0 %v2451
    %v2453 = vpop.f32.mrb[0].mxu0
    %v2454 = vadd.f32 %v1885, %v2453
    %v2455 = vpop.f32.mrb[0].mxu0
    %2456 = vmatprep.mubr.f32.mxu0 0.0
    %v2457 = vand.u32 %v238, 4294901760
    %v2458 = vsub.f32 %v238, %v2457
    %v2459 = vand.u32 %v2458, 4294901760
    %2460 = vmatmul.mubr.f32.gmra.mrb[0].mxu0 %v2459
    %v2461 = vpop.f32.mrb[0].mxu0
    %v2462 = vadd.f32 %v1892, %v2461
    %v2463 = vpop.f32.mrb[0].mxu0
    %2464 = vmatprep.mubr.f32.mxu0 0.0
    %v2465 = vand.u32 %v241, 4294901760
    %v2466 = vsub.f32 %v241, %v2465
    %v2467 = vand.u32 %v2466, 4294901760
    %2468 = vmatmul.mubr.f32.gmra.mrb[0].mxu0 %v2467
    %v2469 = vpop.f32.mrb[0].mxu0
    %v2470 = vadd.f32 %v1899, %v2469
    %v2471 = vpop.f32.mrb[0].mxu0
    %2472 = vmatprep.mubr.f32.mxu0 0.0
    %v2473 = vand.u32 %v244, 4294901760
    %v2474 = vsub.f32 %v244, %v2473
    %v2475 = vand.u32 %v2474, 4294901760
    %2476 = vmatmul.mubr.f32.gmra.mrb[0].mxu0 %v2475
    %v2477 = vpop.f32.mrb[0].mxu0
    %v2478 = vadd.f32 %v1906, %v2477
    %v2479 = vpop.f32.mrb[0].mxu0
    %2480 = vmatprep.mubr.f32.mxu0 0.0
    %v2481 = vand.u32 %v247, 4294901760
    %v2482 = vsub.f32 %v247, %v2481
    %v2483 = vand.u32 %v2482, 4294901760
    %2484 = vmatmul.mubr.f32.gmra.mrb[0].mxu0 %v2483
    %v2485 = vpop.f32.mrb[0].mxu0
    %v2486 = vadd.f32 %v1913, %v2485
    %v2487 = vpop.f32.mrb[0].mxu0
    %2488 = vmatprep.mubr.f32.mxu0 0.0
    %v2489 = vand.u32 %v250, 4294901760
    %v2490 = vsub.f32 %v250, %v2489
    %v2491 = vand.u32 %v2490, 4294901760
    %2492 = vmatmul.mubr.f32.gmra.mrb[0].mxu0 %v2491
    %v2493 = vpop.f32.mrb[0].mxu0
    %v2494 = vadd.f32 %v1920, %v2493
    %v2495 = vpop.f32.mrb[0].mxu0
    %2496 = vmatprep.mubr.f32.mxu0 0.0
    %v2497 = vand.u32 %v253, 4294901760
    %v2498 = vsub.f32 %v253, %v2497
    %v2499 = vand.u32 %v2498, 4294901760
    %2500 = vmatmul.mubr.f32.gmra.mrb[0].mxu0 %v2499
    %v2501 = vpop.f32.mrb[0].mxu0
    %v2502 = vadd.f32 %v1927, %v2501
    %v2503 = vpop.f32.mrb[0].mxu0
    %2504 = vmatprep.mubr.f32.mxu0 0.0
    %v2505 = vand.u32 %v256, 4294901760
    %v2506 = vsub.f32 %v256, %v2505
    %v2507 = vand.u32 %v2506, 4294901760
    %2508 = vmatmul.mubr.f32.gmra.mrb[0].mxu0 %v2507
    %v2509 = vpop.f32.mrb[0].mxu0
    %v2510 = vadd.f32 %v1934, %v2509
    %v2511 = vpop.f32.mrb[0].mxu0
    %2512 = vmatprep.mubr.f32.mxu0 0.0
    %v2513 = vand.u32 %v259, 4294901760
    %v2514 = vsub.f32 %v259, %v2513
    %v2515 = vand.u32 %v2514, 4294901760
    %2516 = vmatmul.mubr.f32.gmra.mrb[0].mxu0 %v2515
    %v2517 = vpop.f32.mrb[0].mxu0
    %v2518 = vadd.f32 %v1941, %v2517
    %v2519 = vpop.f32.mrb[0].mxu0
    %2520 = vmatprep.mubr.f32.mxu0 0.0
    %v2521 = vand.u32 %v262, 4294901760
    %v2522 = vsub.f32 %v262, %v2521
    %v2523 = vand.u32 %v2522, 4294901760
    %2524 = vmatmul.mubr.f32.gmra.mrb[0].mxu0 %v2523
    %v2525 = vpop.f32.mrb[0].mxu0
    %v2526 = vadd.f32 %v1948, %v2525
    %v2527 = vpop.f32.mrb[0].mxu0
    %2528 = vmatprep.mubr.f32.mxu0 0.0
    %v2529 = vand.u32 %v265, 4294901760
    %v2530 = vsub.f32 %v265, %v2529
    %v2531 = vand.u32 %v2530, 4294901760
    %2532 = vmatmul.mubr.f32.gmra.mrb[0].mxu0 %v2531
    %v2533 = vpop.f32.mrb[0].mxu0
    %v2534 = vadd.f32 %v1955, %v2533
    %v2535 = vpop.f32.mrb[0].mxu0
    %2536 = vmatprep.mubr.f32.mxu0 0.0
    %v2537 = vand.u32 %v268, 4294901760
    %v2538 = vsub.f32 %v268, %v2537
    %v2539 = vand.u32 %v2538, 4294901760
    %2540 = vmatmul.mubr.f32.gmra.mrb[0].mxu0 %v2539
    %v2541 = vpop.f32.mrb[0].mxu0
    %v2542 = vadd.f32 %v1962, %v2541
    %v2543 = vpop.f32.mrb[0].mxu0
    %2544 = vmatprep.mubr.f32.mxu0 0.0
    %v2545 = vand.u32 %v271, 4294901760
    %v2546 = vsub.f32 %v271, %v2545
    %v2547 = vand.u32 %v2546, 4294901760
    %2548 = vmatmul.mubr.f32.gmra.mrb[0].mxu0 %v2547
    %v2549 = vpop.f32.mrb[0].mxu0
    %v2550 = vadd.f32 %v1969, %v2549
    %v2551 = vpop.f32.mrb[0].mxu0
    %2552 = vdwg.mxu0
    %2553 = vmatprep.subr.mxu0 0.0
    %v2554 = vand.u32 %v76, 4294901760
    %v2555 = vsub.f32 %v76, %v2554
    %v2556 = vand.u32 %v2555, 4294901760
    %2557 = vmatpush1.msra.mxu0 %v2556
    %2558 = vmatprep.subr.mxu0 0.0
    %v2559 = vand.u32 %v77, 4294901760
    %v2560 = vsub.f32 %v77, %v2559
    %v2561 = vand.u32 %v2560, 4294901760
    %2562 = vmatpush1.msra.mxu0 %v2561
    %2563 = vmatprep.subr.mxu0 0.0
    %v2564 = vand.u32 %v78, 4294901760
    %v2565 = vsub.f32 %v78, %v2564
    %v2566 = vand.u32 %v2565, 4294901760
    %2567 = vmatpush1.msra.mxu0 %v2566
    %2568 = vmatprep.subr.mxu0 0.0
    %v2569 = vand.u32 %v79, 4294901760
    %v2570 = vsub.f32 %v79, %v2569
    %v2571 = vand.u32 %v2570, 4294901760
    %2572 = vmatpush1.msra.mxu0 %v2571
    %2573 = vmatprep.subr.mxu0 0.0
    %2574 = vmatpush1.msra.mxu0 0.0
    %2575 = vmatprep.subr.mxu0 0.0
    %2576 = vmatpush1.msra.mxu0 0.0
    %2577 = vmatprep.subr.mxu0 0.0
    %2578 = vmatpush1.msra.mxu0 0.0
    %2579 = vmatprep.subr.mxu0 0.0
    %2580 = vmatpush1.msra.mxu0 0.0
    %2581 = vmatprep.subr.mxu0 0.0
    %2582 = vmatpush1.msra.mxu0 0.0
    %2583 = vmatprep.subr.mxu0 0.0
    %2584 = vmatpush1.msra.mxu0 0.0
    %2585 = vmatprep.subr.mxu0 0.0
    %2586 = vmatpush1.msra.mxu0 0.0
    %2587 = vmatprep.subr.mxu0 0.0
    %2588 = vmatpush1.msra.mxu0 0.0
    %2589 = vmatprep.subr.mxu0 0.0
    %2590 = vmatpush1.msra.mxu0 0.0
    %2591 = vmatprep.subr.mxu0 0.0
    %2592 = vmatpush1.msra.mxu0 0.0
    %2593 = vmatprep.subr.mxu0 0.0
    %2594 = vmatpush1.msra.mxu0 0.0
    %2595 = vmatprep.subr.mxu0 0.0
    %2596 = vmatpush1.msra.mxu0 0.0
    %2597 = vmatprep.subr.mxu0 0.0
    %2598 = vmatpush1.msra.mxu0 0.0
    %2599 = vmatprep.subr.mxu0 0.0
    %2600 = vmatpush1.msra.mxu0 0.0
    %2601 = vmatprep.subr.mxu0 0.0
    %2602 = vmatpush1.msra.mxu0 0.0
    %2603 = vmatprep.subr.mxu0 0.0
    %2604 = vmatpush1.msra.mxu0 0.0
    %2605 = vmatprep.subr.mxu0 0.0
    %2606 = vmatpush1.msra.mxu0 0.0
    %2607 = vmatprep.subr.mxu0 0.0
    %2608 = vmatpush1.msra.mxu0 0.0
    %2609 = vmatprep.subr.mxu0 0.0
    %2610 = vmatpush1.msra.mxu0 0.0
    %2611 = vmatprep.subr.mxu0 0.0
    %2612 = vmatpush1.msra.mxu0 0.0
    %2613 = vmatprep.subr.mxu0 0.0
    %2614 = vmatpush1.msra.mxu0 0.0
    %2615 = vmatprep.subr.mxu0 0.0
    %2616 = vmatpush1.msra.mxu0 0.0
    %2617 = vmatprep.subr.mxu0 0.0
    %2618 = vmatpush1.msra.mxu0 0.0
    %2619 = vmatprep.subr.mxu0 0.0
    %2620 = vmatpush1.msra.mxu0 0.0
    %2621 = vmatprep.subr.mxu0 0.0
    %2622 = vmatpush1.msra.mxu0 0.0
    %2623 = vmatprep.subr.mxu0 0.0
    %2624 = vmatpush1.msra.mxu0 0.0
    %2625 = vmatprep.subr.mxu0 0.0
    %2626 = vmatpush1.msra.mxu0 0.0
    %2627 = vmatprep.subr.mxu0 0.0
    %2628 = vmatpush1.msra.mxu0 0.0
    %2629 = vmatprep.mubr.f32.mxu0 0.0
    %v2630 = vand.u32 %v82, 4294901760
    %2631 = vmatmul.mubr.f32.gmra.mrb[0].mxu0 %v2630
    %v2632 = vpop.f32.mrb[0].mxu0
    %v2633 = vadd.f32 %v2046, %v2632
    %v2634 = vpop.f32.mrb[0].mxu0
    %2635 = vmatprep.mubr.f32.mxu0 0.0
    %v2636 = vand.u32 %v85, 4294901760
    %2637 = vmatmul.mubr.f32.gmra.mrb[0].mxu0 %v2636
    %v2638 = vpop.f32.mrb[0].mxu0
    %v2639 = vadd.f32 %v2054, %v2638
    %v2640 = vpop.f32.mrb[0].mxu0
    %2641 = vmatprep.mubr.f32.mxu0 0.0
    %v2642 = vand.u32 %v88, 4294901760
    %2643 = vmatmul.mubr.f32.gmra.mrb[0].mxu0 %v2642
    %v2644 = vpop.f32.mrb[0].mxu0
    %v2645 = vadd.f32 %v2062, %v2644
    %v2646 = vpop.f32.mrb[0].mxu0
    %2647 = vmatprep.mubr.f32.mxu0 0.0
    %v2648 = vand.u32 %v91, 4294901760
    %2649 = vmatmul.mubr.f32.gmra.mrb[0].mxu0 %v2648
    %v2650 = vpop.f32.mrb[0].mxu0
    %v2651 = vadd.f32 %v2070, %v2650
    %v2652 = vpop.f32.mrb[0].mxu0
    %2653 = vmatprep.mubr.f32.mxu0 0.0
    %v2654 = vand.u32 %v94, 4294901760
    %2655 = vmatmul.mubr.f32.gmra.mrb[0].mxu0 %v2654
    %v2656 = vpop.f32.mrb[0].mxu0
    %v2657 = vadd.f32 %v2078, %v2656
    %v2658 = vpop.f32.mrb[0].mxu0
    %2659 = vmatprep.mubr.f32.mxu0 0.0
    %v2660 = vand.u32 %v97, 4294901760
    %2661 = vmatmul.mubr.f32.gmra.mrb[0].mxu0 %v2660
    %v2662 = vpop.f32.mrb[0].mxu0
    %v2663 = vadd.f32 %v2086, %v2662
    %v2664 = vpop.f32.mrb[0].mxu0
    %2665 = vmatprep.mubr.f32.mxu0 0.0
    %v2666 = vand.u32 %v100, 4294901760
    %2667 = vmatmul.mubr.f32.gmra.mrb[0].mxu0 %v2666
    %v2668 = vpop.f32.mrb[0].mxu0
    %v2669 = vadd.f32 %v2094, %v2668
    %v2670 = vpop.f32.mrb[0].mxu0
    %2671 = vmatprep.mubr.f32.mxu0 0.0
    %v2672 = vand.u32 %v103, 4294901760
    %2673 = vmatmul.mubr.f32.gmra.mrb[0].mxu0 %v2672
    %v2674 = vpop.f32.mrb[0].mxu0
    %v2675 = vadd.f32 %v2102, %v2674
    %v2676 = vpop.f32.mrb[0].mxu0
    %2677 = vmatprep.mubr.f32.mxu0 0.0
    %v2678 = vand.u32 %v106, 4294901760
    %2679 = vmatmul.mubr.f32.gmra.mrb[0].mxu0 %v2678
    %v2680 = vpop.f32.mrb[0].mxu0
    %v2681 = vadd.f32 %v2110, %v2680
    %v2682 = vpop.f32.mrb[0].mxu0
    %2683 = vmatprep.mubr.f32.mxu0 0.0
    %v2684 = vand.u32 %v109, 4294901760
    %2685 = vmatmul.mubr.f32.gmra.mrb[0].mxu0 %v2684
    %v2686 = vpop.f32.mrb[0].mxu0
    %v2687 = vadd.f32 %v2118, %v2686
    %v2688 = vpop.f32.mrb[0].mxu0
    %2689 = vmatprep.mubr.f32.mxu0 0.0
    %v2690 = vand.u32 %v112, 4294901760
    %2691 = vmatmul.mubr.f32.gmra.mrb[0].mxu0 %v2690
    %v2692 = vpop.f32.mrb[0].mxu0
    %v2693 = vadd.f32 %v2126, %v2692
    %v2694 = vpop.f32.mrb[0].mxu0
    %2695 = vmatprep.mubr.f32.mxu0 0.0
    %v2696 = vand.u32 %v115, 4294901760
    %2697 = vmatmul.mubr.f32.gmra.mrb[0].mxu0 %v2696
    %v2698 = vpop.f32.mrb[0].mxu0
    %v2699 = vadd.f32 %v2134, %v2698
    %v2700 = vpop.f32.mrb[0].mxu0
    %2701 = vmatprep.mubr.f32.mxu0 0.0
    %v2702 = vand.u32 %v118, 4294901760
    %2703 = vmatmul.mubr.f32.gmra.mrb[0].mxu0 %v2702
    %v2704 = vpop.f32.mrb[0].mxu0
    %v2705 = vadd.f32 %v2142, %v2704
    %v2706 = vpop.f32.mrb[0].mxu0
    %2707 = vmatprep.mubr.f32.mxu0 0.0
    %v2708 = vand.u32 %v121, 4294901760
    %2709 = vmatmul.mubr.f32.gmra.mrb[0].mxu0 %v2708
    %v2710 = vpop.f32.mrb[0].mxu0
    %v2711 = vadd.f32 %v2150, %v2710
    %v2712 = vpop.f32.mrb[0].mxu0
    %2713 = vmatprep.mubr.f32.mxu0 0.0
    %v2714 = vand.u32 %v124, 4294901760
    %2715 = vmatmul.mubr.f32.gmra.mrb[0].mxu0 %v2714
    %v2716 = vpop.f32.mrb[0].mxu0
    %v2717 = vadd.f32 %v2158, %v2716
    %v2718 = vpop.f32.mrb[0].mxu0
    %2719 = vmatprep.mubr.f32.mxu0 0.0
    %v2720 = vand.u32 %v127, 4294901760
    %2721 = vmatmul.mubr.f32.gmra.mrb[0].mxu0 %v2720
    %v2722 = vpop.f32.mrb[0].mxu0
    %v2723 = vadd.f32 %v2166, %v2722
    %v2724 = vpop.f32.mrb[0].mxu0
    %2725 = vmatprep.mubr.f32.mxu0 0.0
    %v2726 = vand.u32 %v130, 4294901760
    %2727 = vmatmul.mubr.f32.gmra.mrb[0].mxu0 %v2726
    %v2728 = vpop.f32.mrb[0].mxu0
    %v2729 = vadd.f32 %v2174, %v2728
    %v2730 = vpop.f32.mrb[0].mxu0
    %2731 = vmatprep.mubr.f32.mxu0 0.0
    %v2732 = vand.u32 %v133, 4294901760
    %2733 = vmatmul.mubr.f32.gmra.mrb[0].mxu0 %v2732
    %v2734 = vpop.f32.mrb[0].mxu0
    %v2735 = vadd.f32 %v2182, %v2734
    %v2736 = vpop.f32.mrb[0].mxu0
    %2737 = vmatprep.mubr.f32.mxu0 0.0
    %v2738 = vand.u32 %v136, 4294901760
    %2739 = vmatmul.mubr.f32.gmra.mrb[0].mxu0 %v2738
    %v2740 = vpop.f32.mrb[0].mxu0
    %v2741 = vadd.f32 %v2190, %v2740
    %v2742 = vpop.f32.mrb[0].mxu0
    %2743 = vmatprep.mubr.f32.mxu0 0.0
    %v2744 = vand.u32 %v139, 4294901760
    %2745 = vmatmul.mubr.f32.gmra.mrb[0].mxu0 %v2744
    %v2746 = vpop.f32.mrb[0].mxu0
    %v2747 = vadd.f32 %v2198, %v2746
    %v2748 = vpop.f32.mrb[0].mxu0
    %2749 = vmatprep.mubr.f32.mxu0 0.0
    %v2750 = vand.u32 %v142, 4294901760
    %2751 = vmatmul.mubr.f32.gmra.mrb[0].mxu0 %v2750
    %v2752 = vpop.f32.mrb[0].mxu0
    %v2753 = vadd.f32 %v2206, %v2752
    %v2754 = vpop.f32.mrb[0].mxu0
    %2755 = vmatprep.mubr.f32.mxu0 0.0
    %v2756 = vand.u32 %v145, 4294901760
    %2757 = vmatmul.mubr.f32.gmra.mrb[0].mxu0 %v2756
    %v2758 = vpop.f32.mrb[0].mxu0
    %v2759 = vadd.f32 %v2214, %v2758
    %v2760 = vpop.f32.mrb[0].mxu0
    %2761 = vmatprep.mubr.f32.mxu0 0.0
    %v2762 = vand.u32 %v148, 4294901760
    %2763 = vmatmul.mubr.f32.gmra.mrb[0].mxu0 %v2762
    %v2764 = vpop.f32.mrb[0].mxu0
    %v2765 = vadd.f32 %v2222, %v2764
    %v2766 = vpop.f32.mrb[0].mxu0
    %2767 = vmatprep.mubr.f32.mxu0 0.0
    %v2768 = vand.u32 %v151, 4294901760
    %2769 = vmatmul.mubr.f32.gmra.mrb[0].mxu0 %v2768
    %v2770 = vpop.f32.mrb[0].mxu0
    %v2771 = vadd.f32 %v2230, %v2770
    %v2772 = vpop.f32.mrb[0].mxu0
    %2773 = vmatprep.mubr.f32.mxu0 0.0
    %v2774 = vand.u32 %v154, 4294901760
    %2775 = vmatmul.mubr.f32.gmra.mrb[0].mxu0 %v2774
    %v2776 = vpop.f32.mrb[0].mxu0
    %v2777 = vadd.f32 %v2238, %v2776
    %v2778 = vpop.f32.mrb[0].mxu0
    %2779 = vmatprep.mubr.f32.mxu0 0.0
    %v2780 = vand.u32 %v157, 4294901760
    %2781 = vmatmul.mubr.f32.gmra.mrb[0].mxu0 %v2780
    %v2782 = vpop.f32.mrb[0].mxu0
    %v2783 = vadd.f32 %v2246, %v2782
    %v2784 = vpop.f32.mrb[0].mxu0
    %2785 = vmatprep.mubr.f32.mxu0 0.0
    %v2786 = vand.u32 %v160, 4294901760
    %2787 = vmatmul.mubr.f32.gmra.mrb[0].mxu0 %v2786
    %v2788 = vpop.f32.mrb[0].mxu0
    %v2789 = vadd.f32 %v2254, %v2788
    %v2790 = vpop.f32.mrb[0].mxu0
    %2791 = vmatprep.mubr.f32.mxu0 0.0
    %v2792 = vand.u32 %v163, 4294901760
    %2793 = vmatmul.mubr.f32.gmra.mrb[0].mxu0 %v2792
    %v2794 = vpop.f32.mrb[0].mxu0
    %v2795 = vadd.f32 %v2262, %v2794
    %v2796 = vpop.f32.mrb[0].mxu0
    %2797 = vmatprep.mubr.f32.mxu0 0.0
    %v2798 = vand.u32 %v166, 4294901760
    %2799 = vmatmul.mubr.f32.gmra.mrb[0].mxu0 %v2798
    %v2800 = vpop.f32.mrb[0].mxu0
    %v2801 = vadd.f32 %v2270, %v2800
    %v2802 = vpop.f32.mrb[0].mxu0
    %2803 = vmatprep.mubr.f32.mxu0 0.0
    %v2804 = vand.u32 %v169, 4294901760
    %2805 = vmatmul.mubr.f32.gmra.mrb[0].mxu0 %v2804
    %v2806 = vpop.f32.mrb[0].mxu0
    %v2807 = vadd.f32 %v2278, %v2806
    %v2808 = vpop.f32.mrb[0].mxu0
    %2809 = vmatprep.mubr.f32.mxu0 0.0
    %v2810 = vand.u32 %v172, 4294901760
    %2811 = vmatmul.mubr.f32.gmra.mrb[0].mxu0 %v2810
    %v2812 = vpop.f32.mrb[0].mxu0
    %v2813 = vadd.f32 %v2286, %v2812
    %v2814 = vpop.f32.mrb[0].mxu0
    %2815 = vmatprep.mubr.f32.mxu0 0.0
    %v2816 = vand.u32 %v175, 4294901760
    %2817 = vmatmul.mubr.f32.gmra.mrb[0].mxu0 %v2816
    %v2818 = vpop.f32.mrb[0].mxu0
    %v2819 = vadd.f32 %v2294, %v2818
    %v2820 = vpop.f32.mrb[0].mxu0
    %2821 = vmatprep.mubr.f32.mxu0 0.0
    %v2822 = vand.u32 %v178, 4294901760
    %2823 = vmatmul.mubr.f32.gmra.mrb[0].mxu0 %v2822
    %v2824 = vpop.f32.mrb[0].mxu0
    %v2825 = vadd.f32 %v2302, %v2824
    %v2826 = vpop.f32.mrb[0].mxu0
    %2827 = vmatprep.mubr.f32.mxu0 0.0
    %v2828 = vand.u32 %v181, 4294901760
    %2829 = vmatmul.mubr.f32.gmra.mrb[0].mxu0 %v2828
    %v2830 = vpop.f32.mrb[0].mxu0
    %v2831 = vadd.f32 %v2310, %v2830
    %v2832 = vpop.f32.mrb[0].mxu0
    %2833 = vmatprep.mubr.f32.mxu0 0.0
    %v2834 = vand.u32 %v184, 4294901760
    %2835 = vmatmul.mubr.f32.gmra.mrb[0].mxu0 %v2834
    %v2836 = vpop.f32.mrb[0].mxu0
    %v2837 = vadd.f32 %v2318, %v2836
    %v2838 = vpop.f32.mrb[0].mxu0
    %2839 = vmatprep.mubr.f32.mxu0 0.0
    %v2840 = vand.u32 %v187, 4294901760
    %2841 = vmatmul.mubr.f32.gmra.mrb[0].mxu0 %v2840
    %v2842 = vpop.f32.mrb[0].mxu0
    %v2843 = vadd.f32 %v2326, %v2842
    %v2844 = vpop.f32.mrb[0].mxu0
    %2845 = vmatprep.mubr.f32.mxu0 0.0
    %v2846 = vand.u32 %v190, 4294901760
    %2847 = vmatmul.mubr.f32.gmra.mrb[0].mxu0 %v2846
    %v2848 = vpop.f32.mrb[0].mxu0
    %v2849 = vadd.f32 %v2334, %v2848
    %v2850 = vpop.f32.mrb[0].mxu0
    %2851 = vmatprep.mubr.f32.mxu0 0.0
    %v2852 = vand.u32 %v193, 4294901760
    %2853 = vmatmul.mubr.f32.gmra.mrb[0].mxu0 %v2852
    %v2854 = vpop.f32.mrb[0].mxu0
    %v2855 = vadd.f32 %v2342, %v2854
    %v2856 = vpop.f32.mrb[0].mxu0
    %2857 = vmatprep.mubr.f32.mxu0 0.0
    %v2858 = vand.u32 %v196, 4294901760
    %2859 = vmatmul.mubr.f32.gmra.mrb[0].mxu0 %v2858
    %v2860 = vpop.f32.mrb[0].mxu0
    %v2861 = vadd.f32 %v2350, %v2860
    %v2862 = vpop.f32.mrb[0].mxu0
    %2863 = vmatprep.mubr.f32.mxu0 0.0
    %v2864 = vand.u32 %v199, 4294901760
    %2865 = vmatmul.mubr.f32.gmra.mrb[0].mxu0 %v2864
    %v2866 = vpop.f32.mrb[0].mxu0
    %v2867 = vadd.f32 %v2358, %v2866
    %v2868 = vpop.f32.mrb[0].mxu0
    %2869 = vmatprep.mubr.f32.mxu0 0.0
    %v2870 = vand.u32 %v202, 4294901760
    %2871 = vmatmul.mubr.f32.gmra.mrb[0].mxu0 %v2870
    %v2872 = vpop.f32.mrb[0].mxu0
    %v2873 = vadd.f32 %v2366, %v2872
    %v2874 = vpop.f32.mrb[0].mxu0
    %2875 = vmatprep.mubr.f32.mxu0 0.0
    %v2876 = vand.u32 %v205, 4294901760
    %2877 = vmatmul.mubr.f32.gmra.mrb[0].mxu0 %v2876
    %v2878 = vpop.f32.mrb[0].mxu0
    %v2879 = vadd.f32 %v2374, %v2878
    %v2880 = vpop.f32.mrb[0].mxu0
    %2881 = vmatprep.mubr.f32.mxu0 0.0
    %v2882 = vand.u32 %v208, 4294901760
    %2883 = vmatmul.mubr.f32.gmra.mrb[0].mxu0 %v2882
    %v2884 = vpop.f32.mrb[0].mxu0
    %v2885 = vadd.f32 %v2382, %v2884
    %v2886 = vpop.f32.mrb[0].mxu0
    %2887 = vmatprep.mubr.f32.mxu0 0.0
    %v2888 = vand.u32 %v211, 4294901760
    %2889 = vmatmul.mubr.f32.gmra.mrb[0].mxu0 %v2888
    %v2890 = vpop.f32.mrb[0].mxu0
    %v2891 = vadd.f32 %v2390, %v2890
    %v2892 = vpop.f32.mrb[0].mxu0
    %2893 = vmatprep.mubr.f32.mxu0 0.0
    %v2894 = vand.u32 %v214, 4294901760
    %2895 = vmatmul.mubr.f32.gmra.mrb[0].mxu0 %v2894
    %v2896 = vpop.f32.mrb[0].mxu0
    %v2897 = vadd.f32 %v2398, %v2896
    %v2898 = vpop.f32.mrb[0].mxu0
    %2899 = vmatprep.mubr.f32.mxu0 0.0
    %v2900 = vand.u32 %v217, 4294901760
    %2901 = vmatmul.mubr.f32.gmra.mrb[0].mxu0 %v2900
    %v2902 = vpop.f32.mrb[0].mxu0
    %v2903 = vadd.f32 %v2406, %v2902
    %v2904 = vpop.f32.mrb[0].mxu0
    %2905 = vmatprep.mubr.f32.mxu0 0.0
    %v2906 = vand.u32 %v220, 4294901760
    %2907 = vmatmul.mubr.f32.gmra.mrb[0].mxu0 %v2906
    %v2908 = vpop.f32.mrb[0].mxu0
    %v2909 = vadd.f32 %v2414, %v2908
    %v2910 = vpop.f32.mrb[0].mxu0
    %2911 = vmatprep.mubr.f32.mxu0 0.0
    %v2912 = vand.u32 %v223, 4294901760
    %2913 = vmatmul.mubr.f32.gmra.mrb[0].mxu0 %v2912
    %v2914 = vpop.f32.mrb[0].mxu0
    %v2915 = vadd.f32 %v2422, %v2914
    %v2916 = vpop.f32.mrb[0].mxu0
    %2917 = vmatprep.mubr.f32.mxu0 0.0
    %v2918 = vand.u32 %v226, 4294901760
    %2919 = vmatmul.mubr.f32.gmra.mrb[0].mxu0 %v2918
    %v2920 = vpop.f32.mrb[0].mxu0
    %v2921 = vadd.f32 %v2430, %v2920
    %v2922 = vpop.f32.mrb[0].mxu0
    %2923 = vmatprep.mubr.f32.mxu0 0.0
    %v2924 = vand.u32 %v229, 4294901760
    %2925 = vmatmul.mubr.f32.gmra.mrb[0].mxu0 %v2924
    %v2926 = vpop.f32.mrb[0].mxu0
    %v2927 = vadd.f32 %v2438, %v2926
    %v2928 = vpop.f32.mrb[0].mxu0
    %2929 = vmatprep.mubr.f32.mxu0 0.0
    %v2930 = vand.u32 %v232, 4294901760
    %2931 = vmatmul.mubr.f32.gmra.mrb[0].mxu0 %v2930
    %v2932 = vpop.f32.mrb[0].mxu0
    %v2933 = vadd.f32 %v2446, %v2932
    %v2934 = vpop.f32.mrb[0].mxu0
    %2935 = vmatprep.mubr.f32.mxu0 0.0
    %v2936 = vand.u32 %v235, 4294901760
    %2937 = vmatmul.mubr.f32.gmra.mrb[0].mxu0 %v2936
    %v2938 = vpop.f32.mrb[0].mxu0
    %v2939 = vadd.f32 %v2454, %v2938
    %v2940 = vpop.f32.mrb[0].mxu0
    %2941 = vmatprep.mubr.f32.mxu0 0.0
    %v2942 = vand.u32 %v238, 4294901760
    %2943 = vmatmul.mubr.f32.gmra.mrb[0].mxu0 %v2942
    %v2944 = vpop.f32.mrb[0].mxu0
    %v2945 = vadd.f32 %v2462, %v2944
    %v2946 = vpop.f32.mrb[0].mxu0
    %2947 = vmatprep.mubr.f32.mxu0 0.0
    %v2948 = vand.u32 %v241, 4294901760
    %2949 = vmatmul.mubr.f32.gmra.mrb[0].mxu0 %v2948
    %v2950 = vpop.f32.mrb[0].mxu0
    %v2951 = vadd.f32 %v2470, %v2950
    %v2952 = vpop.f32.mrb[0].mxu0
    %2953 = vmatprep.mubr.f32.mxu0 0.0
    %v2954 = vand.u32 %v244, 4294901760
    %2955 = vmatmul.mubr.f32.gmra.mrb[0].mxu0 %v2954
    %v2956 = vpop.f32.mrb[0].mxu0
    %v2957 = vadd.f32 %v2478, %v2956
    %v2958 = vpop.f32.mrb[0].mxu0
    %2959 = vmatprep.mubr.f32.mxu0 0.0
    %v2960 = vand.u32 %v247, 4294901760
    %2961 = vmatmul.mubr.f32.gmra.mrb[0].mxu0 %v2960
    %v2962 = vpop.f32.mrb[0].mxu0
    %v2963 = vadd.f32 %v2486, %v2962
    %v2964 = vpop.f32.mrb[0].mxu0
    %2965 = vmatprep.mubr.f32.mxu0 0.0
    %v2966 = vand.u32 %v250, 4294901760
    %2967 = vmatmul.mubr.f32.gmra.mrb[0].mxu0 %v2966
    %v2968 = vpop.f32.mrb[0].mxu0
    %v2969 = vadd.f32 %v2494, %v2968
    %v2970 = vpop.f32.mrb[0].mxu0
    %2971 = vmatprep.mubr.f32.mxu0 0.0
    %v2972 = vand.u32 %v253, 4294901760
    %2973 = vmatmul.mubr.f32.gmra.mrb[0].mxu0 %v2972
    %v2974 = vpop.f32.mrb[0].mxu0
    %v2975 = vadd.f32 %v2502, %v2974
    %v2976 = vpop.f32.mrb[0].mxu0
    %2977 = vmatprep.mubr.f32.mxu0 0.0
    %v2978 = vand.u32 %v256, 4294901760
    %2979 = vmatmul.mubr.f32.gmra.mrb[0].mxu0 %v2978
    %v2980 = vpop.f32.mrb[0].mxu0
    %v2981 = vadd.f32 %v2510, %v2980
    %v2982 = vpop.f32.mrb[0].mxu0
    %2983 = vmatprep.mubr.f32.mxu0 0.0
    %v2984 = vand.u32 %v259, 4294901760
    %2985 = vmatmul.mubr.f32.gmra.mrb[0].mxu0 %v2984
    %v2986 = vpop.f32.mrb[0].mxu0
    %v2987 = vadd.f32 %v2518, %v2986
    %v2988 = vpop.f32.mrb[0].mxu0
    %2989 = vmatprep.mubr.f32.mxu0 0.0
    %v2990 = vand.u32 %v262, 4294901760
    %2991 = vmatmul.mubr.f32.gmra.mrb[0].mxu0 %v2990
    %v2992 = vpop.f32.mrb[0].mxu0
    %v2993 = vadd.f32 %v2526, %v2992
    %v2994 = vpop.f32.mrb[0].mxu0
    %2995 = vmatprep.mubr.f32.mxu0 0.0
    %v2996 = vand.u32 %v265, 4294901760
    %2997 = vmatmul.mubr.f32.gmra.mrb[0].mxu0 %v2996
    %v2998 = vpop.f32.mrb[0].mxu0
    %v2999 = vadd.f32 %v2534, %v2998
    %v3000 = vpop.f32.mrb[0].mxu0
    %3001 = vmatprep.mubr.f32.mxu0 0.0
    %v3002 = vand.u32 %v268, 4294901760
    %3003 = vmatmul.mubr.f32.gmra.mrb[0].mxu0 %v3002
    %v3004 = vpop.f32.mrb[0].mxu0
    %v3005 = vadd.f32 %v2542, %v3004
    %v3006 = vpop.f32.mrb[0].mxu0
    %3007 = vmatprep.mubr.f32.mxu0 0.0
    %v3008 = vand.u32 %v271, 4294901760
    %3009 = vmatmul.mubr.f32.gmra.mrb[0].mxu0 %v3008
    %v3010 = vpop.f32.mrb[0].mxu0
    %v3011 = vadd.f32 %v2550, %v3010
    %v3012 = vpop.f32.mrb[0].mxu0
    %3013 = vdwg.mxu0
    %3014 = vmatprep.subr.mxu0 0.0
    %v3015 = vand.u32 %v76, 4294901760
    %3016 = vmatpush1.msra.mxu0 %v3015
    %3017 = vmatprep.subr.mxu0 0.0
    %v3018 = vand.u32 %v77, 4294901760
    %3019 = vmatpush1.msra.mxu0 %v3018
    %3020 = vmatprep.subr.mxu0 0.0
    %v3021 = vand.u32 %v78, 4294901760
    %3022 = vmatpush1.msra.mxu0 %v3021
    %3023 = vmatprep.subr.mxu0 0.0
    %v3024 = vand.u32 %v79, 4294901760
    %3025 = vmatpush1.msra.mxu0 %v3024
    %3026 = vmatprep.subr.mxu0 0.0
    %3027 = vmatpush1.msra.mxu0 0.0
    %3028 = vmatprep.subr.mxu0 0.0
    %3029 = vmatpush1.msra.mxu0 0.0
    %3030 = vmatprep.subr.mxu0 0.0
    %3031 = vmatpush1.msra.mxu0 0.0
    %3032 = vmatprep.subr.mxu0 0.0
    %3033 = vmatpush1.msra.mxu0 0.0
    %3034 = vmatprep.subr.mxu0 0.0
    %3035 = vmatpush1.msra.mxu0 0.0
    %3036 = vmatprep.subr.mxu0 0.0
    %3037 = vmatpush1.msra.mxu0 0.0
    %3038 = vmatprep.subr.mxu0 0.0
    %3039 = vmatpush1.msra.mxu0 0.0
    %3040 = vmatprep.subr.mxu0 0.0
    %3041 = vmatpush1.msra.mxu0 0.0
    %3042 = vmatprep.subr.mxu0 0.0
    %3043 = vmatpush1.msra.mxu0 0.0
    %3044 = vmatprep.subr.mxu0 0.0
    %3045 = vmatpush1.msra.mxu0 0.0
    %3046 = vmatprep.subr.mxu0 0.0
    %3047 = vmatpush1.msra.mxu0 0.0
    %3048 = vmatprep.subr.mxu0 0.0
    %3049 = vmatpush1.msra.mxu0 0.0
    %3050 = vmatprep.subr.mxu0 0.0
    %3051 = vmatpush1.msra.mxu0 0.0
    %3052 = vmatprep.subr.mxu0 0.0
    %3053 = vmatpush1.msra.mxu0 0.0
    %3054 = vmatprep.subr.mxu0 0.0
    %3055 = vmatpush1.msra.mxu0 0.0
    %3056 = vmatprep.subr.mxu0 0.0
    %3057 = vmatpush1.msra.mxu0 0.0
    %3058 = vmatprep.subr.mxu0 0.0
    %3059 = vmatpush1.msra.mxu0 0.0
    %3060 = vmatprep.subr.mxu0 0.0
    %3061 = vmatpush1.msra.mxu0 0.0
    %3062 = vmatprep.subr.mxu0 0.0
    %3063 = vmatpush1.msra.mxu0 0.0
    %3064 = vmatprep.subr.mxu0 0.0
    %3065 = vmatpush1.msra.mxu0 0.0
    %3066 = vmatprep.subr.mxu0 0.0
    %3067 = vmatpush1.msra.mxu0 0.0
    %3068 = vmatprep.subr.mxu0 0.0
    %3069 = vmatpush1.msra.mxu0 0.0
    %3070 = vmatprep.subr.mxu0 0.0
    %3071 = vmatpush1.msra.mxu0 0.0
    %3072 = vmatprep.subr.mxu0 0.0
    %3073 = vmatpush1.msra.mxu0 0.0
    %3074 = vmatprep.subr.mxu0 0.0
    %3075 = vmatpush1.msra.mxu0 0.0
    %3076 = vmatprep.subr.mxu0 0.0
    %3077 = vmatpush1.msra.mxu0 0.0
    %3078 = vmatprep.subr.mxu0 0.0
    %3079 = vmatpush1.msra.mxu0 0.0
    %3080 = vmatprep.subr.mxu0 0.0
    %3081 = vmatpush1.msra.mxu0 0.0
    %3082 = vmatprep.mubr.f32.mxu0 0.0
    %v3083 = vand.u32 %v82, 4294901760
    %3084 = vmatmul.mubr.f32.gmra.mrb[0].mxu0 %v3083
    %v3085 = vpop.f32.mrb[0].mxu0
    %v3086 = vadd.f32 %v2633, %v3085
    %v3087 = vpop.f32.mrb[0].mxu0
    %3088 = vmatprep.mubr.f32.mxu0 0.0
    %v3089 = vand.u32 %v85, 4294901760
    %3090 = vmatmul.mubr.f32.gmra.mrb[0].mxu0 %v3089
    %v3091 = vpop.f32.mrb[0].mxu0
    %v3092 = vadd.f32 %v2639, %v3091
    %v3093 = vpop.f32.mrb[0].mxu0
    %3094 = vmatprep.mubr.f32.mxu0 0.0
    %v3095 = vand.u32 %v88, 4294901760
    %3096 = vmatmul.mubr.f32.gmra.mrb[0].mxu0 %v3095
    %v3097 = vpop.f32.mrb[0].mxu0
    %v3098 = vadd.f32 %v2645, %v3097
    %v3099 = vpop.f32.mrb[0].mxu0
    %3100 = vmatprep.mubr.f32.mxu0 0.0
    %v3101 = vand.u32 %v91, 4294901760
    %3102 = vmatmul.mubr.f32.gmra.mrb[0].mxu0 %v3101
    %v3103 = vpop.f32.mrb[0].mxu0
    %v3104 = vadd.f32 %v2651, %v3103
    %v3105 = vpop.f32.mrb[0].mxu0
    %3106 = vmatprep.mubr.f32.mxu0 0.0
    %v3107 = vand.u32 %v94, 4294901760
    %3108 = vmatmul.mubr.f32.gmra.mrb[0].mxu0 %v3107
    %v3109 = vpop.f32.mrb[0].mxu0
    %v3110 = vadd.f32 %v2657, %v3109
    %v3111 = vpop.f32.mrb[0].mxu0
    %3112 = vmatprep.mubr.f32.mxu0 0.0
    %v3113 = vand.u32 %v97, 4294901760
    %3114 = vmatmul.mubr.f32.gmra.mrb[0].mxu0 %v3113
    %v3115 = vpop.f32.mrb[0].mxu0
    %v3116 = vadd.f32 %v2663, %v3115
    %v3117 = vpop.f32.mrb[0].mxu0
    %3118 = vmatprep.mubr.f32.mxu0 0.0
    %v3119 = vand.u32 %v100, 4294901760
    %3120 = vmatmul.mubr.f32.gmra.mrb[0].mxu0 %v3119
    %v3121 = vpop.f32.mrb[0].mxu0
    %v3122 = vadd.f32 %v2669, %v3121
    %v3123 = vpop.f32.mrb[0].mxu0
    %3124 = vmatprep.mubr.f32.mxu0 0.0
    %v3125 = vand.u32 %v103, 4294901760
    %3126 = vmatmul.mubr.f32.gmra.mrb[0].mxu0 %v3125
    %v3127 = vpop.f32.mrb[0].mxu0
    %v3128 = vadd.f32 %v2675, %v3127
    %v3129 = vpop.f32.mrb[0].mxu0
    %3130 = vmatprep.mubr.f32.mxu0 0.0
    %v3131 = vand.u32 %v106, 4294901760
    %3132 = vmatmul.mubr.f32.gmra.mrb[0].mxu0 %v3131
    %v3133 = vpop.f32.mrb[0].mxu0
    %v3134 = vadd.f32 %v2681, %v3133
    %v3135 = vpop.f32.mrb[0].mxu0
    %3136 = vmatprep.mubr.f32.mxu0 0.0
    %v3137 = vand.u32 %v109, 4294901760
    %3138 = vmatmul.mubr.f32.gmra.mrb[0].mxu0 %v3137
    %v3139 = vpop.f32.mrb[0].mxu0
    %v3140 = vadd.f32 %v2687, %v3139
    %v3141 = vpop.f32.mrb[0].mxu0
    %3142 = vmatprep.mubr.f32.mxu0 0.0
    %v3143 = vand.u32 %v112, 4294901760
    %3144 = vmatmul.mubr.f32.gmra.mrb[0].mxu0 %v3143
    %v3145 = vpop.f32.mrb[0].mxu0
    %v3146 = vadd.f32 %v2693, %v3145
    %v3147 = vpop.f32.mrb[0].mxu0
    %3148 = vmatprep.mubr.f32.mxu0 0.0
    %v3149 = vand.u32 %v115, 4294901760
    %3150 = vmatmul.mubr.f32.gmra.mrb[0].mxu0 %v3149
    %v3151 = vpop.f32.mrb[0].mxu0
    %v3152 = vadd.f32 %v2699, %v3151
    %v3153 = vpop.f32.mrb[0].mxu0
    %3154 = vmatprep.mubr.f32.mxu0 0.0
    %v3155 = vand.u32 %v118, 4294901760
    %3156 = vmatmul.mubr.f32.gmra.mrb[0].mxu0 %v3155
    %v3157 = vpop.f32.mrb[0].mxu0
    %v3158 = vadd.f32 %v2705, %v3157
    %v3159 = vpop.f32.mrb[0].mxu0
    %3160 = vmatprep.mubr.f32.mxu0 0.0
    %v3161 = vand.u32 %v121, 4294901760
    %3162 = vmatmul.mubr.f32.gmra.mrb[0].mxu0 %v3161
    %v3163 = vpop.f32.mrb[0].mxu0
    %v3164 = vadd.f32 %v2711, %v3163
    %v3165 = vpop.f32.mrb[0].mxu0
    %3166 = vmatprep.mubr.f32.mxu0 0.0
    %v3167 = vand.u32 %v124, 4294901760
    %3168 = vmatmul.mubr.f32.gmra.mrb[0].mxu0 %v3167
    %v3169 = vpop.f32.mrb[0].mxu0
    %v3170 = vadd.f32 %v2717, %v3169
    %v3171 = vpop.f32.mrb[0].mxu0
    %3172 = vmatprep.mubr.f32.mxu0 0.0
    %v3173 = vand.u32 %v127, 4294901760
    %3174 = vmatmul.mubr.f32.gmra.mrb[0].mxu0 %v3173
    %v3175 = vpop.f32.mrb[0].mxu0
    %v3176 = vadd.f32 %v2723, %v3175
    %v3177 = vpop.f32.mrb[0].mxu0
    %3178 = vmatprep.mubr.f32.mxu0 0.0
    %v3179 = vand.u32 %v130, 4294901760
    %3180 = vmatmul.mubr.f32.gmra.mrb[0].mxu0 %v3179
    %v3181 = vpop.f32.mrb[0].mxu0
    %v3182 = vadd.f32 %v2729, %v3181
    %v3183 = vpop.f32.mrb[0].mxu0
    %3184 = vmatprep.mubr.f32.mxu0 0.0
    %v3185 = vand.u32 %v133, 4294901760
    %3186 = vmatmul.mubr.f32.gmra.mrb[0].mxu0 %v3185
    %v3187 = vpop.f32.mrb[0].mxu0
    %v3188 = vadd.f32 %v2735, %v3187
    %v3189 = vpop.f32.mrb[0].mxu0
    %3190 = vmatprep.mubr.f32.mxu0 0.0
    %v3191 = vand.u32 %v136, 4294901760
    %3192 = vmatmul.mubr.f32.gmra.mrb[0].mxu0 %v3191
    %v3193 = vpop.f32.mrb[0].mxu0
    %v3194 = vadd.f32 %v2741, %v3193
    %v3195 = vpop.f32.mrb[0].mxu0
    %3196 = vmatprep.mubr.f32.mxu0 0.0
    %v3197 = vand.u32 %v139, 4294901760
    %3198 = vmatmul.mubr.f32.gmra.mrb[0].mxu0 %v3197
    %v3199 = vpop.f32.mrb[0].mxu0
    %v3200 = vadd.f32 %v2747, %v3199
    %v3201 = vpop.f32.mrb[0].mxu0
    %3202 = vmatprep.mubr.f32.mxu0 0.0
    %v3203 = vand.u32 %v142, 4294901760
    %3204 = vmatmul.mubr.f32.gmra.mrb[0].mxu0 %v3203
    %v3205 = vpop.f32.mrb[0].mxu0
    %v3206 = vadd.f32 %v2753, %v3205
    %v3207 = vpop.f32.mrb[0].mxu0
    %3208 = vmatprep.mubr.f32.mxu0 0.0
    %v3209 = vand.u32 %v145, 4294901760
    %3210 = vmatmul.mubr.f32.gmra.mrb[0].mxu0 %v3209
    %v3211 = vpop.f32.mrb[0].mxu0
    %v3212 = vadd.f32 %v2759, %v3211
    %v3213 = vpop.f32.mrb[0].mxu0
    %3214 = vmatprep.mubr.f32.mxu0 0.0
    %v3215 = vand.u32 %v148, 4294901760
    %3216 = vmatmul.mubr.f32.gmra.mrb[0].mxu0 %v3215
    %v3217 = vpop.f32.mrb[0].mxu0
    %v3218 = vadd.f32 %v2765, %v3217
    %v3219 = vpop.f32.mrb[0].mxu0
    %3220 = vmatprep.mubr.f32.mxu0 0.0
    %v3221 = vand.u32 %v151, 4294901760
    %3222 = vmatmul.mubr.f32.gmra.mrb[0].mxu0 %v3221
    %v3223 = vpop.f32.mrb[0].mxu0
    %v3224 = vadd.f32 %v2771, %v3223
    %v3225 = vpop.f32.mrb[0].mxu0
    %3226 = vmatprep.mubr.f32.mxu0 0.0
    %v3227 = vand.u32 %v154, 4294901760
    %3228 = vmatmul.mubr.f32.gmra.mrb[0].mxu0 %v3227
    %v3229 = vpop.f32.mrb[0].mxu0
    %v3230 = vadd.f32 %v2777, %v3229
    %v3231 = vpop.f32.mrb[0].mxu0
    %3232 = vmatprep.mubr.f32.mxu0 0.0
    %v3233 = vand.u32 %v157, 4294901760
    %3234 = vmatmul.mubr.f32.gmra.mrb[0].mxu0 %v3233
    %v3235 = vpop.f32.mrb[0].mxu0
    %v3236 = vadd.f32 %v2783, %v3235
    %v3237 = vpop.f32.mrb[0].mxu0
    %3238 = vmatprep.mubr.f32.mxu0 0.0
    %v3239 = vand.u32 %v160, 4294901760
    %3240 = vmatmul.mubr.f32.gmra.mrb[0].mxu0 %v3239
    %v3241 = vpop.f32.mrb[0].mxu0
    %v3242 = vadd.f32 %v2789, %v3241
    %v3243 = vpop.f32.mrb[0].mxu0
    %3244 = vmatprep.mubr.f32.mxu0 0.0
    %v3245 = vand.u32 %v163, 4294901760
    %3246 = vmatmul.mubr.f32.gmra.mrb[0].mxu0 %v3245
    %v3247 = vpop.f32.mrb[0].mxu0
    %v3248 = vadd.f32 %v2795, %v3247
    %v3249 = vpop.f32.mrb[0].mxu0
    %3250 = vmatprep.mubr.f32.mxu0 0.0
    %v3251 = vand.u32 %v166, 4294901760
    %3252 = vmatmul.mubr.f32.gmra.mrb[0].mxu0 %v3251
    %v3253 = vpop.f32.mrb[0].mxu0
    %v3254 = vadd.f32 %v2801, %v3253
    %v3255 = vpop.f32.mrb[0].mxu0
    %3256 = vmatprep.mubr.f32.mxu0 0.0
    %v3257 = vand.u32 %v169, 4294901760
    %3258 = vmatmul.mubr.f32.gmra.mrb[0].mxu0 %v3257
    %v3259 = vpop.f32.mrb[0].mxu0
    %v3260 = vadd.f32 %v2807, %v3259
    %v3261 = vpop.f32.mrb[0].mxu0
    %3262 = vmatprep.mubr.f32.mxu0 0.0
    %v3263 = vand.u32 %v172, 4294901760
    %3264 = vmatmul.mubr.f32.gmra.mrb[0].mxu0 %v3263
    %v3265 = vpop.f32.mrb[0].mxu0
    %v3266 = vadd.f32 %v2813, %v3265
    %v3267 = vpop.f32.mrb[0].mxu0
    %3268 = vmatprep.mubr.f32.mxu0 0.0
    %v3269 = vand.u32 %v175, 4294901760
    %3270 = vmatmul.mubr.f32.gmra.mrb[0].mxu0 %v3269
    %v3271 = vpop.f32.mrb[0].mxu0
    %v3272 = vadd.f32 %v2819, %v3271
    %v3273 = vpop.f32.mrb[0].mxu0
    %3274 = vmatprep.mubr.f32.mxu0 0.0
    %v3275 = vand.u32 %v178, 4294901760
    %3276 = vmatmul.mubr.f32.gmra.mrb[0].mxu0 %v3275
    %v3277 = vpop.f32.mrb[0].mxu0
    %v3278 = vadd.f32 %v2825, %v3277
    %v3279 = vpop.f32.mrb[0].mxu0
    %3280 = vmatprep.mubr.f32.mxu0 0.0
    %v3281 = vand.u32 %v181, 4294901760
    %3282 = vmatmul.mubr.f32.gmra.mrb[0].mxu0 %v3281
    %v3283 = vpop.f32.mrb[0].mxu0
    %v3284 = vadd.f32 %v2831, %v3283
    %v3285 = vpop.f32.mrb[0].mxu0
    %3286 = vmatprep.mubr.f32.mxu0 0.0
    %v3287 = vand.u32 %v184, 4294901760
    %3288 = vmatmul.mubr.f32.gmra.mrb[0].mxu0 %v3287
    %v3289 = vpop.f32.mrb[0].mxu0
    %v3290 = vadd.f32 %v2837, %v3289
    %v3291 = vpop.f32.mrb[0].mxu0
    %3292 = vmatprep.mubr.f32.mxu0 0.0
    %v3293 = vand.u32 %v187, 4294901760
    %3294 = vmatmul.mubr.f32.gmra.mrb[0].mxu0 %v3293
    %v3295 = vpop.f32.mrb[0].mxu0
    %v3296 = vadd.f32 %v2843, %v3295
    %v3297 = vpop.f32.mrb[0].mxu0
    %3298 = vmatprep.mubr.f32.mxu0 0.0
    %v3299 = vand.u32 %v190, 4294901760
    %3300 = vmatmul.mubr.f32.gmra.mrb[0].mxu0 %v3299
    %v3301 = vpop.f32.mrb[0].mxu0
    %v3302 = vadd.f32 %v2849, %v3301
    %v3303 = vpop.f32.mrb[0].mxu0
    %3304 = vmatprep.mubr.f32.mxu0 0.0
    %v3305 = vand.u32 %v193, 4294901760
    %3306 = vmatmul.mubr.f32.gmra.mrb[0].mxu0 %v3305
    %v3307 = vpop.f32.mrb[0].mxu0
    %v3308 = vadd.f32 %v2855, %v3307
    %v3309 = vpop.f32.mrb[0].mxu0
    %3310 = vmatprep.mubr.f32.mxu0 0.0
    %v3311 = vand.u32 %v196, 4294901760
    %3312 = vmatmul.mubr.f32.gmra.mrb[0].mxu0 %v3311
    %v3313 = vpop.f32.mrb[0].mxu0
    %v3314 = vadd.f32 %v2861, %v3313
    %v3315 = vpop.f32.mrb[0].mxu0
    %3316 = vmatprep.mubr.f32.mxu0 0.0
    %v3317 = vand.u32 %v199, 4294901760
    %3318 = vmatmul.mubr.f32.gmra.mrb[0].mxu0 %v3317
    %v3319 = vpop.f32.mrb[0].mxu0
    %v3320 = vadd.f32 %v2867, %v3319
    %v3321 = vpop.f32.mrb[0].mxu0
    %3322 = vmatprep.mubr.f32.mxu0 0.0
    %v3323 = vand.u32 %v202, 4294901760
    %3324 = vmatmul.mubr.f32.gmra.mrb[0].mxu0 %v3323
    %v3325 = vpop.f32.mrb[0].mxu0
    %v3326 = vadd.f32 %v2873, %v3325
    %v3327 = vpop.f32.mrb[0].mxu0
    %3328 = vmatprep.mubr.f32.mxu0 0.0
    %v3329 = vand.u32 %v205, 4294901760
    %3330 = vmatmul.mubr.f32.gmra.mrb[0].mxu0 %v3329
    %v3331 = vpop.f32.mrb[0].mxu0
    %v3332 = vadd.f32 %v2879, %v3331
    %v3333 = vpop.f32.mrb[0].mxu0
    %3334 = vmatprep.mubr.f32.mxu0 0.0
    %v3335 = vand.u32 %v208, 4294901760
    %3336 = vmatmul.mubr.f32.gmra.mrb[0].mxu0 %v3335
    %v3337 = vpop.f32.mrb[0].mxu0
    %v3338 = vadd.f32 %v2885, %v3337
    %v3339 = vpop.f32.mrb[0].mxu0
    %3340 = vmatprep.mubr.f32.mxu0 0.0
    %v3341 = vand.u32 %v211, 4294901760
    %3342 = vmatmul.mubr.f32.gmra.mrb[0].mxu0 %v3341
    %v3343 = vpop.f32.mrb[0].mxu0
    %v3344 = vadd.f32 %v2891, %v3343
    %v3345 = vpop.f32.mrb[0].mxu0
    %3346 = vmatprep.mubr.f32.mxu0 0.0
    %v3347 = vand.u32 %v214, 4294901760
    %3348 = vmatmul.mubr.f32.gmra.mrb[0].mxu0 %v3347
    %v3349 = vpop.f32.mrb[0].mxu0
    %v3350 = vadd.f32 %v2897, %v3349
    %v3351 = vpop.f32.mrb[0].mxu0
    %3352 = vmatprep.mubr.f32.mxu0 0.0
    %v3353 = vand.u32 %v217, 4294901760
    %3354 = vmatmul.mubr.f32.gmra.mrb[0].mxu0 %v3353
    %v3355 = vpop.f32.mrb[0].mxu0
    %v3356 = vadd.f32 %v2903, %v3355
    %v3357 = vpop.f32.mrb[0].mxu0
    %3358 = vmatprep.mubr.f32.mxu0 0.0
    %v3359 = vand.u32 %v220, 4294901760
    %3360 = vmatmul.mubr.f32.gmra.mrb[0].mxu0 %v3359
    %v3361 = vpop.f32.mrb[0].mxu0
    %v3362 = vadd.f32 %v2909, %v3361
    %v3363 = vpop.f32.mrb[0].mxu0
    %3364 = vmatprep.mubr.f32.mxu0 0.0
    %v3365 = vand.u32 %v223, 4294901760
    %3366 = vmatmul.mubr.f32.gmra.mrb[0].mxu0 %v3365
    %v3367 = vpop.f32.mrb[0].mxu0
    %v3368 = vadd.f32 %v2915, %v3367
    %v3369 = vpop.f32.mrb[0].mxu0
    %3370 = vmatprep.mubr.f32.mxu0 0.0
    %v3371 = vand.u32 %v226, 4294901760
    %3372 = vmatmul.mubr.f32.gmra.mrb[0].mxu0 %v3371
    %v3373 = vpop.f32.mrb[0].mxu0
    %v3374 = vadd.f32 %v2921, %v3373
    %v3375 = vpop.f32.mrb[0].mxu0
    %3376 = vmatprep.mubr.f32.mxu0 0.0
    %v3377 = vand.u32 %v229, 4294901760
    %3378 = vmatmul.mubr.f32.gmra.mrb[0].mxu0 %v3377
    %v3379 = vpop.f32.mrb[0].mxu0
    %v3380 = vadd.f32 %v2927, %v3379
    %v3381 = vpop.f32.mrb[0].mxu0
    %3382 = vmatprep.mubr.f32.mxu0 0.0
    %v3383 = vand.u32 %v232, 4294901760
    %3384 = vmatmul.mubr.f32.gmra.mrb[0].mxu0 %v3383
    %v3385 = vpop.f32.mrb[0].mxu0
    %v3386 = vadd.f32 %v2933, %v3385
    %v3387 = vpop.f32.mrb[0].mxu0
    %3388 = vmatprep.mubr.f32.mxu0 0.0
    %v3389 = vand.u32 %v235, 4294901760
    %3390 = vmatmul.mubr.f32.gmra.mrb[0].mxu0 %v3389
    %v3391 = vpop.f32.mrb[0].mxu0
    %v3392 = vadd.f32 %v2939, %v3391
    %v3393 = vpop.f32.mrb[0].mxu0
    %3394 = vmatprep.mubr.f32.mxu0 0.0
    %v3395 = vand.u32 %v238, 4294901760
    %3396 = vmatmul.mubr.f32.gmra.mrb[0].mxu0 %v3395
    %v3397 = vpop.f32.mrb[0].mxu0
    %v3398 = vadd.f32 %v2945, %v3397
    %v3399 = vpop.f32.mrb[0].mxu0
    %3400 = vmatprep.mubr.f32.mxu0 0.0
    %v3401 = vand.u32 %v241, 4294901760
    %3402 = vmatmul.mubr.f32.gmra.mrb[0].mxu0 %v3401
    %v3403 = vpop.f32.mrb[0].mxu0
    %v3404 = vadd.f32 %v2951, %v3403
    %v3405 = vpop.f32.mrb[0].mxu0
    %3406 = vmatprep.mubr.f32.mxu0 0.0
    %v3407 = vand.u32 %v244, 4294901760
    %3408 = vmatmul.mubr.f32.gmra.mrb[0].mxu0 %v3407
    %v3409 = vpop.f32.mrb[0].mxu0
    %v3410 = vadd.f32 %v2957, %v3409
    %v3411 = vpop.f32.mrb[0].mxu0
    %3412 = vmatprep.mubr.f32.mxu0 0.0
    %v3413 = vand.u32 %v247, 4294901760
    %3414 = vmatmul.mubr.f32.gmra.mrb[0].mxu0 %v3413
    %v3415 = vpop.f32.mrb[0].mxu0
    %v3416 = vadd.f32 %v2963, %v3415
    %v3417 = vpop.f32.mrb[0].mxu0
    %3418 = vmatprep.mubr.f32.mxu0 0.0
    %v3419 = vand.u32 %v250, 4294901760
    %3420 = vmatmul.mubr.f32.gmra.mrb[0].mxu0 %v3419
    %v3421 = vpop.f32.mrb[0].mxu0
    %v3422 = vadd.f32 %v2969, %v3421
    %v3423 = vpop.f32.mrb[0].mxu0
    %3424 = vmatprep.mubr.f32.mxu0 0.0
    %v3425 = vand.u32 %v253, 4294901760
    %3426 = vmatmul.mubr.f32.gmra.mrb[0].mxu0 %v3425
    %v3427 = vpop.f32.mrb[0].mxu0
    %v3428 = vadd.f32 %v2975, %v3427
    %v3429 = vpop.f32.mrb[0].mxu0
    %3430 = vmatprep.mubr.f32.mxu0 0.0
    %v3431 = vand.u32 %v256, 4294901760
    %3432 = vmatmul.mubr.f32.gmra.mrb[0].mxu0 %v3431
    %v3433 = vpop.f32.mrb[0].mxu0
    %v3434 = vadd.f32 %v2981, %v3433
    %v3435 = vpop.f32.mrb[0].mxu0
    %3436 = vmatprep.mubr.f32.mxu0 0.0
    %v3437 = vand.u32 %v259, 4294901760
    %3438 = vmatmul.mubr.f32.gmra.mrb[0].mxu0 %v3437
    %v3439 = vpop.f32.mrb[0].mxu0
    %v3440 = vadd.f32 %v2987, %v3439
    %v3441 = vpop.f32.mrb[0].mxu0
    %3442 = vmatprep.mubr.f32.mxu0 0.0
    %v3443 = vand.u32 %v262, 4294901760
    %3444 = vmatmul.mubr.f32.gmra.mrb[0].mxu0 %v3443
    %v3445 = vpop.f32.mrb[0].mxu0
    %v3446 = vadd.f32 %v2993, %v3445
    %v3447 = vpop.f32.mrb[0].mxu0
    %3448 = vmatprep.mubr.f32.mxu0 0.0
    %v3449 = vand.u32 %v265, 4294901760
    %3450 = vmatmul.mubr.f32.gmra.mrb[0].mxu0 %v3449
    %v3451 = vpop.f32.mrb[0].mxu0
    %v3452 = vadd.f32 %v2999, %v3451
    %v3453 = vpop.f32.mrb[0].mxu0
    %3454 = vmatprep.mubr.f32.mxu0 0.0
    %v3455 = vand.u32 %v268, 4294901760
    %3456 = vmatmul.mubr.f32.gmra.mrb[0].mxu0 %v3455
    %v3457 = vpop.f32.mrb[0].mxu0
    %v3458 = vadd.f32 %v3005, %v3457
    %v3459 = vpop.f32.mrb[0].mxu0
    %3460 = vmatprep.mubr.f32.mxu0 0.0
    %v3461 = vand.u32 %v271, 4294901760
    %3462 = vmatmul.mubr.f32.gmra.mrb[0].mxu0 %v3461
    %v3463 = vpop.f32.mrb[0].mxu0
    %v3464 = vadd.f32 %v3011, %v3463
    %v3465 = vpop.f32.mrb[0].mxu0
    %3466 = vdwg.mxu0
    %3467 = vst [vmem:[#allocation2] sm:$0xff] %v3086
    %3468 = vst [vmem:[#allocation2 + $0x8] sm:$0xff] %v3092
    %3469 = vst [vmem:[#allocation2 + $0x10] sm:$0xff] %v3098
    %3470 = vst [vmem:[#allocation2 + $0x18] sm:$0xff] %v3104
    %3471 = vst [vmem:[#allocation2 + $0x20] sm:$0xff] %v3110
    %3472 = vst [vmem:[#allocation2 + $0x28] sm:$0xff] %v3116
    %3473 = vst [vmem:[#allocation2 + $0x30] sm:$0xff] %v3122
    %3474 = vst [vmem:[#allocation2 + $0x38] sm:$0xff] %v3128
    %3475 = vst [vmem:[#allocation2 + $0x40] sm:$0xff] %v3134
    %3476 = vst [vmem:[#allocation2 + $0x48] sm:$0xff] %v3140
    %3477 = vst [vmem:[#allocation2 + $0x50] sm:$0xff] %v3146
    %3478 = vst [vmem:[#allocation2 + $0x58] sm:$0xff] %v3152
    %3479 = vst [vmem:[#allocation2 + $0x60] sm:$0xff] %v3158
    %3480 = vst [vmem:[#allocation2 + $0x68] sm:$0xff] %v3164
    %3481 = vst [vmem:[#allocation2 + $0x70] sm:$0xff] %v3170
    %3482 = vst [vmem:[#allocation2 + $0x78] sm:$0xff] %v3176
    %3483 = vst [vmem:[#allocation2 + $0x80] sm:$0xff] %v3182
    %3484 = vst [vmem:[#allocation2 + $0x88] sm:$0xff] %v3188
    %3485 = vst [vmem:[#allocation2 + $0x90] sm:$0xff] %v3194
    %3486 = vst [vmem:[#allocation2 + $0x98] sm:$0xff] %v3200
    %3487 = vst [vmem:[#allocation2 + $0xa0] sm:$0xff] %v3206
    %3488 = vst [vmem:[#allocation2 + $0xa8] sm:$0xff] %v3212
    %3489 = vst [vmem:[#allocation2 + $0xb0] sm:$0xff] %v3218
    %3490 = vst [vmem:[#allocation2 + $0xb8] sm:$0xff] %v3224
    %3491 = vst [vmem:[#allocation2 + $0xc0] sm:$0xff] %v3230
    %3492 = vst [vmem:[#allocation2 + $0xc8] sm:$0xff] %v3236
    %3493 = vst [vmem:[#allocation2 + $0xd0] sm:$0xff] %v3242
    %3494 = vst [vmem:[#allocation2 + $0xd8] sm:$0xff] %v3248
    %3495 = vst [vmem:[#allocation2 + $0xe0] sm:$0xff] %v3254
    %3496 = vst [vmem:[#allocation2 + $0xe8] sm:$0xff] %v3260
    %3497 = vst [vmem:[#allocation2 + $0xf0] sm:$0xff] %v3266
    %3498 = vst [vmem:[#allocation2 + $0xf8] sm:$0xff] %v3272
    %3499 = vst [vmem:[#allocation2 + $0x100] sm:$0xff] %v3278
    %3500 = vst [vmem:[#allocation2 + $0x108] sm:$0xff] %v3284
    %3501 = vst [vmem:[#allocation2 + $0x110] sm:$0xff] %v3290
    %3502 = vst [vmem:[#allocation2 + $0x118] sm:$0xff] %v3296
    %3503 = vst [vmem:[#allocation2 + $0x120] sm:$0xff] %v3302
    %3504 = vst [vmem:[#allocation2 + $0x128] sm:$0xff] %v3308
    %3505 = vst [vmem:[#allocation2 + $0x130] sm:$0xff] %v3314
    %3506 = vst [vmem:[#allocation2 + $0x138] sm:$0xff] %v3320
    %3507 = vst [vmem:[#allocation2 + $0x140] sm:$0xff] %v3326
    %3508 = vst [vmem:[#allocation2 + $0x148] sm:$0xff] %v3332
    %3509 = vst [vmem:[#allocation2 + $0x150] sm:$0xff] %v3338
    %3510 = vst [vmem:[#allocation2 + $0x158] sm:$0xff] %v3344
    %3511 = vst [vmem:[#allocation2 + $0x160] sm:$0xff] %v3350
    %3512 = vst [vmem:[#allocation2 + $0x168] sm:$0xff] %v3356
    %3513 = vst [vmem:[#allocation2 + $0x170] sm:$0xff] %v3362
    %3514 = vst [vmem:[#allocation2 + $0x178] sm:$0xff] %v3368
    %3515 = vst [vmem:[#allocation2 + $0x180] sm:$0xff] %v3374
    %3516 = vst [vmem:[#allocation2 + $0x188] sm:$0xff] %v3380
    %3517 = vst [vmem:[#allocation2 + $0x190] sm:$0xff] %v3386
    %3518 = vst [vmem:[#allocation2 + $0x198] sm:$0xff] %v3392
    %3519 = vst [vmem:[#allocation2 + $0x1a0] sm:$0xff] %v3398
    %3520 = vst [vmem:[#allocation2 + $0x1a8] sm:$0xff] %v3404
    %3521 = vst [vmem:[#allocation2 + $0x1b0] sm:$0xff] %v3410
    %3522 = vst [vmem:[#allocation2 + $0x1b8] sm:$0xff] %v3416
    %3523 = vst [vmem:[#allocation2 + $0x1c0] sm:$0xff] %v3422
    %3524 = vst [vmem:[#allocation2 + $0x1c8] sm:$0xff] %v3428
    %3525 = vst [vmem:[#allocation2 + $0x1d0] sm:$0xff] %v3434
    %3526 = vst [vmem:[#allocation2 + $0x1d8] sm:$0xff] %v3440
    %3527 = vst [vmem:[#allocation2 + $0x1e0] sm:$0xff] %v3446
    %3528 = vst [vmem:[#allocation2 + $0x1e8] sm:$0xff] %v3452
    %3529 = vst [vmem:[#allocation2 + $0x1f0] sm:$0xff] %v3458
    %3530 = vst [vmem:[#allocation2 + $0x1f8] sm:$0xff] %v3464
    // Predicated region
    $region10: #{tpu_custom_call.1} parent=1 // pred_check
      _
    $region11: #{tpu_custom_call.1} parent=1 // pred_check_branch
      %3532 = sbr.rel (0) target = $region13
    $region12: #{tpu_custom_call.1} parent=1 // pred_region
      %s3534 = ssub.s32 8192, 8192
      %3535 = vsyncadd [#allocation3], %s3534
      %s3536 = sshll.u32 [#allocation2], 4
      %s3537 = int_to_ptr.vmem [resolvable:$true] %s3536
      %3542 = dma.vmem_to_hbm [thread:$0]  %s3537, 8192, %s2, [#allocation3], 128, 128, 8
    $region13: #{tpu_custom_call.1} parent=1 // pred_fallthru
      _
    // Predicated region
    $region14: #{tpu_custom_call.1} parent=1 // pred_check
      _
    $region15: #{tpu_custom_call.1} parent=1 // pred_check_branch
      %3544 = sbr.rel (0) target = $region17
    $region16: #{tpu_custom_call.1} parent=1 // pred_region
      %3545 = dma.done [#allocation3], 8192
    $region17: #{tpu_custom_call.1} parent=1 // pred_fallthru
      _
    %3546 = vsyncpa [#allocation3], 1

</llo_original>
